<compile_context>
chip_gen: v7x
topology: tpu7x:2x2x1
jax: 0.10.0
libtpu: 0.0.40
codegen_flags: <defaults>
</compile_context>

<pallas_src>
import functools

import jax
import jax.numpy as jnp
from jax import lax
from jax.experimental import pallas as pl
from jax.experimental.pallas import tpu as pltpu

NEG_SLOPE = 0.2   # LeakyReLU slope (module default; also DGL GATConv default)
EPS = 1e-5
MASK_VAL = -1e30


def _leaky_relu(x):
    return jnp.where(x > 0, x, NEG_SLOPE * x)


def fused_gat_kernel(x_ref, mb_ref,
                     wcat0_ref, wlt0_ref,
                     wcat1_ref, wlt1_ref,
                     wcat2_ref, wlt2_ref,
                     gammas_ref, betas_ref, lams_ref,
                     emb_ref, *, num_heads, out_feats, n_valid):
    """All three GATMGEmbedder layers for one graph of the batch:
       GATConv (fused projection matmul, additive attention, masked edge
       softmax, post-matmul normalization, residual) -> flatten(1) ->
       UnitedNorm (approx) -> LeakyReLU, chained 3x in registers/VMEM, then
       last-layer head-mean, masked graph-mean readout and final LeakyReLU."""
    H, F = num_heads, out_feats
    HF = H * F
    mask_bias = mb_ref[...].astype(jnp.float32)     # (Np, Np): 0 / -1e30
    gammas = gammas_ref[...]                        # (3, HF)
    betas = betas_ref[...]                          # (3, HF)
    Np = mask_bias.shape[0]
    inv_n = 1.0 / n_valid
    # Valid-node row mask: padded rows excluded from graph stats / readout.
    row_ids = lax.broadcasted_iota(jnp.int32, (Np, 1), 0)
    row_mask = (row_ids < n_valid).astype(jnp.float32)   # (Np, 1)

    def gat_layer(x, wcat_ref, wlt_ref, lidx, has_res_fc):
        xb = x.astype(jnp.bfloat16)
        # One fused bf16 matmul yields per-head features, (layer 0) the
        # residual fc, and the folded per-dst attention scores x @ (W_h a_r_h).
        proj = jnp.dot(xb, wcat_ref[...], preferred_element_type=jnp.float32)
        feat = proj[:, :HF]                                   # (Np, HF)
        if has_res_fc:
            res = proj[:, HF:2 * HF]                          # (Np, HF)
            er = proj[:, 2 * HF:2 * HF + H]                   # (Np, H)
        else:
            res = x                                           # identity residual
            er = proj[:, HF:HF + H]                           # (Np, H)
        # Per-source scores for all heads at once, (H, Np):
        # el[h, s] = x[s] . (W_h @ attn_l_h)
        el = lax.dot_general(wlt_ref[...], xb, (((1,), (1,)), ((), ())),
                             preferred_element_type=jnp.float32)
        head_outs = []
        for h in range(H):
            fh = feat[:, h * F:(h + 1) * F].astype(jnp.bfloat16)
            # additive mask; self-loops guarantee >=1 finite entry per valid
            # row, masked/padded entries underflow to exactly 0 after exp.
            e = _leaky_relu(er[:, h:h + 1] + el[h:h + 1, :]) + mask_bias
            m = jnp.max(e, axis=-1, keepdims=True)
            p = jnp.exp(e - m)
            rowsum = jnp.sum(p, axis=-1, keepdims=True)
            agg = jnp.dot(p.astype(jnp.bfloat16), fh,
                          preferred_element_type=jnp.float32)
            # Normalize AFTER the matmul: (Np, F) scale + EUP reciprocal
            # instead of an (Np, Np) divide.
            out_h = agg * pl.reciprocal(rowsum, approx=True)
            head_outs.append(out_h + res[:, h * F:(h + 1) * F])
        rst = jnp.concatenate(head_outs, axis=-1)             # (Np, HF) == flatten(1)

        # TODO(synk): exact UnitedNormCommon source not provided; approximating
        # as a learnable-weighted sum of {identity, node-norm, graph-norm}
        # followed by an affine (gamma, beta).
        mu_n = jnp.mean(rst, axis=-1, keepdims=True)
        var_n = jnp.mean((rst - mu_n) ** 2, axis=-1, keepdims=True)
        node_norm = (rst - mu_n) * lax.rsqrt(var_n + EPS)
        # Graph statistics over valid nodes only (padded rows masked out).
        mu_g = jnp.sum(rst * row_mask, axis=0, keepdims=True) * inv_n
        var_g = jnp.sum(((rst - mu_g) ** 2) * row_mask, axis=0,
                        keepdims=True) * inv_n
        graph_norm = (rst - mu_g) * lax.rsqrt(var_g + EPS)
        combined = (lams_ref[3 * lidx + 0] * rst
                    + lams_ref[3 * lidx + 1] * node_norm
                    + lams_ref[3 * lidx + 2] * graph_norm)
        normed = combined * gammas[lidx:lidx + 1, :] + betas[lidx:lidx + 1, :]
        return _leaky_relu(normed)

    x = x_ref[...].astype(jnp.float32)
    act = gat_layer(x, wcat0_ref, wlt0_ref, 0, True)    # layer 0: res fc folded in
    act = gat_layer(act, wcat1_ref, wlt1_ref, 1, False)
    act = gat_layer(act, wcat2_ref, wlt2_ref, 2, False)

    # jumping_mode=None -> only the last layer's embedding is used:
    # unflatten(-1,(H,-1)).mean(1) -> dgl.mean_nodes (valid nodes) -> LeakyReLU
    head_sum = act[:, 0:F]
    for h in range(1, H):
        head_sum = head_sum + act[:, h * F:(h + 1) * F]
    head_mean = head_sum * (1.0 / H)                          # (Np, F)
    emb = jnp.sum(head_mean * row_mask, axis=0, keepdims=True) * inv_n  # (1, F)
    emb_ref[...] = _leaky_relu(emb)


def _fold_layer_weights(p):
    """Fold attn_l / attn_r (and the layer-0 residual fc) into the projection,
    pad columns to a 128-lane multiple, and pre-cast MXU operands to bf16."""
    W, al, ar = p["W"], p["al"], p["ar"]
    Fin = W.shape[0]
    H, F = p["num_heads"], p["out_feats"]
    W3 = W.reshape(Fin, H, F)
    wa_l = jnp.einsum("ihf,hf->ih", W3, al)        # (Fin, H): el = x @ wa_l
    wa_r = jnp.einsum("ihf,hf->ih", W3, ar)        # (Fin, H): er = x @ wa_r
    cols = [W]
    if p["has_res_fc"]:
        cols.append(p["Wres"])                     # residual fc folded into matmul
    cols.append(wa_r)
    wcat = jnp.concatenate(cols, axis=1)           # (Fin, HF [+ HF] + H)
    pad_cols = (-wcat.shape[1]) % 128
    if pad_cols:
        wcat = jnp.pad(wcat, ((0, 0), (0, pad_cols)))   # lane-dense matmul output
    wlt = wa_l.T                                   # (H, Fin)
    return wcat.astype(jnp.bfloat16), wlt.astype(jnp.bfloat16)


def gat_mg_embedder_forward(node_feats, adj, params):
    """node_feats: (B, N, F) f32; adj: (B, N, N) {0,1} with self-loops."""
    assert len(params) == 3, "fused kernel expects layers_num=3"
    B, N, F = node_feats.shape
    H = params[0]["num_heads"]
    HF = H * F
    Np = ((N + 127) // 128) * 128               # lane-dense node-axis padding
    pad_n = Np - N

    x_p = jnp.pad(node_feats.astype(jnp.float32), ((0, 0), (0, pad_n), (0, 0)))
    adj_p = jnp.pad(adj, ((0, 0), (0, pad_n), (0, pad_n)))
    # bf16 mask halves the N^2 DMA; 0 and -1e30 both fine in bf16 range.
    mask_bias = jnp.where(adj_p > 0, 0.0, MASK_VAL).astype(jnp.bfloat16)

    folded = [_fold_layer_weights(p) for p in params]
    lams = jnp.concatenate([p["lam"] for p in params], axis=0)       # (9,) SMEM
    gammas = jnp.concatenate([p["gamma"] for p in params], axis=0)   # (3, HF)
    betas = jnp.concatenate([p["beta"] for p in params], axis=0)     # (3, HF)

    # Advisory cost estimate for XLA's scheduler.
    flops = 0
    for wcat, wlt in folded:
        fin, cols = wcat.shape
        flops += B * (2 * Np * fin * cols       # fused projection matmul
                      + 2 * Np * fin * H        # per-source score matmul
                      + 2 * H * Np * Np * F     # attention aggregation matmuls
                      + 8 * H * Np * Np)        # edge scores + masked softmax
    transcendentals = B * 3 * H * Np * Np
    ins = [x_p, mask_bias] + [a for pair in folded for a in pair] + \
          [gammas, betas, lams]
    bytes_accessed = sum(int(a.size * a.dtype.itemsize) for a in ins) + B * 4 * F

    # VMEM budget: double-buffered per-graph inputs + resident weights +
    # f32 working set for the (Np, Np) softmax tensors and activations.
    per_graph_in = x_p.nbytes // B + mask_bias.nbytes // B
    resident = (sum(int(w.nbytes) for pair in folded for w in pair)
                + int(gammas.nbytes) + int(betas.nbytes))
    working = 4 * (3 * Np * Np * 4 + 8 * Np * max(HF, 128) * 4)
    vmem_limit = int(min(64 << 20,
                         max(16 << 20, 2 * per_graph_in + resident + working)))

    weight_spec = lambda w: pl.BlockSpec(w.shape, lambda b: (0, 0))
    in_specs = [
        pl.BlockSpec((None, Np, F), lambda b: (b, 0, 0)),     # node feats
        pl.BlockSpec((None, Np, Np), lambda b: (b, 0, 0)),    # additive mask
        weight_spec(folded[0][0]), weight_spec(folded[0][1]),
        weight_spec(folded[1][0]), weight_spec(folded[1][1]),
        weight_spec(folded[2][0]), weight_spec(folded[2][1]),
        weight_spec(gammas), weight_spec(betas),
        pl.BlockSpec(memory_space=pltpu.MemorySpace.SMEM),    # lams (scalars)
    ]
    out_specs = pl.BlockSpec((None, 1, F), lambda b: (b, 0, 0))

    kernel = functools.partial(fused_gat_kernel, num_heads=H, out_feats=F,
                               n_valid=N)
    out = pl.pallas_call(
        kernel,
        out_shape=jax.ShapeDtypeStruct((B, 1, F), jnp.float32),
        grid=(B,),
        in_specs=in_specs,
        out_specs=out_specs,
        compiler_params=pltpu.CompilerParams(
            dimension_semantics=("parallel",),      # v7x: graphs across 2 TCs
            vmem_limit_bytes=vmem_limit),
        cost_estimate=pl.CostEstimate(flops=int(flops),
                                      transcendentals=int(transcendentals),
                                      bytes_accessed=int(bytes_accessed)),
    )(x_p, mask_bias,
      folded[0][0], folded[0][1],
      folded[1][0], folded[1][1],
      folded[2][0], folded[2][1],
      gammas, betas, lams)
    return out.reshape(B, F)


def init_params(key, feat_in_channels, layers_num=3, exp_heads=False):
    exp_heads = 1 if exp_heads else 0
    multipliers = [2 ** (i * exp_heads + 1) for i in range(layers_num)]
    F = feat_in_channels
    params = []
    in_dim = F
    for i in range(layers_num):
        H = multipliers[i]
        key, k_w, k_al, k_ar, k_res = jax.random.split(key, 5)
        W = 0.1 * jax.random.normal(k_w, (in_dim, H * F), jnp.float32)
        al = 0.1 * jax.random.normal(k_al, (H, F), jnp.float32)
        ar = 0.1 * jax.random.normal(k_ar, (H, F), jnp.float32)
        has_res_fc = in_dim != H * F
        # residual fc only when in_feats != num_heads*out_feats; else identity
        Wres = (0.1 * jax.random.normal(k_res, (in_dim, H * F), jnp.float32)
                if has_res_fc else None)
        # UnitedNormCommon(F * multipliers[i]) -- deterministic init
        lam = jnp.full((3,), 1.0 / 3.0, jnp.float32)
        gamma = jnp.ones((1, H * F), jnp.float32)
        beta = jnp.zeros((1, H * F), jnp.float32)
        params.append(dict(W=W, al=al, ar=ar, Wres=Wres, has_res_fc=has_res_fc,
                           lam=lam, gamma=gamma, beta=beta,
                           num_heads=H, out_feats=F))
        in_dim = F * H
    return params


if __name__ == "__main__":
    key = jax.random.PRNGKey(0)
    B = 2                  # graphs in the batch (grid axis)
    N = 64                 # nodes per mesh graph
    F = 16                 # feat_in_channels

    key, k_feat, k_adj, k_params = jax.random.split(key, 4)
    node_feats = jax.random.normal(k_feat, (B, N, F), jnp.float32)
    # synthetic mesh connectivity: sparse random edges + self-loops
    adj = jax.random.bernoulli(k_adj, 0.1, (B, N, N)).astype(jnp.float32)
    adj = jnp.maximum(adj, jnp.eye(N, dtype=jnp.float32)[None, :, :])

    params = init_params(k_params, F, layers_num=3, exp_heads=False)

    out = gat_mg_embedder_forward(node_feats, adj, params)
    out = jax.block_until_ready(out)
    assert out.shape == (B, F)
    print("KERNEL_OK")
</pallas_src>

<mosaic_0001>
module attributes {stable_mosaic.version = 11 : i64} {
  func.func @fused_gat_kernel(%arg0: i32, %arg1: memref<1x128x16xf32, #tpu.memory_space<vmem>>, %arg2: memref<1x128x128xbf16, #tpu.memory_space<vmem>>, %arg3: memref<16x128xbf16, #tpu.memory_space<vmem>>, %arg4: memref<2x16xbf16, #tpu.memory_space<vmem>>, %arg5: memref<32x128xbf16, #tpu.memory_space<vmem>>, %arg6: memref<2x32xbf16, #tpu.memory_space<vmem>>, %arg7: memref<32x128xbf16, #tpu.memory_space<vmem>>, %arg8: memref<2x32xbf16, #tpu.memory_space<vmem>>, %arg9: memref<3x32xf32, #tpu.memory_space<vmem>>, %arg10: memref<3x32xf32, #tpu.memory_space<vmem>>, %arg11: memref<9xf32, #tpu.memory_space<smem>>, %arg12: memref<1x1x16xf32, #tpu.memory_space<vmem>>) attributes {dimension_semantics = [#tpu.dimension_semantics<parallel>], iteration_bounds = array<i64: 2>, scalar_prefetch = 0 : i64, scratch_operands = 0 : i64, tpu.core_type = #tpu.core_type<tc>, window_params = [{transform_indices = @transform_0, window_bounds = array<i64: 1, 128, 16>}, {transform_indices = @transform_1, window_bounds = array<i64: 1, 128, 128>}, {pipeline_mode = #tpu.pipeline_mode<synchronous>, transform_indices = @transform_2, window_bounds = array<i64: 16, 128>}, {pipeline_mode = #tpu.pipeline_mode<synchronous>, transform_indices = @transform_3, window_bounds = array<i64: 2, 16>}, {pipeline_mode = #tpu.pipeline_mode<synchronous>, transform_indices = @transform_4, window_bounds = array<i64: 32, 128>}, {pipeline_mode = #tpu.pipeline_mode<synchronous>, transform_indices = @transform_5, window_bounds = array<i64: 2, 32>}, {pipeline_mode = #tpu.pipeline_mode<synchronous>, transform_indices = @transform_6, window_bounds = array<i64: 32, 128>}, {pipeline_mode = #tpu.pipeline_mode<synchronous>, transform_indices = @transform_7, window_bounds = array<i64: 2, 32>}, {pipeline_mode = #tpu.pipeline_mode<synchronous>, transform_indices = @transform_8, window_bounds = array<i64: 3, 32>}, {pipeline_mode = #tpu.pipeline_mode<synchronous>, transform_indices = @transform_9, window_bounds = array<i64: 3, 32>}, {transform_indices = @transform_10, window_bounds = array<i64: 9>}, {transform_indices = @transform_11, window_bounds = array<i64: 1, 1, 16>}]} {
    %c0 = arith.constant 0 : index
    %c0_0 = arith.constant 0 : index
    %c0_1 = arith.constant 0 : index
    %0 = vector.load %arg2[%c0, %c0_0, %c0_1] : memref<1x128x128xbf16, #tpu.memory_space<vmem>>, vector<1x128x128xbf16>
    %1 = vector.shape_cast %0 : vector<1x128x128xbf16> to vector<128x128xbf16>
    %2 = arith.extf %1 : vector<128x128xbf16> to vector<128x128xf32>
    %c0_2 = arith.constant 0 : index
    %c0_3 = arith.constant 0 : index
    %3 = vector.load %arg9[%c0_2, %c0_3] : memref<3x32xf32, #tpu.memory_space<vmem>>, vector<3x32xf32>
    %c0_4 = arith.constant 0 : index
    %c0_5 = arith.constant 0 : index
    %4 = vector.load %arg10[%c0_4, %c0_5] : memref<3x32xf32, #tpu.memory_space<vmem>>, vector<3x32xf32>
    %5 = tpu.iota {dimensions = array<i32: 0>} : vector<128x1xi32>
    %c64_i32 = arith.constant 64 : i32
    %6 = vector.broadcast %c64_i32 : i32 to vector<128x1xi32>
    %7 = arith.cmpi slt, %5, %6 : vector<128x1xi32>
    %8 = arith.extui %7 : vector<128x1xi1> to vector<128x1xi32>
    %9 = arith.sitofp %8 : vector<128x1xi32> to vector<128x1xf32>
    %c0_6 = arith.constant 0 : index
    %c0_7 = arith.constant 0 : index
    %c0_8 = arith.constant 0 : index
    %10 = vector.load %arg1[%c0_6, %c0_7, %c0_8] : memref<1x128x16xf32, #tpu.memory_space<vmem>>, vector<1x128x16xf32>
    %11 = vector.shape_cast %10 : vector<1x128x16xf32> to vector<128x16xf32>
    %12 = arith.truncf %11 : vector<128x16xf32> to vector<128x16xbf16>
    %c0_9 = arith.constant 0 : index
    %c0_10 = arith.constant 0 : index
    %13 = vector.load %arg3[%c0_9, %c0_10] : memref<16x128xbf16, #tpu.memory_space<vmem>>, vector<16x128xbf16>
    %cst = arith.constant dense<0.000000e+00> : vector<128x128xf32>
    %14 = tpu.matmul %12, %13, %cst {dimension_numbers = #tpu.dot_dimension_numbers<[1], [0], [0], [1], [0, 0, 1, 1], [], []>} : vector<128x16xbf16>, vector<16x128xbf16>, vector<128x128xf32> -> vector<128x128xf32>
    %15 = vector.extract_strided_slice %14 {offsets = [0, 0], sizes = [128, 32], strides = [1, 1]} : vector<128x128xf32> to vector<128x32xf32>
    %16 = vector.extract_strided_slice %14 {offsets = [0, 32], sizes = [128, 32], strides = [1, 1]} : vector<128x128xf32> to vector<128x32xf32>
    %17 = vector.extract_strided_slice %14 {offsets = [0, 64], sizes = [128, 2], strides = [1, 1]} : vector<128x128xf32> to vector<128x2xf32>
    %c0_11 = arith.constant 0 : index
    %c0_12 = arith.constant 0 : index
    %18 = vector.load %arg4[%c0_11, %c0_12] : memref<2x16xbf16, #tpu.memory_space<vmem>>, vector<2x16xbf16>
    %cst_13 = arith.constant dense<0.000000e+00> : vector<2x128xf32>
    %19 = tpu.matmul %18, %12, %cst_13 {dimension_numbers = #tpu.dot_dimension_numbers<[1], [1], [0], [0], [0, 0, 1, 0], [], []>} : vector<2x16xbf16>, vector<128x16xbf16>, vector<2x128xf32> -> vector<2x128xf32>
    %20 = vector.extract_strided_slice %15 {offsets = [0, 0], sizes = [128, 16], strides = [1, 1]} : vector<128x32xf32> to vector<128x16xf32>
    %21 = arith.truncf %20 : vector<128x16xf32> to vector<128x16xbf16>
    %22 = vector.extract_strided_slice %17 {offsets = [0, 0], sizes = [128, 1], strides = [1, 1]} : vector<128x2xf32> to vector<128x1xf32>
    %23 = vector.extract_strided_slice %19 {offsets = [0, 0], sizes = [1, 128], strides = [1, 1]} : vector<2x128xf32> to vector<1x128xf32>
    %24 = vector.broadcast %22 : vector<128x1xf32> to vector<128x128xf32>
    %25 = vector.broadcast %23 : vector<1x128xf32> to vector<128x128xf32>
    %26 = arith.addf %24, %25 : vector<128x128xf32>
    %cst_14 = arith.constant 0.000000e+00 : f32
    %27 = vector.broadcast %cst_14 : f32 to vector<128x128xf32>
    %28 = arith.cmpf ogt, %26, %27 : vector<128x128xf32>
    %cst_15 = arith.constant 2.000000e-01 : f32
    %29 = vector.broadcast %cst_15 : f32 to vector<128x128xf32>
    %30 = arith.mulf %29, %26 : vector<128x128xf32>
    %31 = arith.select %28, %26, %30 : vector<128x128xi1>, vector<128x128xf32>
    %32 = arith.addf %31, %2 : vector<128x128xf32>
    %cst_16 = arith.constant dense<0xFF800000> : vector<128xf32>
    %33 = vector.multi_reduction <maximumf>, %32, %cst_16 [1] : vector<128x128xf32> to vector<128xf32>
    %34 = vector.shape_cast %33 : vector<128xf32> to vector<128x1xf32>
    %35 = vector.broadcast %34 : vector<128x1xf32> to vector<128x128xf32>
    %36 = arith.subf %32, %35 : vector<128x128xf32>
    %37 = math.exp %36 : vector<128x128xf32>
    %cst_17 = arith.constant dense<0.000000e+00> : vector<128xf32>
    %38 = vector.multi_reduction <add>, %37, %cst_17 [1] : vector<128x128xf32> to vector<128xf32>
    %39 = vector.shape_cast %38 : vector<128xf32> to vector<128x1xf32>
    %40 = arith.truncf %37 : vector<128x128xf32> to vector<128x128xbf16>
    %cst_18 = arith.constant dense<0.000000e+00> : vector<128x16xf32>
    %41 = tpu.matmul %40, %21, %cst_18 {dimension_numbers = #tpu.dot_dimension_numbers<[1], [0], [0], [1], [0, 0, 1, 1], [], []>} : vector<128x128xbf16>, vector<128x16xbf16>, vector<128x16xf32> -> vector<128x16xf32>
    %42 = tpu.reciprocal %39 {approx = true} : vector<128x1xf32> -> vector<128x1xf32>
    %43 = vector.broadcast %42 : vector<128x1xf32> to vector<128x16xf32>
    %44 = arith.mulf %41, %43 : vector<128x16xf32>
    %45 = vector.extract_strided_slice %16 {offsets = [0, 0], sizes = [128, 16], strides = [1, 1]} : vector<128x32xf32> to vector<128x16xf32>
    %46 = arith.addf %44, %45 : vector<128x16xf32>
    %47 = vector.extract_strided_slice %15 {offsets = [0, 16], sizes = [128, 16], strides = [1, 1]} : vector<128x32xf32> to vector<128x16xf32>
    %48 = arith.truncf %47 : vector<128x16xf32> to vector<128x16xbf16>
    %49 = vector.extract_strided_slice %17 {offsets = [0, 1], sizes = [128, 1], strides = [1, 1]} : vector<128x2xf32> to vector<128x1xf32>
    %50 = vector.extract_strided_slice %19 {offsets = [1, 0], sizes = [1, 128], strides = [1, 1]} : vector<2x128xf32> to vector<1x128xf32>
    %51 = vector.broadcast %49 : vector<128x1xf32> to vector<128x128xf32>
    %52 = vector.broadcast %50 : vector<1x128xf32> to vector<128x128xf32>
    %53 = arith.addf %51, %52 : vector<128x128xf32>
    %cst_19 = arith.constant 0.000000e+00 : f32
    %54 = vector.broadcast %cst_19 : f32 to vector<128x128xf32>
    %55 = arith.cmpf ogt, %53, %54 : vector<128x128xf32>
    %cst_20 = arith.constant 2.000000e-01 : f32
    %56 = vector.broadcast %cst_20 : f32 to vector<128x128xf32>
    %57 = arith.mulf %56, %53 : vector<128x128xf32>
    %58 = arith.select %55, %53, %57 : vector<128x128xi1>, vector<128x128xf32>
    %59 = arith.addf %58, %2 : vector<128x128xf32>
    %cst_21 = arith.constant dense<0xFF800000> : vector<128xf32>
    %60 = vector.multi_reduction <maximumf>, %59, %cst_21 [1] : vector<128x128xf32> to vector<128xf32>
    %61 = vector.shape_cast %60 : vector<128xf32> to vector<128x1xf32>
    %62 = vector.broadcast %61 : vector<128x1xf32> to vector<128x128xf32>
    %63 = arith.subf %59, %62 : vector<128x128xf32>
    %64 = math.exp %63 : vector<128x128xf32>
    %cst_22 = arith.constant dense<0.000000e+00> : vector<128xf32>
    %65 = vector.multi_reduction <add>, %64, %cst_22 [1] : vector<128x128xf32> to vector<128xf32>
    %66 = vector.shape_cast %65 : vector<128xf32> to vector<128x1xf32>
    %67 = arith.truncf %64 : vector<128x128xf32> to vector<128x128xbf16>
    %cst_23 = arith.constant dense<0.000000e+00> : vector<128x16xf32>
    %68 = tpu.matmul %67, %48, %cst_23 {dimension_numbers = #tpu.dot_dimension_numbers<[1], [0], [0], [1], [0, 0, 1, 1], [], []>} : vector<128x128xbf16>, vector<128x16xbf16>, vector<128x16xf32> -> vector<128x16xf32>
    %69 = tpu.reciprocal %66 {approx = true} : vector<128x1xf32> -> vector<128x1xf32>
    %70 = vector.broadcast %69 : vector<128x1xf32> to vector<128x16xf32>
    %71 = arith.mulf %68, %70 : vector<128x16xf32>
    %72 = vector.extract_strided_slice %16 {offsets = [0, 16], sizes = [128, 16], strides = [1, 1]} : vector<128x32xf32> to vector<128x16xf32>
    %73 = arith.addf %71, %72 : vector<128x16xf32>
    %74 = tpu.concatenate %46, %73 in 1 : vector<128x16xf32>, vector<128x16xf32> -> vector<128x32xf32>
    %cst_24 = arith.constant dense<0.000000e+00> : vector<128xf32>
    %75 = vector.multi_reduction <add>, %74, %cst_24 [1] : vector<128x32xf32> to vector<128xf32>
    %76 = vector.shape_cast %75 : vector<128xf32> to vector<128x1xf32>
    %cst_25 = arith.constant 3.200000e+01 : f32
    %77 = vector.broadcast %cst_25 : f32 to vector<128x1xf32>
    %78 = arith.divf %76, %77 : vector<128x1xf32>
    %79 = vector.broadcast %78 : vector<128x1xf32> to vector<128x32xf32>
    %80 = arith.subf %74, %79 : vector<128x32xf32>
    %81 = arith.mulf %80, %80 : vector<128x32xf32>
    %cst_26 = arith.constant dense<0.000000e+00> : vector<128xf32>
    %82 = vector.multi_reduction <add>, %81, %cst_26 [1] : vector<128x32xf32> to vector<128xf32>
    %83 = vector.shape_cast %82 : vector<128xf32> to vector<128x1xf32>
    %cst_27 = arith.constant 3.200000e+01 : f32
    %84 = vector.broadcast %cst_27 : f32 to vector<128x1xf32>
    %85 = arith.divf %83, %84 : vector<128x1xf32>
    %86 = vector.broadcast %78 : vector<128x1xf32> to vector<128x32xf32>
    %87 = arith.subf %74, %86 : vector<128x32xf32>
    %cst_28 = arith.constant 9.99999974E-6 : f32
    %88 = vector.broadcast %cst_28 : f32 to vector<128x1xf32>
    %89 = arith.addf %85, %88 : vector<128x1xf32>
    %90 = math.rsqrt %89 : vector<128x1xf32>
    %91 = vector.broadcast %90 : vector<128x1xf32> to vector<128x32xf32>
    %92 = arith.mulf %87, %91 : vector<128x32xf32>
    %93 = vector.broadcast %9 : vector<128x1xf32> to vector<128x32xf32>
    %94 = arith.mulf %74, %93 : vector<128x32xf32>
    %cst_29 = arith.constant dense<0.000000e+00> : vector<32xf32>
    %95 = vector.multi_reduction <add>, %94, %cst_29 [0] : vector<128x32xf32> to vector<32xf32>
    %96 = vector.shape_cast %95 : vector<32xf32> to vector<1x32xf32>
    %cst_30 = arith.constant 1.562500e-02 : f32
    %97 = vector.broadcast %cst_30 : f32 to vector<1x32xf32>
    %98 = arith.mulf %96, %97 : vector<1x32xf32>
    %99 = vector.broadcast %98 : vector<1x32xf32> to vector<128x32xf32>
    %100 = arith.subf %74, %99 : vector<128x32xf32>
    %101 = arith.mulf %100, %100 : vector<128x32xf32>
    %102 = vector.broadcast %9 : vector<128x1xf32> to vector<128x32xf32>
    %103 = arith.mulf %101, %102 : vector<128x32xf32>
    %cst_31 = arith.constant dense<0.000000e+00> : vector<32xf32>
    %104 = vector.multi_reduction <add>, %103, %cst_31 [0] : vector<128x32xf32> to vector<32xf32>
    %105 = vector.shape_cast %104 : vector<32xf32> to vector<1x32xf32>
    %cst_32 = arith.constant 1.562500e-02 : f32
    %106 = vector.broadcast %cst_32 : f32 to vector<1x32xf32>
    %107 = arith.mulf %105, %106 : vector<1x32xf32>
    %108 = vector.broadcast %98 : vector<1x32xf32> to vector<128x32xf32>
    %109 = arith.subf %74, %108 : vector<128x32xf32>
    %cst_33 = arith.constant 9.99999974E-6 : f32
    %110 = vector.broadcast %cst_33 : f32 to vector<1x32xf32>
    %111 = arith.addf %107, %110 : vector<1x32xf32>
    %112 = math.rsqrt %111 : vector<1x32xf32>
    %113 = vector.broadcast %112 : vector<1x32xf32> to vector<128x32xf32>
    %114 = arith.mulf %109, %113 : vector<128x32xf32>
    %c0_34 = arith.constant 0 : index
    %115 = memref.load %arg11[%c0_34] : memref<9xf32, #tpu.memory_space<smem>>
    %116 = vector.broadcast %115 : f32 to vector<128x32xf32>
    %117 = arith.mulf %116, %74 : vector<128x32xf32>
    %c1 = arith.constant 1 : index
    %118 = memref.load %arg11[%c1] : memref<9xf32, #tpu.memory_space<smem>>
    %119 = vector.broadcast %118 : f32 to vector<128x32xf32>
    %120 = arith.mulf %119, %92 : vector<128x32xf32>
    %121 = arith.addf %117, %120 : vector<128x32xf32>
    %c2 = arith.constant 2 : index
    %122 = memref.load %arg11[%c2] : memref<9xf32, #tpu.memory_space<smem>>
    %123 = vector.broadcast %122 : f32 to vector<128x32xf32>
    %124 = arith.mulf %123, %114 : vector<128x32xf32>
    %125 = arith.addf %121, %124 : vector<128x32xf32>
    %126 = vector.extract_strided_slice %3 {offsets = [0, 0], sizes = [1, 32], strides = [1, 1]} : vector<3x32xf32> to vector<1x32xf32>
    %127 = vector.broadcast %126 : vector<1x32xf32> to vector<128x32xf32>
    %128 = arith.mulf %125, %127 : vector<128x32xf32>
    %129 = vector.extract_strided_slice %4 {offsets = [0, 0], sizes = [1, 32], strides = [1, 1]} : vector<3x32xf32> to vector<1x32xf32>
    %130 = vector.broadcast %129 : vector<1x32xf32> to vector<128x32xf32>
    %131 = arith.addf %128, %130 : vector<128x32xf32>
    %cst_35 = arith.constant 0.000000e+00 : f32
    %132 = vector.broadcast %cst_35 : f32 to vector<128x32xf32>
    %133 = arith.cmpf ogt, %131, %132 : vector<128x32xf32>
    %cst_36 = arith.constant 2.000000e-01 : f32
    %134 = vector.broadcast %cst_36 : f32 to vector<128x32xf32>
    %135 = arith.mulf %134, %131 : vector<128x32xf32>
    %136 = arith.select %133, %131, %135 : vector<128x32xi1>, vector<128x32xf32>
    %137 = arith.truncf %136 : vector<128x32xf32> to vector<128x32xbf16>
    %c0_37 = arith.constant 0 : index
    %c0_38 = arith.constant 0 : index
    %138 = vector.load %arg5[%c0_37, %c0_38] : memref<32x128xbf16, #tpu.memory_space<vmem>>, vector<32x128xbf16>
    %cst_39 = arith.constant dense<0.000000e+00> : vector<128x128xf32>
    %139 = tpu.matmul %137, %138, %cst_39 {dimension_numbers = #tpu.dot_dimension_numbers<[1], [0], [0], [1], [0, 0, 1, 1], [], []>} : vector<128x32xbf16>, vector<32x128xbf16>, vector<128x128xf32> -> vector<128x128xf32>
    %140 = vector.extract_strided_slice %139 {offsets = [0, 0], sizes = [128, 32], strides = [1, 1]} : vector<128x128xf32> to vector<128x32xf32>
    %141 = vector.extract_strided_slice %139 {offsets = [0, 32], sizes = [128, 2], strides = [1, 1]} : vector<128x128xf32> to vector<128x2xf32>
    %c0_40 = arith.constant 0 : index
    %c0_41 = arith.constant 0 : index
    %142 = vector.load %arg6[%c0_40, %c0_41] : memref<2x32xbf16, #tpu.memory_space<vmem>>, vector<2x32xbf16>
    %cst_42 = arith.constant dense<0.000000e+00> : vector<2x128xf32>
    %143 = tpu.matmul %142, %137, %cst_42 {dimension_numbers = #tpu.dot_dimension_numbers<[1], [1], [0], [0], [0, 0, 1, 0], [], []>} : vector<2x32xbf16>, vector<128x32xbf16>, vector<2x128xf32> -> vector<2x128xf32>
    %144 = vector.extract_strided_slice %140 {offsets = [0, 0], sizes = [128, 16], strides = [1, 1]} : vector<128x32xf32> to vector<128x16xf32>
    %145 = arith.truncf %144 : vector<128x16xf32> to vector<128x16xbf16>
    %146 = vector.extract_strided_slice %141 {offsets = [0, 0], sizes = [128, 1], strides = [1, 1]} : vector<128x2xf32> to vector<128x1xf32>
    %147 = vector.extract_strided_slice %143 {offsets = [0, 0], sizes = [1, 128], strides = [1, 1]} : vector<2x128xf32> to vector<1x128xf32>
    %148 = vector.broadcast %146 : vector<128x1xf32> to vector<128x128xf32>
    %149 = vector.broadcast %147 : vector<1x128xf32> to vector<128x128xf32>
    %150 = arith.addf %148, %149 : vector<128x128xf32>
    %cst_43 = arith.constant 0.000000e+00 : f32
    %151 = vector.broadcast %cst_43 : f32 to vector<128x128xf32>
    %152 = arith.cmpf ogt, %150, %151 : vector<128x128xf32>
    %cst_44 = arith.constant 2.000000e-01 : f32
    %153 = vector.broadcast %cst_44 : f32 to vector<128x128xf32>
    %154 = arith.mulf %153, %150 : vector<128x128xf32>
    %155 = arith.select %152, %150, %154 : vector<128x128xi1>, vector<128x128xf32>
    %156 = arith.addf %155, %2 : vector<128x128xf32>
    %cst_45 = arith.constant dense<0xFF800000> : vector<128xf32>
    %157 = vector.multi_reduction <maximumf>, %156, %cst_45 [1] : vector<128x128xf32> to vector<128xf32>
    %158 = vector.shape_cast %157 : vector<128xf32> to vector<128x1xf32>
    %159 = vector.broadcast %158 : vector<128x1xf32> to vector<128x128xf32>
    %160 = arith.subf %156, %159 : vector<128x128xf32>
    %161 = math.exp %160 : vector<128x128xf32>
    %cst_46 = arith.constant dense<0.000000e+00> : vector<128xf32>
    %162 = vector.multi_reduction <add>, %161, %cst_46 [1] : vector<128x128xf32> to vector<128xf32>
    %163 = vector.shape_cast %162 : vector<128xf32> to vector<128x1xf32>
    %164 = arith.truncf %161 : vector<128x128xf32> to vector<128x128xbf16>
    %cst_47 = arith.constant dense<0.000000e+00> : vector<128x16xf32>
    %165 = tpu.matmul %164, %145, %cst_47 {dimension_numbers = #tpu.dot_dimension_numbers<[1], [0], [0], [1], [0, 0, 1, 1], [], []>} : vector<128x128xbf16>, vector<128x16xbf16>, vector<128x16xf32> -> vector<128x16xf32>
    %166 = tpu.reciprocal %163 {approx = true} : vector<128x1xf32> -> vector<128x1xf32>
    %167 = vector.broadcast %166 : vector<128x1xf32> to vector<128x16xf32>
    %168 = arith.mulf %165, %167 : vector<128x16xf32>
    %169 = vector.extract_strided_slice %136 {offsets = [0, 0], sizes = [128, 16], strides = [1, 1]} : vector<128x32xf32> to vector<128x16xf32>
    %170 = arith.addf %168, %169 : vector<128x16xf32>
    %171 = vector.extract_strided_slice %140 {offsets = [0, 16], sizes = [128, 16], strides = [1, 1]} : vector<128x32xf32> to vector<128x16xf32>
    %172 = arith.truncf %171 : vector<128x16xf32> to vector<128x16xbf16>
    %173 = vector.extract_strided_slice %141 {offsets = [0, 1], sizes = [128, 1], strides = [1, 1]} : vector<128x2xf32> to vector<128x1xf32>
    %174 = vector.extract_strided_slice %143 {offsets = [1, 0], sizes = [1, 128], strides = [1, 1]} : vector<2x128xf32> to vector<1x128xf32>
    %175 = vector.broadcast %173 : vector<128x1xf32> to vector<128x128xf32>
    %176 = vector.broadcast %174 : vector<1x128xf32> to vector<128x128xf32>
    %177 = arith.addf %175, %176 : vector<128x128xf32>
    %cst_48 = arith.constant 0.000000e+00 : f32
    %178 = vector.broadcast %cst_48 : f32 to vector<128x128xf32>
    %179 = arith.cmpf ogt, %177, %178 : vector<128x128xf32>
    %cst_49 = arith.constant 2.000000e-01 : f32
    %180 = vector.broadcast %cst_49 : f32 to vector<128x128xf32>
    %181 = arith.mulf %180, %177 : vector<128x128xf32>
    %182 = arith.select %179, %177, %181 : vector<128x128xi1>, vector<128x128xf32>
    %183 = arith.addf %182, %2 : vector<128x128xf32>
    %cst_50 = arith.constant dense<0xFF800000> : vector<128xf32>
    %184 = vector.multi_reduction <maximumf>, %183, %cst_50 [1] : vector<128x128xf32> to vector<128xf32>
    %185 = vector.shape_cast %184 : vector<128xf32> to vector<128x1xf32>
    %186 = vector.broadcast %185 : vector<128x1xf32> to vector<128x128xf32>
    %187 = arith.subf %183, %186 : vector<128x128xf32>
    %188 = math.exp %187 : vector<128x128xf32>
    %cst_51 = arith.constant dense<0.000000e+00> : vector<128xf32>
    %189 = vector.multi_reduction <add>, %188, %cst_51 [1] : vector<128x128xf32> to vector<128xf32>
    %190 = vector.shape_cast %189 : vector<128xf32> to vector<128x1xf32>
    %191 = arith.truncf %188 : vector<128x128xf32> to vector<128x128xbf16>
    %cst_52 = arith.constant dense<0.000000e+00> : vector<128x16xf32>
    %192 = tpu.matmul %191, %172, %cst_52 {dimension_numbers = #tpu.dot_dimension_numbers<[1], [0], [0], [1], [0, 0, 1, 1], [], []>} : vector<128x128xbf16>, vector<128x16xbf16>, vector<128x16xf32> -> vector<128x16xf32>
    %193 = tpu.reciprocal %190 {approx = true} : vector<128x1xf32> -> vector<128x1xf32>
    %194 = vector.broadcast %193 : vector<128x1xf32> to vector<128x16xf32>
    %195 = arith.mulf %192, %194 : vector<128x16xf32>
    %196 = vector.extract_strided_slice %136 {offsets = [0, 16], sizes = [128, 16], strides = [1, 1]} : vector<128x32xf32> to vector<128x16xf32>
    %197 = arith.addf %195, %196 : vector<128x16xf32>
    %198 = tpu.concatenate %170, %197 in 1 : vector<128x16xf32>, vector<128x16xf32> -> vector<128x32xf32>
    %cst_53 = arith.constant dense<0.000000e+00> : vector<128xf32>
    %199 = vector.multi_reduction <add>, %198, %cst_53 [1] : vector<128x32xf32> to vector<128xf32>
    %200 = vector.shape_cast %199 : vector<128xf32> to vector<128x1xf32>
    %cst_54 = arith.constant 3.200000e+01 : f32
    %201 = vector.broadcast %cst_54 : f32 to vector<128x1xf32>
    %202 = arith.divf %200, %201 : vector<128x1xf32>
    %203 = vector.broadcast %202 : vector<128x1xf32> to vector<128x32xf32>
    %204 = arith.subf %198, %203 : vector<128x32xf32>
    %205 = arith.mulf %204, %204 : vector<128x32xf32>
    %cst_55 = arith.constant dense<0.000000e+00> : vector<128xf32>
    %206 = vector.multi_reduction <add>, %205, %cst_55 [1] : vector<128x32xf32> to vector<128xf32>
    %207 = vector.shape_cast %206 : vector<128xf32> to vector<128x1xf32>
    %cst_56 = arith.constant 3.200000e+01 : f32
    %208 = vector.broadcast %cst_56 : f32 to vector<128x1xf32>
    %209 = arith.divf %207, %208 : vector<128x1xf32>
    %210 = vector.broadcast %202 : vector<128x1xf32> to vector<128x32xf32>
    %211 = arith.subf %198, %210 : vector<128x32xf32>
    %cst_57 = arith.constant 9.99999974E-6 : f32
    %212 = vector.broadcast %cst_57 : f32 to vector<128x1xf32>
    %213 = arith.addf %209, %212 : vector<128x1xf32>
    %214 = math.rsqrt %213 : vector<128x1xf32>
    %215 = vector.broadcast %214 : vector<128x1xf32> to vector<128x32xf32>
    %216 = arith.mulf %211, %215 : vector<128x32xf32>
    %217 = vector.broadcast %9 : vector<128x1xf32> to vector<128x32xf32>
    %218 = arith.mulf %198, %217 : vector<128x32xf32>
    %cst_58 = arith.constant dense<0.000000e+00> : vector<32xf32>
    %219 = vector.multi_reduction <add>, %218, %cst_58 [0] : vector<128x32xf32> to vector<32xf32>
    %220 = vector.shape_cast %219 : vector<32xf32> to vector<1x32xf32>
    %cst_59 = arith.constant 1.562500e-02 : f32
    %221 = vector.broadcast %cst_59 : f32 to vector<1x32xf32>
    %222 = arith.mulf %220, %221 : vector<1x32xf32>
    %223 = vector.broadcast %222 : vector<1x32xf32> to vector<128x32xf32>
    %224 = arith.subf %198, %223 : vector<128x32xf32>
    %225 = arith.mulf %224, %224 : vector<128x32xf32>
    %226 = vector.broadcast %9 : vector<128x1xf32> to vector<128x32xf32>
    %227 = arith.mulf %225, %226 : vector<128x32xf32>
    %cst_60 = arith.constant dense<0.000000e+00> : vector<32xf32>
    %228 = vector.multi_reduction <add>, %227, %cst_60 [0] : vector<128x32xf32> to vector<32xf32>
    %229 = vector.shape_cast %228 : vector<32xf32> to vector<1x32xf32>
    %cst_61 = arith.constant 1.562500e-02 : f32
    %230 = vector.broadcast %cst_61 : f32 to vector<1x32xf32>
    %231 = arith.mulf %229, %230 : vector<1x32xf32>
    %232 = vector.broadcast %222 : vector<1x32xf32> to vector<128x32xf32>
    %233 = arith.subf %198, %232 : vector<128x32xf32>
    %cst_62 = arith.constant 9.99999974E-6 : f32
    %234 = vector.broadcast %cst_62 : f32 to vector<1x32xf32>
    %235 = arith.addf %231, %234 : vector<1x32xf32>
    %236 = math.rsqrt %235 : vector<1x32xf32>
    %237 = vector.broadcast %236 : vector<1x32xf32> to vector<128x32xf32>
    %238 = arith.mulf %233, %237 : vector<128x32xf32>
    %c3 = arith.constant 3 : index
    %239 = memref.load %arg11[%c3] : memref<9xf32, #tpu.memory_space<smem>>
    %240 = vector.broadcast %239 : f32 to vector<128x32xf32>
    %241 = arith.mulf %240, %198 : vector<128x32xf32>
    %c4 = arith.constant 4 : index
    %242 = memref.load %arg11[%c4] : memref<9xf32, #tpu.memory_space<smem>>
    %243 = vector.broadcast %242 : f32 to vector<128x32xf32>
    %244 = arith.mulf %243, %216 : vector<128x32xf32>
    %245 = arith.addf %241, %244 : vector<128x32xf32>
    %c5 = arith.constant 5 : index
    %246 = memref.load %arg11[%c5] : memref<9xf32, #tpu.memory_space<smem>>
    %247 = vector.broadcast %246 : f32 to vector<128x32xf32>
    %248 = arith.mulf %247, %238 : vector<128x32xf32>
    %249 = arith.addf %245, %248 : vector<128x32xf32>
    %250 = vector.extract_strided_slice %3 {offsets = [1, 0], sizes = [1, 32], strides = [1, 1]} : vector<3x32xf32> to vector<1x32xf32>
    %251 = vector.broadcast %250 : vector<1x32xf32> to vector<128x32xf32>
    %252 = arith.mulf %249, %251 : vector<128x32xf32>
    %253 = vector.extract_strided_slice %4 {offsets = [1, 0], sizes = [1, 32], strides = [1, 1]} : vector<3x32xf32> to vector<1x32xf32>
    %254 = vector.broadcast %253 : vector<1x32xf32> to vector<128x32xf32>
    %255 = arith.addf %252, %254 : vector<128x32xf32>
    %cst_63 = arith.constant 0.000000e+00 : f32
    %256 = vector.broadcast %cst_63 : f32 to vector<128x32xf32>
    %257 = arith.cmpf ogt, %255, %256 : vector<128x32xf32>
    %cst_64 = arith.constant 2.000000e-01 : f32
    %258 = vector.broadcast %cst_64 : f32 to vector<128x32xf32>
    %259 = arith.mulf %258, %255 : vector<128x32xf32>
    %260 = arith.select %257, %255, %259 : vector<128x32xi1>, vector<128x32xf32>
    %261 = arith.truncf %260 : vector<128x32xf32> to vector<128x32xbf16>
    %c0_65 = arith.constant 0 : index
    %c0_66 = arith.constant 0 : index
    %262 = vector.load %arg7[%c0_65, %c0_66] : memref<32x128xbf16, #tpu.memory_space<vmem>>, vector<32x128xbf16>
    %cst_67 = arith.constant dense<0.000000e+00> : vector<128x128xf32>
    %263 = tpu.matmul %261, %262, %cst_67 {dimension_numbers = #tpu.dot_dimension_numbers<[1], [0], [0], [1], [0, 0, 1, 1], [], []>} : vector<128x32xbf16>, vector<32x128xbf16>, vector<128x128xf32> -> vector<128x128xf32>
    %264 = vector.extract_strided_slice %263 {offsets = [0, 0], sizes = [128, 32], strides = [1, 1]} : vector<128x128xf32> to vector<128x32xf32>
    %265 = vector.extract_strided_slice %263 {offsets = [0, 32], sizes = [128, 2], strides = [1, 1]} : vector<128x128xf32> to vector<128x2xf32>
    %c0_68 = arith.constant 0 : index
    %c0_69 = arith.constant 0 : index
    %266 = vector.load %arg8[%c0_68, %c0_69] : memref<2x32xbf16, #tpu.memory_space<vmem>>, vector<2x32xbf16>
    %cst_70 = arith.constant dense<0.000000e+00> : vector<2x128xf32>
    %267 = tpu.matmul %266, %261, %cst_70 {dimension_numbers = #tpu.dot_dimension_numbers<[1], [1], [0], [0], [0, 0, 1, 0], [], []>} : vector<2x32xbf16>, vector<128x32xbf16>, vector<2x128xf32> -> vector<2x128xf32>
    %268 = vector.extract_strided_slice %264 {offsets = [0, 0], sizes = [128, 16], strides = [1, 1]} : vector<128x32xf32> to vector<128x16xf32>
    %269 = arith.truncf %268 : vector<128x16xf32> to vector<128x16xbf16>
    %270 = vector.extract_strided_slice %265 {offsets = [0, 0], sizes = [128, 1], strides = [1, 1]} : vector<128x2xf32> to vector<128x1xf32>
    %271 = vector.extract_strided_slice %267 {offsets = [0, 0], sizes = [1, 128], strides = [1, 1]} : vector<2x128xf32> to vector<1x128xf32>
    %272 = vector.broadcast %270 : vector<128x1xf32> to vector<128x128xf32>
    %273 = vector.broadcast %271 : vector<1x128xf32> to vector<128x128xf32>
    %274 = arith.addf %272, %273 : vector<128x128xf32>
    %cst_71 = arith.constant 0.000000e+00 : f32
    %275 = vector.broadcast %cst_71 : f32 to vector<128x128xf32>
    %276 = arith.cmpf ogt, %274, %275 : vector<128x128xf32>
    %cst_72 = arith.constant 2.000000e-01 : f32
    %277 = vector.broadcast %cst_72 : f32 to vector<128x128xf32>
    %278 = arith.mulf %277, %274 : vector<128x128xf32>
    %279 = arith.select %276, %274, %278 : vector<128x128xi1>, vector<128x128xf32>
    %280 = arith.addf %279, %2 : vector<128x128xf32>
    %cst_73 = arith.constant dense<0xFF800000> : vector<128xf32>
    %281 = vector.multi_reduction <maximumf>, %280, %cst_73 [1] : vector<128x128xf32> to vector<128xf32>
    %282 = vector.shape_cast %281 : vector<128xf32> to vector<128x1xf32>
    %283 = vector.broadcast %282 : vector<128x1xf32> to vector<128x128xf32>
    %284 = arith.subf %280, %283 : vector<128x128xf32>
    %285 = math.exp %284 : vector<128x128xf32>
    %cst_74 = arith.constant dense<0.000000e+00> : vector<128xf32>
    %286 = vector.multi_reduction <add>, %285, %cst_74 [1] : vector<128x128xf32> to vector<128xf32>
    %287 = vector.shape_cast %286 : vector<128xf32> to vector<128x1xf32>
    %288 = arith.truncf %285 : vector<128x128xf32> to vector<128x128xbf16>
    %cst_75 = arith.constant dense<0.000000e+00> : vector<128x16xf32>
    %289 = tpu.matmul %288, %269, %cst_75 {dimension_numbers = #tpu.dot_dimension_numbers<[1], [0], [0], [1], [0, 0, 1, 1], [], []>} : vector<128x128xbf16>, vector<128x16xbf16>, vector<128x16xf32> -> vector<128x16xf32>
    %290 = tpu.reciprocal %287 {approx = true} : vector<128x1xf32> -> vector<128x1xf32>
    %291 = vector.broadcast %290 : vector<128x1xf32> to vector<128x16xf32>
    %292 = arith.mulf %289, %291 : vector<128x16xf32>
    %293 = vector.extract_strided_slice %260 {offsets = [0, 0], sizes = [128, 16], strides = [1, 1]} : vector<128x32xf32> to vector<128x16xf32>
    %294 = arith.addf %292, %293 : vector<128x16xf32>
    %295 = vector.extract_strided_slice %264 {offsets = [0, 16], sizes = [128, 16], strides = [1, 1]} : vector<128x32xf32> to vector<128x16xf32>
    %296 = arith.truncf %295 : vector<128x16xf32> to vector<128x16xbf16>
    %297 = vector.extract_strided_slice %265 {offsets = [0, 1], sizes = [128, 1], strides = [1, 1]} : vector<128x2xf32> to vector<128x1xf32>
    %298 = vector.extract_strided_slice %267 {offsets = [1, 0], sizes = [1, 128], strides = [1, 1]} : vector<2x128xf32> to vector<1x128xf32>
    %299 = vector.broadcast %297 : vector<128x1xf32> to vector<128x128xf32>
    %300 = vector.broadcast %298 : vector<1x128xf32> to vector<128x128xf32>
    %301 = arith.addf %299, %300 : vector<128x128xf32>
    %cst_76 = arith.constant 0.000000e+00 : f32
    %302 = vector.broadcast %cst_76 : f32 to vector<128x128xf32>
    %303 = arith.cmpf ogt, %301, %302 : vector<128x128xf32>
    %cst_77 = arith.constant 2.000000e-01 : f32
    %304 = vector.broadcast %cst_77 : f32 to vector<128x128xf32>
    %305 = arith.mulf %304, %301 : vector<128x128xf32>
    %306 = arith.select %303, %301, %305 : vector<128x128xi1>, vector<128x128xf32>
    %307 = arith.addf %306, %2 : vector<128x128xf32>
    %cst_78 = arith.constant dense<0xFF800000> : vector<128xf32>
    %308 = vector.multi_reduction <maximumf>, %307, %cst_78 [1] : vector<128x128xf32> to vector<128xf32>
    %309 = vector.shape_cast %308 : vector<128xf32> to vector<128x1xf32>
    %310 = vector.broadcast %309 : vector<128x1xf32> to vector<128x128xf32>
    %311 = arith.subf %307, %310 : vector<128x128xf32>
    %312 = math.exp %311 : vector<128x128xf32>
    %cst_79 = arith.constant dense<0.000000e+00> : vector<128xf32>
    %313 = vector.multi_reduction <add>, %312, %cst_79 [1] : vector<128x128xf32> to vector<128xf32>
    %314 = vector.shape_cast %313 : vector<128xf32> to vector<128x1xf32>
    %315 = arith.truncf %312 : vector<128x128xf32> to vector<128x128xbf16>
    %cst_80 = arith.constant dense<0.000000e+00> : vector<128x16xf32>
    %316 = tpu.matmul %315, %296, %cst_80 {dimension_numbers = #tpu.dot_dimension_numbers<[1], [0], [0], [1], [0, 0, 1, 1], [], []>} : vector<128x128xbf16>, vector<128x16xbf16>, vector<128x16xf32> -> vector<128x16xf32>
    %317 = tpu.reciprocal %314 {approx = true} : vector<128x1xf32> -> vector<128x1xf32>
    %318 = vector.broadcast %317 : vector<128x1xf32> to vector<128x16xf32>
    %319 = arith.mulf %316, %318 : vector<128x16xf32>
    %320 = vector.extract_strided_slice %260 {offsets = [0, 16], sizes = [128, 16], strides = [1, 1]} : vector<128x32xf32> to vector<128x16xf32>
    %321 = arith.addf %319, %320 : vector<128x16xf32>
    %322 = tpu.concatenate %294, %321 in 1 : vector<128x16xf32>, vector<128x16xf32> -> vector<128x32xf32>
    %cst_81 = arith.constant dense<0.000000e+00> : vector<128xf32>
    %323 = vector.multi_reduction <add>, %322, %cst_81 [1] : vector<128x32xf32> to vector<128xf32>
    %324 = vector.shape_cast %323 : vector<128xf32> to vector<128x1xf32>
    %cst_82 = arith.constant 3.200000e+01 : f32
    %325 = vector.broadcast %cst_82 : f32 to vector<128x1xf32>
    %326 = arith.divf %324, %325 : vector<128x1xf32>
    %327 = vector.broadcast %326 : vector<128x1xf32> to vector<128x32xf32>
    %328 = arith.subf %322, %327 : vector<128x32xf32>
    %329 = arith.mulf %328, %328 : vector<128x32xf32>
    %cst_83 = arith.constant dense<0.000000e+00> : vector<128xf32>
    %330 = vector.multi_reduction <add>, %329, %cst_83 [1] : vector<128x32xf32> to vector<128xf32>
    %331 = vector.shape_cast %330 : vector<128xf32> to vector<128x1xf32>
    %cst_84 = arith.constant 3.200000e+01 : f32
    %332 = vector.broadcast %cst_84 : f32 to vector<128x1xf32>
    %333 = arith.divf %331, %332 : vector<128x1xf32>
    %334 = vector.broadcast %326 : vector<128x1xf32> to vector<128x32xf32>
    %335 = arith.subf %322, %334 : vector<128x32xf32>
    %cst_85 = arith.constant 9.99999974E-6 : f32
    %336 = vector.broadcast %cst_85 : f32 to vector<128x1xf32>
    %337 = arith.addf %333, %336 : vector<128x1xf32>
    %338 = math.rsqrt %337 : vector<128x1xf32>
    %339 = vector.broadcast %338 : vector<128x1xf32> to vector<128x32xf32>
    %340 = arith.mulf %335, %339 : vector<128x32xf32>
    %341 = vector.broadcast %9 : vector<128x1xf32> to vector<128x32xf32>
    %342 = arith.mulf %322, %341 : vector<128x32xf32>
    %cst_86 = arith.constant dense<0.000000e+00> : vector<32xf32>
    %343 = vector.multi_reduction <add>, %342, %cst_86 [0] : vector<128x32xf32> to vector<32xf32>
    %344 = vector.shape_cast %343 : vector<32xf32> to vector<1x32xf32>
    %cst_87 = arith.constant 1.562500e-02 : f32
    %345 = vector.broadcast %cst_87 : f32 to vector<1x32xf32>
    %346 = arith.mulf %344, %345 : vector<1x32xf32>
    %347 = vector.broadcast %346 : vector<1x32xf32> to vector<128x32xf32>
    %348 = arith.subf %322, %347 : vector<128x32xf32>
    %349 = arith.mulf %348, %348 : vector<128x32xf32>
    %350 = vector.broadcast %9 : vector<128x1xf32> to vector<128x32xf32>
    %351 = arith.mulf %349, %350 : vector<128x32xf32>
    %cst_88 = arith.constant dense<0.000000e+00> : vector<32xf32>
    %352 = vector.multi_reduction <add>, %351, %cst_88 [0] : vector<128x32xf32> to vector<32xf32>
    %353 = vector.shape_cast %352 : vector<32xf32> to vector<1x32xf32>
    %cst_89 = arith.constant 1.562500e-02 : f32
    %354 = vector.broadcast %cst_89 : f32 to vector<1x32xf32>
    %355 = arith.mulf %353, %354 : vector<1x32xf32>
    %356 = vector.broadcast %346 : vector<1x32xf32> to vector<128x32xf32>
    %357 = arith.subf %322, %356 : vector<128x32xf32>
    %cst_90 = arith.constant 9.99999974E-6 : f32
    %358 = vector.broadcast %cst_90 : f32 to vector<1x32xf32>
    %359 = arith.addf %355, %358 : vector<1x32xf32>
    %360 = math.rsqrt %359 : vector<1x32xf32>
    %361 = vector.broadcast %360 : vector<1x32xf32> to vector<128x32xf32>
    %362 = arith.mulf %357, %361 : vector<128x32xf32>
    %c6 = arith.constant 6 : index
    %363 = memref.load %arg11[%c6] : memref<9xf32, #tpu.memory_space<smem>>
    %364 = vector.broadcast %363 : f32 to vector<128x32xf32>
    %365 = arith.mulf %364, %322 : vector<128x32xf32>
    %c7 = arith.constant 7 : index
    %366 = memref.load %arg11[%c7] : memref<9xf32, #tpu.memory_space<smem>>
    %367 = vector.broadcast %366 : f32 to vector<128x32xf32>
    %368 = arith.mulf %367, %340 : vector<128x32xf32>
    %369 = arith.addf %365, %368 : vector<128x32xf32>
    %c8 = arith.constant 8 : index
    %370 = memref.load %arg11[%c8] : memref<9xf32, #tpu.memory_space<smem>>
    %371 = vector.broadcast %370 : f32 to vector<128x32xf32>
    %372 = arith.mulf %371, %362 : vector<128x32xf32>
    %373 = arith.addf %369, %372 : vector<128x32xf32>
    %374 = vector.extract_strided_slice %3 {offsets = [2, 0], sizes = [1, 32], strides = [1, 1]} : vector<3x32xf32> to vector<1x32xf32>
    %375 = vector.broadcast %374 : vector<1x32xf32> to vector<128x32xf32>
    %376 = arith.mulf %373, %375 : vector<128x32xf32>
    %377 = vector.extract_strided_slice %4 {offsets = [2, 0], sizes = [1, 32], strides = [1, 1]} : vector<3x32xf32> to vector<1x32xf32>
    %378 = vector.broadcast %377 : vector<1x32xf32> to vector<128x32xf32>
    %379 = arith.addf %376, %378 : vector<128x32xf32>
    %cst_91 = arith.constant 0.000000e+00 : f32
    %380 = vector.broadcast %cst_91 : f32 to vector<128x32xf32>
    %381 = arith.cmpf ogt, %379, %380 : vector<128x32xf32>
    %cst_92 = arith.constant 2.000000e-01 : f32
    %382 = vector.broadcast %cst_92 : f32 to vector<128x32xf32>
    %383 = arith.mulf %382, %379 : vector<128x32xf32>
    %384 = arith.select %381, %379, %383 : vector<128x32xi1>, vector<128x32xf32>
    %385 = vector.extract_strided_slice %384 {offsets = [0, 0], sizes = [128, 16], strides = [1, 1]} : vector<128x32xf32> to vector<128x16xf32>
    %386 = vector.extract_strided_slice %384 {offsets = [0, 16], sizes = [128, 16], strides = [1, 1]} : vector<128x32xf32> to vector<128x16xf32>
    %387 = arith.addf %385, %386 : vector<128x16xf32>
    %cst_93 = arith.constant 5.000000e-01 : f32
    %388 = vector.broadcast %cst_93 : f32 to vector<128x16xf32>
    %389 = arith.mulf %387, %388 : vector<128x16xf32>
    %390 = vector.broadcast %9 : vector<128x1xf32> to vector<128x16xf32>
    %391 = arith.mulf %389, %390 : vector<128x16xf32>
    %cst_94 = arith.constant dense<0.000000e+00> : vector<16xf32>
    %392 = vector.multi_reduction <add>, %391, %cst_94 [0] : vector<128x16xf32> to vector<16xf32>
    %393 = vector.shape_cast %392 : vector<16xf32> to vector<1x16xf32>
    %cst_95 = arith.constant 1.562500e-02 : f32
    %394 = vector.broadcast %cst_95 : f32 to vector<1x16xf32>
    %395 = arith.mulf %393, %394 : vector<1x16xf32>
    %cst_96 = arith.constant 0.000000e+00 : f32
    %396 = vector.broadcast %cst_96 : f32 to vector<1x16xf32>
    %397 = arith.cmpf ogt, %395, %396 : vector<1x16xf32>
    %cst_97 = arith.constant 2.000000e-01 : f32
    %398 = vector.broadcast %cst_97 : f32 to vector<1x16xf32>
    %399 = arith.mulf %398, %395 : vector<1x16xf32>
    %400 = arith.select %397, %395, %399 : vector<1x16xi1>, vector<1x16xf32>
    %c0_98 = arith.constant 0 : index
    %c0_99 = arith.constant 0 : index
    %c0_100 = arith.constant 0 : index
    %401 = vector.load %arg12[%c0_98, %c0_99, %c0_100] : memref<1x1x16xf32, #tpu.memory_space<vmem>>, vector<1x1x16xf32>
    %402 = vector.shape_cast %401 : vector<1x1x16xf32> to vector<1x16xf32>
    %403 = vector.shape_cast %400 : vector<1x16xf32> to vector<1x1x16xf32>
    tpu.vector_store %arg12[%c0_98, %c0_99, %c0_100], %403 {strides = array<i32>} : memref<1x1x16xf32, #tpu.memory_space<vmem>>, vector<1x1x16xf32>,
    return
  }
  func.func @transform_0(%arg0: i32) -> (i32, i32, i32) {
    %c0_i32 = arith.constant 0 : i32
    %c0_i32_0 = arith.constant 0 : i32
    %c0_i32_1 = arith.constant 0 : i32
    return %arg0, %c0_i32, %c0_i32_0 : i32, i32, i32
  }
  func.func @transform_1(%arg0: i32) -> (i32, i32, i32) {
    %c0_i32 = arith.constant 0 : i32
    %c0_i32_0 = arith.constant 0 : i32
    %c0_i32_1 = arith.constant 0 : i32
    return %arg0, %c0_i32, %c0_i32_0 : i32, i32, i32
  }
  func.func @transform_2(%arg0: i32) -> (i32, i32) {
    %c0_i32 = arith.constant 0 : i32
    %c0_i32_0 = arith.constant 0 : i32
    %c0_i32_1 = arith.constant 0 : i32
    return %c0_i32, %c0_i32_0 : i32, i32
  }
  func.func @transform_3(%arg0: i32) -> (i32, i32) {
    %c0_i32 = arith.constant 0 : i32
    %c0_i32_0 = arith.constant 0 : i32
    %c0_i32_1 = arith.constant 0 : i32
    return %c0_i32, %c0_i32_0 : i32, i32
  }
  func.func @transform_4(%arg0: i32) -> (i32, i32) {
    %c0_i32 = arith.constant 0 : i32
    %c0_i32_0 = arith.constant 0 : i32
    %c0_i32_1 = arith.constant 0 : i32
    return %c0_i32, %c0_i32_0 : i32, i32
  }
  func.func @transform_5(%arg0: i32) -> (i32, i32) {
    %c0_i32 = arith.constant 0 : i32
    %c0_i32_0 = arith.constant 0 : i32
    %c0_i32_1 = arith.constant 0 : i32
    return %c0_i32, %c0_i32_0 : i32, i32
  }
  func.func @transform_6(%arg0: i32) -> (i32, i32) {
    %c0_i32 = arith.constant 0 : i32
    %c0_i32_0 = arith.constant 0 : i32
    %c0_i32_1 = arith.constant 0 : i32
    return %c0_i32, %c0_i32_0 : i32, i32
  }
  func.func @transform_7(%arg0: i32) -> (i32, i32) {
    %c0_i32 = arith.constant 0 : i32
    %c0_i32_0 = arith.constant 0 : i32
    %c0_i32_1 = arith.constant 0 : i32
    return %c0_i32, %c0_i32_0 : i32, i32
  }
  func.func @transform_8(%arg0: i32) -> (i32, i32) {
    %c0_i32 = arith.constant 0 : i32
    %c0_i32_0 = arith.constant 0 : i32
    %c0_i32_1 = arith.constant 0 : i32
    return %c0_i32, %c0_i32_0 : i32, i32
  }
  func.func @transform_9(%arg0: i32) -> (i32, i32) {
    %c0_i32 = arith.constant 0 : i32
    %c0_i32_0 = arith.constant 0 : i32
    %c0_i32_1 = arith.constant 0 : i32
    return %c0_i32, %c0_i32_0 : i32, i32
  }
  func.func @transform_10(%arg0: i32) -> i32 {
    %c0_i32 = arith.constant 0 : i32
    %c0_i32_0 = arith.constant 0 : i32
    return %c0_i32 : i32
  }
  func.func @transform_11(%arg0: i32) -> (i32, i32, i32) {
    %c0_i32 = arith.constant 0 : i32
    %c0_i32_0 = arith.constant 0 : i32
    %c0_i32_1 = arith.constant 0 : i32
    return %arg0, %c0_i32, %c0_i32_0 : i32, i32, i32
  }
}

</mosaic_0001>

<llo_original>
// kernel: tpu_custom_call.1
$region0: #{tpu_custom_call.1}
  #allocation0 [shape = 'u32[]', space=smem, size = 0x4, offset = 0x4, fixed_abs, tag = 'smem constant byte address 0x4 - core index']
  #allocation1 [shape = 'u32[144,128]{1,0:T(1,128)}', space=vmem, size = 0x12000, scoped, tag = 'internal scratch']
  %s0 = inlined_call_operand.vmem [shape: f32[2,128,16], index: 0, kind: input, shape index: {}]
  %s1 = inlined_call_operand.vmem [shape: bf16[2,128,128], index: 1, kind: input, shape index: {}]
  %s2 = inlined_call_operand.vmem [shape: bf16[16,128], index: 2, kind: input, shape index: {}]
  %s3 = inlined_call_operand.vmem [shape: bf16[2,16], index: 3, kind: input, shape index: {}]
  %s4 = inlined_call_operand.vmem [shape: bf16[32,128], index: 4, kind: input, shape index: {}]
  %s5 = inlined_call_operand.vmem [shape: bf16[2,32], index: 5, kind: input, shape index: {}]
  %s6 = inlined_call_operand.vmem [shape: bf16[32,128], index: 6, kind: input, shape index: {}]
  %s7 = inlined_call_operand.vmem [shape: bf16[2,32], index: 7, kind: input, shape index: {}]
  %s8 = inlined_call_operand.vmem [shape: f32[3,32], index: 8, kind: input, shape index: {}]
  %s9 = inlined_call_operand.vmem [shape: f32[3,32], index: 9, kind: input, shape index: {}]
  %s10 = inlined_call_operand.vmem [shape: f32[9], index: 10, kind: input, shape index: {}]
  %s11 = inlined_call_operand.hbm [shape: f32[2,1,16], index: 11, kind: output, shape index: {}]
  %s12 = sld [smem:[#allocation0]]
  $region81: #{tpu_custom_call.1} parent=0
    _
  %s14 = ssub.s32 1, %s12
  %s15 = scalar_select 0, %s14, %s12
  $region1: #{tpu_custom_call.1} parent=0
    #allocation2 [shape = 'u8[512]{0}', space=smem, size = 0x200, scoped, tag = 'input window, operand 10, single buffered']
    #allocation3 [shape = 's32[2]{0}', space=sflag, size = 0x8, scoped, tag = 'scoped memory for tpu_custom_call.1']
    #allocation4 [shape = 's32[2]{0}', space=sflag, size = 0x8, scoped, tag = 'scoped memory for tpu_custom_call.1']
    #allocation5 [shape = 'u8[1024]{0}', space=vmem, size = 0x400, scoped, tag = 'output window, operand 0']
    %16 = vsyncpa [#allocation4], 0
    %17 = vsyncpa [#allocation3], 0
    %s18 = scalar_lea.sflag [#allocation3], 1
    %19 = vsyncpa %s18, 0
    loop: start=0, step=1, limit=4
    $region2: #{tpu_custom_call.1} parent=1 // loop_pre_header
      _
    $region3: #{tpu_custom_call.1} parent=1 // loop_header
      %s21 = sphi 0, %s25
      %p22 = scmp.ge.s32.totalorder %s21, 4
      %s31 = sphi 0, %s33
      %s34 = sphi 0, %s31
      %s35 = sphi 0, %s34
      %s51 = sphi 0, %s35
      %s57 = sphi 0, %s59
      %s60 = sphi 0, %s57
      %s61 = sphi 0, %s60
      %s77 = sphi 0, %s61
      %s81 = sphi 0, %s81
      %s83 = sphi 0, %s81
      %s84 = sphi 0, %s83
      %s98 = sphi 0, %s84
      %s102 = sphi 0, %s102
      %s104 = sphi 0, %s102
      %s105 = sphi 0, %s104
      %s119 = sphi 0, %s105
      %s123 = sphi 0, %s123
      %s125 = sphi 0, %s123
      %s126 = sphi 0, %s125
      %s140 = sphi 0, %s126
      %s144 = sphi 0, %s144
      %s146 = sphi 0, %s144
      %s147 = sphi 0, %s146
      %s161 = sphi 0, %s147
      %s165 = sphi 0, %s165
      %s167 = sphi 0, %s165
      %s168 = sphi 0, %s167
      %s182 = sphi 0, %s168
      %s186 = sphi 0, %s186
      %s188 = sphi 0, %s186
      %s189 = sphi 0, %s188
      %s203 = sphi 0, %s189
      %s207 = sphi 0, %s207
      %s209 = sphi 0, %s207
      %s210 = sphi 0, %s209
      %s224 = sphi 0, %s210
      %s228 = sphi 0, %s228
      %s230 = sphi 0, %s228
      %s231 = sphi 0, %s230
      %s245 = sphi 0, %s231
      %s249 = sphi 0, %s249
      %s251 = sphi 0, %s249
      %s252 = sphi 0, %s251
      %s266 = sphi 0, %s252
      %s272 = sphi 0, %s274
      %s275 = sphi 0, %s272
      %s276 = sphi 0, %s275
      %s292 = sphi 0, %s276
    $region4: #{tpu_custom_call.1} parent=1 // loop_header_branch
      %24 = sbr.rel (%p22) target = $region8
    $region5: #{tpu_custom_call.1} parent=1 // loop_body
      %s26 = ssub.s32 %s21, 1
      %s27 = ssub.s32 %s21, 2
      %s28 = sadd.s32 %s21, 1
      %s29 = ssub.s32 %s21, %s28
      %p30 = scmp.eq.s32.totalorder %s29, 0
      %s32 = sadd.s32 %s31, 1
      %s33 = scalar_select %p30, %s31, %s32
      %p36 = pneg %p30
      %p37 = scmp.eq.s32.totalorder %s21, 1
      %p38 = por %p36, %p37
      %p39 = scmp.ne.s32.totalorder %s31, %s34
      %p40 = scmp.eq.s32.totalorder %s21, 0
      %p41 = por %p39, %p40
      %p42 = scmp.ne.s32.totalorder %s31, %s34
      %p43 = scmp.eq.s32.totalorder %s26, 1
      %p44 = por %p42, %p43
      %p45 = scmp.ne.s32.totalorder %s34, %s35
      %p46 = scmp.eq.s32.totalorder %s26, 0
      %p47 = por %p45, %p46
      %p48 = scmp.ne.s32.totalorder %s34, %s35
      %p49 = scmp.eq.s32.totalorder %s27, 1
      %p50 = por %p48, %p49
      %p52 = scmp.ne.s32.totalorder %s35, %s51
      %p53 = scmp.eq.s32.totalorder %s27, 0
      %p54 = por %p52, %p53
      %s55 = ssub.s32 %s21, %s28
      %p56 = scmp.eq.s32.totalorder %s55, 0
      %s58 = sadd.s32 %s57, 1
      %s59 = scalar_select %p56, %s57, %s58
      %p62 = pneg %p56
      %p63 = scmp.eq.s32.totalorder %s21, 1
      %p64 = por %p62, %p63
      %p65 = scmp.ne.s32.totalorder %s57, %s60
      %p66 = scmp.eq.s32.totalorder %s21, 0
      %p67 = por %p65, %p66
      %p68 = scmp.ne.s32.totalorder %s57, %s60
      %p69 = scmp.eq.s32.totalorder %s26, 1
      %p70 = por %p68, %p69
      %p71 = scmp.ne.s32.totalorder %s60, %s61
      %p72 = scmp.eq.s32.totalorder %s26, 0
      %p73 = por %p71, %p72
      %p74 = scmp.ne.s32.totalorder %s60, %s61
      %p75 = scmp.eq.s32.totalorder %s27, 1
      %p76 = por %p74, %p75
      %p78 = scmp.ne.s32.totalorder %s61, %s77
      %p79 = scmp.eq.s32.totalorder %s27, 0
      %p80 = por %p78, %p79
      %s82 = sadd.s32 %s81, 1
      %p85 = scmp.eq.s32.totalorder %s21, 1
      %p86 = scmp.ne.s32.totalorder %s81, %s83
      %p87 = scmp.eq.s32.totalorder %s21, 0
      %p88 = por %p86, %p87
      %p89 = scmp.ne.s32.totalorder %s81, %s83
      %p90 = scmp.eq.s32.totalorder %s26, 1
      %p91 = por %p89, %p90
      %p92 = scmp.ne.s32.totalorder %s83, %s84
      %p93 = scmp.eq.s32.totalorder %s26, 0
      %p94 = por %p92, %p93
      %p95 = scmp.ne.s32.totalorder %s83, %s84
      %p96 = scmp.eq.s32.totalorder %s27, 1
      %p97 = por %p95, %p96
      %p99 = scmp.ne.s32.totalorder %s84, %s98
      %p100 = scmp.eq.s32.totalorder %s27, 0
      %p101 = por %p99, %p100
      %s103 = sadd.s32 %s102, 1
      %p106 = scmp.eq.s32.totalorder %s21, 1
      %p107 = scmp.ne.s32.totalorder %s102, %s104
      %p108 = scmp.eq.s32.totalorder %s21, 0
      %p109 = por %p107, %p108
      %p110 = scmp.ne.s32.totalorder %s102, %s104
      %p111 = scmp.eq.s32.totalorder %s26, 1
      %p112 = por %p110, %p111
      %p113 = scmp.ne.s32.totalorder %s104, %s105
      %p114 = scmp.eq.s32.totalorder %s26, 0
      %p115 = por %p113, %p114
      %p116 = scmp.ne.s32.totalorder %s104, %s105
      %p117 = scmp.eq.s32.totalorder %s27, 1
      %p118 = por %p116, %p117
      %p120 = scmp.ne.s32.totalorder %s105, %s119
      %p121 = scmp.eq.s32.totalorder %s27, 0
      %p122 = por %p120, %p121
      %s124 = sadd.s32 %s123, 1
      %p127 = scmp.eq.s32.totalorder %s21, 1
      %p128 = scmp.ne.s32.totalorder %s123, %s125
      %p129 = scmp.eq.s32.totalorder %s21, 0
      %p130 = por %p128, %p129
      %p131 = scmp.ne.s32.totalorder %s123, %s125
      %p132 = scmp.eq.s32.totalorder %s26, 1
      %p133 = por %p131, %p132
      %p134 = scmp.ne.s32.totalorder %s125, %s126
      %p135 = scmp.eq.s32.totalorder %s26, 0
      %p136 = por %p134, %p135
      %p137 = scmp.ne.s32.totalorder %s125, %s126
      %p138 = scmp.eq.s32.totalorder %s27, 1
      %p139 = por %p137, %p138
      %p141 = scmp.ne.s32.totalorder %s126, %s140
      %p142 = scmp.eq.s32.totalorder %s27, 0
      %p143 = por %p141, %p142
      %s145 = sadd.s32 %s144, 1
      %p148 = scmp.eq.s32.totalorder %s21, 1
      %p149 = scmp.ne.s32.totalorder %s144, %s146
      %p150 = scmp.eq.s32.totalorder %s21, 0
      %p151 = por %p149, %p150
      %p152 = scmp.ne.s32.totalorder %s144, %s146
      %p153 = scmp.eq.s32.totalorder %s26, 1
      %p154 = por %p152, %p153
      %p155 = scmp.ne.s32.totalorder %s146, %s147
      %p156 = scmp.eq.s32.totalorder %s26, 0
      %p157 = por %p155, %p156
      %p158 = scmp.ne.s32.totalorder %s146, %s147
      %p159 = scmp.eq.s32.totalorder %s27, 1
      %p160 = por %p158, %p159
      %p162 = scmp.ne.s32.totalorder %s147, %s161
      %p163 = scmp.eq.s32.totalorder %s27, 0
      %p164 = por %p162, %p163
      %s166 = sadd.s32 %s165, 1
      %p169 = scmp.eq.s32.totalorder %s21, 1
      %p170 = scmp.ne.s32.totalorder %s165, %s167
      %p171 = scmp.eq.s32.totalorder %s21, 0
      %p172 = por %p170, %p171
      %p173 = scmp.ne.s32.totalorder %s165, %s167
      %p174 = scmp.eq.s32.totalorder %s26, 1
      %p175 = por %p173, %p174
      %p176 = scmp.ne.s32.totalorder %s167, %s168
      %p177 = scmp.eq.s32.totalorder %s26, 0
      %p178 = por %p176, %p177
      %p179 = scmp.ne.s32.totalorder %s167, %s168
      %p180 = scmp.eq.s32.totalorder %s27, 1
      %p181 = por %p179, %p180
      %p183 = scmp.ne.s32.totalorder %s168, %s182
      %p184 = scmp.eq.s32.totalorder %s27, 0
      %p185 = por %p183, %p184
      %s187 = sadd.s32 %s186, 1
      %p190 = scmp.eq.s32.totalorder %s21, 1
      %p191 = scmp.ne.s32.totalorder %s186, %s188
      %p192 = scmp.eq.s32.totalorder %s21, 0
      %p193 = por %p191, %p192
      %p194 = scmp.ne.s32.totalorder %s186, %s188
      %p195 = scmp.eq.s32.totalorder %s26, 1
      %p196 = por %p194, %p195
      %p197 = scmp.ne.s32.totalorder %s188, %s189
      %p198 = scmp.eq.s32.totalorder %s26, 0
      %p199 = por %p197, %p198
      %p200 = scmp.ne.s32.totalorder %s188, %s189
      %p201 = scmp.eq.s32.totalorder %s27, 1
      %p202 = por %p200, %p201
      %p204 = scmp.ne.s32.totalorder %s189, %s203
      %p205 = scmp.eq.s32.totalorder %s27, 0
      %p206 = por %p204, %p205
      %s208 = sadd.s32 %s207, 1
      %p211 = scmp.eq.s32.totalorder %s21, 1
      %p212 = scmp.ne.s32.totalorder %s207, %s209
      %p213 = scmp.eq.s32.totalorder %s21, 0
      %p214 = por %p212, %p213
      %p215 = scmp.ne.s32.totalorder %s207, %s209
      %p216 = scmp.eq.s32.totalorder %s26, 1
      %p217 = por %p215, %p216
      %p218 = scmp.ne.s32.totalorder %s209, %s210
      %p219 = scmp.eq.s32.totalorder %s26, 0
      %p220 = por %p218, %p219
      %p221 = scmp.ne.s32.totalorder %s209, %s210
      %p222 = scmp.eq.s32.totalorder %s27, 1
      %p223 = por %p221, %p222
      %p225 = scmp.ne.s32.totalorder %s210, %s224
      %p226 = scmp.eq.s32.totalorder %s27, 0
      %p227 = por %p225, %p226
      %s229 = sadd.s32 %s228, 1
      %p232 = scmp.eq.s32.totalorder %s21, 1
      %p233 = scmp.ne.s32.totalorder %s228, %s230
      %p234 = scmp.eq.s32.totalorder %s21, 0
      %p235 = por %p233, %p234
      %p236 = scmp.ne.s32.totalorder %s228, %s230
      %p237 = scmp.eq.s32.totalorder %s26, 1
      %p238 = por %p236, %p237
      %p239 = scmp.ne.s32.totalorder %s230, %s231
      %p240 = scmp.eq.s32.totalorder %s26, 0
      %p241 = por %p239, %p240
      %p242 = scmp.ne.s32.totalorder %s230, %s231
      %p243 = scmp.eq.s32.totalorder %s27, 1
      %p244 = por %p242, %p243
      %p246 = scmp.ne.s32.totalorder %s231, %s245
      %p247 = scmp.eq.s32.totalorder %s27, 0
      %p248 = por %p246, %p247
      %s250 = sadd.s32 %s249, 1
      %p253 = scmp.eq.s32.totalorder %s21, 1
      %p254 = scmp.ne.s32.totalorder %s249, %s251
      %p255 = scmp.eq.s32.totalorder %s21, 0
      %p256 = por %p254, %p255
      %p257 = scmp.ne.s32.totalorder %s249, %s251
      %p258 = scmp.eq.s32.totalorder %s26, 1
      %p259 = por %p257, %p258
      %p260 = scmp.ne.s32.totalorder %s251, %s252
      %p261 = scmp.eq.s32.totalorder %s26, 0
      %p262 = por %p260, %p261
      %p263 = scmp.ne.s32.totalorder %s251, %s252
      %p264 = scmp.eq.s32.totalorder %s27, 1
      %p265 = por %p263, %p264
      %p267 = scmp.ne.s32.totalorder %s252, %s266
      %p268 = scmp.eq.s32.totalorder %s27, 0
      %p269 = por %p267, %p268
      %s270 = ssub.s32 %s21, %s28
      %p271 = scmp.eq.s32.totalorder %s270, 0
      %s273 = sadd.s32 %s272, 1
      %s274 = scalar_select %p271, %s272, %s273
      %p277 = pneg %p271
      %p278 = scmp.eq.s32.totalorder %s21, 1
      %p279 = por %p277, %p278
      %p280 = scmp.ne.s32.totalorder %s272, %s275
      %p281 = scmp.eq.s32.totalorder %s21, 0
      %p282 = por %p280, %p281
      %p283 = scmp.ne.s32.totalorder %s272, %s275
      %p284 = scmp.eq.s32.totalorder %s26, 1
      %p285 = por %p283, %p284
      %p286 = scmp.ne.s32.totalorder %s275, %s276
      %p287 = scmp.eq.s32.totalorder %s26, 0
      %p288 = por %p286, %p287
      %p289 = scmp.ne.s32.totalorder %s275, %s276
      %p290 = scmp.eq.s32.totalorder %s27, 1
      %p291 = por %p289, %p290
      %p293 = scmp.ne.s32.totalorder %s276, %s292
      %p294 = scmp.eq.s32.totalorder %s27, 0
      %p295 = por %p293, %p294
      %p296 = scmp.le.s32.totalorder 1, %s21
      %p297 = scmp.lt.s32.totalorder %s21, 3
      %p298 = pnand %p296, %p297
      %p299 = pneg %p298
      // Predicated region
      $region9: #{tpu_custom_call.1} parent=5 // pred_check
        _
      $region10: #{tpu_custom_call.1} parent=5 // pred_check_branch
        %301 = sbr.rel (%p298) target = $region12
      $region11: #{tpu_custom_call.1} parent=5 // pred_region
        %s302 = ssub.s32 %s21, 1
        // Predicated region
        $region13: #{tpu_custom_call.1} parent=11 // pred_check
          %p303 = pneg %p94
        $region14: #{tpu_custom_call.1} parent=11 // pred_check_branch
          %305 = sbr.rel (%p303) target = $region16
        $region15: #{tpu_custom_call.1} parent=11 // pred_region
          _
        $region16: #{tpu_custom_call.1} parent=11 // pred_fallthru
          _
        // Predicated region
        $region17: #{tpu_custom_call.1} parent=11 // pred_check
          %p306 = pneg %p115
        $region18: #{tpu_custom_call.1} parent=11 // pred_check_branch
          %308 = sbr.rel (%p306) target = $region20
        $region19: #{tpu_custom_call.1} parent=11 // pred_region
          _
        $region20: #{tpu_custom_call.1} parent=11 // pred_fallthru
          _
        // Predicated region
        $region21: #{tpu_custom_call.1} parent=11 // pred_check
          %p309 = pneg %p136
        $region22: #{tpu_custom_call.1} parent=11 // pred_check_branch
          %311 = sbr.rel (%p309) target = $region24
        $region23: #{tpu_custom_call.1} parent=11 // pred_region
          _
        $region24: #{tpu_custom_call.1} parent=11 // pred_fallthru
          _
        // Predicated region
        $region25: #{tpu_custom_call.1} parent=11 // pred_check
          %p312 = pneg %p157
        $region26: #{tpu_custom_call.1} parent=11 // pred_check_branch
          %314 = sbr.rel (%p312) target = $region28
        $region27: #{tpu_custom_call.1} parent=11 // pred_region
          _
        $region28: #{tpu_custom_call.1} parent=11 // pred_fallthru
          _
        // Predicated region
        $region29: #{tpu_custom_call.1} parent=11 // pred_check
          %p315 = pneg %p178
        $region30: #{tpu_custom_call.1} parent=11 // pred_check_branch
          %317 = sbr.rel (%p315) target = $region32
        $region31: #{tpu_custom_call.1} parent=11 // pred_region
          _
        $region32: #{tpu_custom_call.1} parent=11 // pred_fallthru
          _
        // Predicated region
        $region33: #{tpu_custom_call.1} parent=11 // pred_check
          %p318 = pneg %p199
        $region34: #{tpu_custom_call.1} parent=11 // pred_check_branch
          %320 = sbr.rel (%p318) target = $region36
        $region35: #{tpu_custom_call.1} parent=11 // pred_region
          _
        $region36: #{tpu_custom_call.1} parent=11 // pred_fallthru
          _
        // Predicated region
        $region37: #{tpu_custom_call.1} parent=11 // pred_check
          %p321 = pneg %p220
        $region38: #{tpu_custom_call.1} parent=11 // pred_check_branch
          %323 = sbr.rel (%p321) target = $region40
        $region39: #{tpu_custom_call.1} parent=11 // pred_region
          _
        $region40: #{tpu_custom_call.1} parent=11 // pred_fallthru
          _
        // Predicated region
        $region41: #{tpu_custom_call.1} parent=11 // pred_check
          %p324 = pneg %p241
        $region42: #{tpu_custom_call.1} parent=11 // pred_check_branch
          %326 = sbr.rel (%p324) target = $region44
        $region43: #{tpu_custom_call.1} parent=11 // pred_region
          _
        $region44: #{tpu_custom_call.1} parent=11 // pred_fallthru
          _
        // Predicated region
        $region45: #{tpu_custom_call.1} parent=11 // pred_check
          %p327 = pneg %p262
        $region46: #{tpu_custom_call.1} parent=11 // pred_check_branch
          %329 = sbr.rel (%p327) target = $region48
        $region47: #{tpu_custom_call.1} parent=11 // pred_region
          %s331 = ssub.s32 16, 16
          %332 = vsyncadd [#allocation4], %s331
          %s334 = sshll.u32 %s10, 4
          %s335 = int_to_ptr.vmem [resolvable:$true] %s334
          %337 = dma.vmem_to_smem %s335, 16, [#allocation2], [#allocation4]
        $region48: #{tpu_custom_call.1} parent=11 // pred_fallthru
          _
      $region12: #{tpu_custom_call.1} parent=5 // pred_fallthru
        _
      %p338 = scmp.lt.s32.totalorder %s21, 2
      // Predicated region
      $region49: #{tpu_custom_call.1} parent=5 // pred_check
        %p339 = pneg %p338
      $region50: #{tpu_custom_call.1} parent=5 // pred_check_branch
        %341 = sbr.rel (%p339) target = $region52
      $region51: #{tpu_custom_call.1} parent=5 // pred_region
        // Predicated region
        $region53: #{tpu_custom_call.1} parent=51 // pred_check
          %p342 = pneg %p41
        $region54: #{tpu_custom_call.1} parent=51 // pred_check_branch
          %344 = sbr.rel (%p342) target = $region56
        $region55: #{tpu_custom_call.1} parent=51 // pred_region
          %p345 = scmp.lt.s32.totalorder %s21, 1
          %s346 = scalar_select %p345, %s21, 1
          %s347 = smul.addr %s346, 16
          %s348 = smul.addr %s347, 8
          %s349 = scalar_lea.vmem %s0, %s348
        $region56: #{tpu_custom_call.1} parent=51 // pred_fallthru
          _
        // Predicated region
        $region57: #{tpu_custom_call.1} parent=51 // pred_check
          %p350 = pneg %p67
        $region58: #{tpu_custom_call.1} parent=51 // pred_check_branch
          %352 = sbr.rel (%p350) target = $region60
        $region59: #{tpu_custom_call.1} parent=51 // pred_region
          %p353 = scmp.lt.s32.totalorder %s21, 1
          %s354 = scalar_select %p353, %s21, 1
          %s355 = smul.addr %s354, 16
          %s356 = smul.addr %s355, 4
          %s357 = scalar_lea.vmem %s1, %s356
        $region60: #{tpu_custom_call.1} parent=51 // pred_fallthru
          _
      $region52: #{tpu_custom_call.1} parent=5 // pred_fallthru
        _
      %p358 = scmp.le.s32.totalorder 1, %s21
      %p359 = scmp.lt.s32.totalorder %s21, 3
      %p360 = pnand %p358, %p359
      %p361 = pneg %p360
      // Predicated region
      $region61: #{tpu_custom_call.1} parent=5 // pred_check
        _
      $region62: #{tpu_custom_call.1} parent=5 // pred_check_branch
        %363 = sbr.rel (%p360) target = $region64
      $region63: #{tpu_custom_call.1} parent=5 // pred_region
        %s364 = ssub.s32 %s21, 1
        // Predicated region
        $region65: #{tpu_custom_call.1} parent=63 // pred_check
          %p365 = pneg %p262
        $region66: #{tpu_custom_call.1} parent=63 // pred_check_branch
          %367 = sbr.rel (%p365) target = $region68
        $region67: #{tpu_custom_call.1} parent=63 // pred_region
          %368 = dma.done [#allocation4], 16
        $region68: #{tpu_custom_call.1} parent=63 // pred_fallthru
          _
        %369 = sfence
        %p370 = scmp.lt.s32.totalorder %s26, 1
        %s371 = scalar_select %p370, %s26, 1
        %s372 = smul.addr %s371, 16
        %s373 = smul.addr %s372, 8
        %s374 = scalar_lea.vmem %s0, %s373
        %p375 = pneg %p47
        %p376 = pneg %p44
        %p377 = scmp.lt.s32.totalorder %s26, 1
        %s378 = scalar_select %p377, %s26, 1
        %s379 = smul.addr %s378, 16
        %s380 = smul.addr %s379, 4
        %s381 = scalar_lea.vmem %s1, %s380
        %p382 = pneg %p73
        %p383 = pneg %p70
        %p384 = pneg %p94
        %p385 = pneg %p91
        %p386 = pneg %p115
        %p387 = pneg %p112
        %p388 = pneg %p136
        %p389 = pneg %p133
        %p390 = pneg %p157
        %p391 = pneg %p154
        %p392 = pneg %p178
        %p393 = pneg %p175
        %p394 = pneg %p199
        %p395 = pneg %p196
        %p396 = pneg %p220
        %p397 = pneg %p217
        %p398 = pneg %p241
        %p399 = pneg %p238
        %p400 = pneg %p262
        %p401 = pneg %p259
        %p402 = pneg %p288
        %p403 = pneg %p285
        %s404 = sand.u32 %s275, 1
        %s405 = scalar_lea.sflag [#allocation3], %s404
        %s406 = sand.u32 %s275, 1
        %s407 = scalar_lea.vmem [#allocation5], %s406
        %p408 = scmp.lt.s32.totalorder %s26, 1
        %s409 = scalar_select %p408, %s26, 1
        %s410 = smul.addr %s409, 16
        %s411 = smul.addr %s410, 8
        %s412 = scalar_lea.vmem %s0, %s411
        %p413 = scmp.lt.s32.totalorder %s26, 1
        %s414 = scalar_select %p413, %s26, 1
        %s415 = smul.addr %s414, 16
        %s416 = smul.addr %s415, 4
        %s417 = scalar_lea.vmem %s1, %s416
        %v419 = vld [vmem:[%s417] sm:$0xf]
        %v420 = vld [vmem:[%s417 + $0x4] sm:$0xf]
        %v421 = vld [vmem:[%s417 + $0x8] sm:$0xf]
        %v422 = vld [vmem:[%s417 + $0xc] sm:$0xf]
        %v423 = vld [vmem:[%s417 + $0x10] sm:$0xf]
        %v424 = vld [vmem:[%s417 + $0x14] sm:$0xf]
        %v425 = vld [vmem:[%s417 + $0x18] sm:$0xf]
        %v426 = vld [vmem:[%s417 + $0x1c] sm:$0xf]
        %v427 = vld [vmem:[%s417 + $0x20] sm:$0xf]
        %v428 = vld [vmem:[%s417 + $0x24] sm:$0xf]
        %v429 = vld [vmem:[%s417 + $0x28] sm:$0xf]
        %v430 = vld [vmem:[%s417 + $0x2c] sm:$0xf]
        %v431 = vld [vmem:[%s417 + $0x30] sm:$0xf]
        %v432 = vld [vmem:[%s417 + $0x34] sm:$0xf]
        %v433 = vld [vmem:[%s417 + $0x38] sm:$0xf]
        %v434 = vld [vmem:[%s417 + $0x3c] sm:$0xf]
        %v435 = vunpack.c.l.bf16 %v419
        %v436 = vunpack.c.l.bf16 %v420
        %v437 = vunpack.c.l.bf16 %v421
        %v438 = vunpack.c.l.bf16 %v422
        %v439 = vunpack.c.l.bf16 %v423
        %v440 = vunpack.c.l.bf16 %v424
        %v441 = vunpack.c.l.bf16 %v425
        %v442 = vunpack.c.l.bf16 %v426
        %v443 = vunpack.c.l.bf16 %v427
        %v444 = vunpack.c.l.bf16 %v428
        %v445 = vunpack.c.l.bf16 %v429
        %v446 = vunpack.c.l.bf16 %v430
        %v447 = vunpack.c.l.bf16 %v431
        %v448 = vunpack.c.l.bf16 %v432
        %v449 = vunpack.c.l.bf16 %v433
        %v450 = vunpack.c.l.bf16 %v434
        %v451 = vld [vmem:[%s8] sm:$0x7]
        %v452 = vld [vmem:[%s9] sm:$0x7]
        %v453 = vlaneseq
        %v454 = vshrl.u32 %v453, 7
        %v455 = vadd.s32 %v454, 8
        %v456 = vadd.s32 %v454, 16
        %v457 = vadd.s32 %v454, 24
        %v458 = vadd.s32 %v454, 32
        %v459 = vadd.s32 %v454, 40
        %v460 = vadd.s32 %v454, 48
        %v461 = vadd.s32 %v454, 56
        %v462 = vadd.s32 %v454, 64
        %v463 = vadd.s32 %v454, 72
        %v464 = vadd.s32 %v454, 80
        %v465 = vadd.s32 %v454, 88
        %v466 = vadd.s32 %v454, 96
        %v467 = vadd.s32 %v454, 104
        %v468 = vadd.s32 %v454, 112
        %v469 = vadd.s32 %v454, 120
        %vm470 = vcmp.lt.s32.totalorder %v454, 64
        %vm471 = vcmp.lt.s32.totalorder %v455, 64
        %vm472 = vcmp.lt.s32.totalorder %v456, 64
        %vm473 = vcmp.lt.s32.totalorder %v457, 64
        %vm474 = vcmp.lt.s32.totalorder %v458, 64
        %vm475 = vcmp.lt.s32.totalorder %v459, 64
        %vm476 = vcmp.lt.s32.totalorder %v460, 64
        %vm477 = vcmp.lt.s32.totalorder %v461, 64
        %vm478 = vcmp.lt.s32.totalorder %v462, 64
        %vm479 = vcmp.lt.s32.totalorder %v463, 64
        %vm480 = vcmp.lt.s32.totalorder %v464, 64
        %vm481 = vcmp.lt.s32.totalorder %v465, 64
        %vm482 = vcmp.lt.s32.totalorder %v466, 64
        %vm483 = vcmp.lt.s32.totalorder %v467, 64
        %vm484 = vcmp.lt.s32.totalorder %v468, 64
        %vm485 = vcmp.lt.s32.totalorder %v469, 64
        %v486 = vsel %vm470, 1, 0
        %v487 = vsel %vm471, 1, 0
        %v488 = vsel %vm472, 1, 0
        %v489 = vsel %vm473, 1, 0
        %v490 = vsel %vm474, 1, 0
        %v491 = vsel %vm475, 1, 0
        %v492 = vsel %vm476, 1, 0
        %v493 = vsel %vm477, 1, 0
        %v494 = vsel %vm478, 1, 0
        %v495 = vsel %vm479, 1, 0
        %v496 = vsel %vm480, 1, 0
        %v497 = vsel %vm481, 1, 0
        %v498 = vsel %vm482, 1, 0
        %v499 = vsel %vm483, 1, 0
        %v500 = vsel %vm484, 1, 0
        %v501 = vsel %vm485, 1, 0
        %v502 = vcvt.s32.f32 %v486
        %v503 = vcvt.s32.f32 %v487
        %v504 = vcvt.s32.f32 %v488
        %v505 = vcvt.s32.f32 %v489
        %v506 = vcvt.s32.f32 %v490
        %v507 = vcvt.s32.f32 %v491
        %v508 = vcvt.s32.f32 %v492
        %v509 = vcvt.s32.f32 %v493
        %v510 = vcvt.s32.f32 %v494
        %v511 = vcvt.s32.f32 %v495
        %v512 = vcvt.s32.f32 %v496
        %v513 = vcvt.s32.f32 %v497
        %v514 = vcvt.s32.f32 %v498
        %v515 = vcvt.s32.f32 %v499
        %v516 = vcvt.s32.f32 %v500
        %v517 = vcvt.s32.f32 %v501
        %v518 = vld [vmem:[%s412] sm:$0xff]
        %v519 = vld [vmem:[%s412 + $0x8] sm:$0xff]
        %v520 = vld [vmem:[%s412 + $0x10] sm:$0xff]
        %v521 = vld [vmem:[%s412 + $0x18] sm:$0xff]
        %v522 = vld [vmem:[%s412 + $0x20] sm:$0xff]
        %v523 = vld [vmem:[%s412 + $0x28] sm:$0xff]
        %v524 = vld [vmem:[%s412 + $0x30] sm:$0xff]
        %v525 = vld [vmem:[%s412 + $0x38] sm:$0xff]
        %v526 = vld [vmem:[%s412 + $0x40] sm:$0xff]
        %v527 = vld [vmem:[%s412 + $0x48] sm:$0xff]
        %v528 = vld [vmem:[%s412 + $0x50] sm:$0xff]
        %v529 = vld [vmem:[%s412 + $0x58] sm:$0xff]
        %v530 = vld [vmem:[%s412 + $0x60] sm:$0xff]
        %v531 = vld [vmem:[%s412 + $0x68] sm:$0xff]
        %v532 = vld [vmem:[%s412 + $0x70] sm:$0xff]
        %v533 = vld [vmem:[%s412 + $0x78] sm:$0xff]
        %v534 = vpack.c.bf16 %v519, %v518
        %v535 = vpack.c.bf16 %v521, %v520
        %v536 = vpack.c.bf16 %v523, %v522
        %v537 = vpack.c.bf16 %v525, %v524
        %v538 = vpack.c.bf16 %v527, %v526
        %v539 = vpack.c.bf16 %v529, %v528
        %v540 = vpack.c.bf16 %v531, %v530
        %v541 = vpack.c.bf16 %v533, %v532
        %v542 = vld [vmem:[%s2] sm:$0xf]
        %v543 = vld [vmem:[%s2 + $0x4] sm:$0xf]
        %v546 = vunpack.c.l.b16 %v542
        %v547 = vunpack.c.l.b16 %v543
        %v548 = vpack.c.b16 %v547, %v546
        %vm550 = vcmask 130048
        %v552 = vsel %vm550, %v534, 0
        %v555 = vsel %vm550, %v535, 0
        %v558 = vsel %vm550, %v536, 0
        %v561 = vsel %vm550, %v537, 0
        %v564 = vsel %vm550, %v538, 0
        %v567 = vsel %vm550, %v539, 0
        %v570 = vsel %vm550, %v540, 0
        %v573 = vsel %vm550, %v541, 0
        %575 = vmatprep.subr.bf16.mxu0 0
        %576 = vmatpush1.bf16.msra.mxu0 %v548
        %577 = vmatprep.subr.bf16.mxu0 0
        %578 = vmatpush1.bf16.msra.mxu0 0
        %579 = vmatprep.subr.bf16.mxu0 0
        %580 = vmatpush1.bf16.msra.mxu0 0
        %581 = vmatprep.subr.bf16.mxu0 0
        %582 = vmatpush1.bf16.msra.mxu0 0
        %583 = vmatprep.subr.bf16.mxu0 0
        %584 = vmatpush1.bf16.msra.mxu0 0
        %585 = vmatprep.subr.bf16.mxu0 0
        %586 = vmatpush1.bf16.msra.mxu0 0
        %587 = vmatprep.subr.bf16.mxu0 0
        %588 = vmatpush1.bf16.msra.mxu0 0
        %589 = vmatprep.subr.bf16.mxu0 0
        %590 = vmatpush1.bf16.msra.mxu0 0
        %591 = vmatprep.subr.bf16.mxu0 0
        %592 = vmatpush1.bf16.msra.mxu0 0
        %593 = vmatprep.subr.bf16.mxu0 0
        %594 = vmatpush1.bf16.msra.mxu0 0
        %595 = vmatprep.subr.bf16.mxu0 0
        %596 = vmatpush1.bf16.msra.mxu0 0
        %597 = vmatprep.subr.bf16.mxu0 0
        %598 = vmatpush1.bf16.msra.mxu0 0
        %599 = vmatprep.subr.bf16.mxu0 0
        %600 = vmatpush1.bf16.msra.mxu0 0
        %601 = vmatprep.subr.bf16.mxu0 0
        %602 = vmatpush1.bf16.msra.mxu0 0
        %603 = vmatprep.subr.bf16.mxu0 0
        %604 = vmatpush1.bf16.msra.mxu0 0
        %605 = vmatprep.subr.bf16.mxu0 0
        %606 = vmatpush1.bf16.msra.mxu0 0
        %607 = vmatprep.mubr.bf16.mxu0 0
        %608 = vmatmul.mubr.bf16.gmra.mrb[0].mxu0 %v552
        %v609 = vpop.f32.mrb[0].mxu0
        %v610 = vadd.f32 0.0, %v609
        %v611 = vpop.f32.mrb[0].mxu0
        %v612 = vpop.f32.mrb[0].mxu0
        %v613 = vadd.f32 0.0, %v612
        %v614 = vpop.f32.mrb[0].mxu0
        %615 = vmatprep.mubr.bf16.mxu0 0
        %616 = vmatmul.mubr.bf16.gmra.mrb[0].mxu0 %v555
        %v617 = vpop.f32.mrb[0].mxu0
        %v618 = vadd.f32 0.0, %v617
        %v619 = vpop.f32.mrb[0].mxu0
        %v620 = vpop.f32.mrb[0].mxu0
        %v621 = vadd.f32 0.0, %v620
        %v622 = vpop.f32.mrb[0].mxu0
        %623 = vmatprep.mubr.bf16.mxu0 0
        %624 = vmatmul.mubr.bf16.gmra.mrb[0].mxu0 %v558
        %v625 = vpop.f32.mrb[0].mxu0
        %v626 = vadd.f32 0.0, %v625
        %v627 = vpop.f32.mrb[0].mxu0
        %v628 = vpop.f32.mrb[0].mxu0
        %v629 = vadd.f32 0.0, %v628
        %v630 = vpop.f32.mrb[0].mxu0
        %631 = vmatprep.mubr.bf16.mxu0 0
        %632 = vmatmul.mubr.bf16.gmra.mrb[0].mxu0 %v561
        %v633 = vpop.f32.mrb[0].mxu0
        %v634 = vadd.f32 0.0, %v633
        %v635 = vpop.f32.mrb[0].mxu0
        %v636 = vpop.f32.mrb[0].mxu0
        %v637 = vadd.f32 0.0, %v636
        %v638 = vpop.f32.mrb[0].mxu0
        %639 = vmatprep.mubr.bf16.mxu0 0
        %640 = vmatmul.mubr.bf16.gmra.mrb[0].mxu0 %v564
        %v641 = vpop.f32.mrb[0].mxu0
        %v642 = vadd.f32 0.0, %v641
        %v643 = vpop.f32.mrb[0].mxu0
        %v644 = vpop.f32.mrb[0].mxu0
        %v645 = vadd.f32 0.0, %v644
        %v646 = vpop.f32.mrb[0].mxu0
        %647 = vmatprep.mubr.bf16.mxu0 0
        %648 = vmatmul.mubr.bf16.gmra.mrb[0].mxu0 %v567
        %v649 = vpop.f32.mrb[0].mxu0
        %v650 = vadd.f32 0.0, %v649
        %v651 = vpop.f32.mrb[0].mxu0
        %v652 = vpop.f32.mrb[0].mxu0
        %v653 = vadd.f32 0.0, %v652
        %v654 = vpop.f32.mrb[0].mxu0
        %655 = vmatprep.mubr.bf16.mxu0 0
        %656 = vmatmul.mubr.bf16.gmra.mrb[0].mxu0 %v570
        %v657 = vpop.f32.mrb[0].mxu0
        %v658 = vadd.f32 0.0, %v657
        %v659 = vpop.f32.mrb[0].mxu0
        %v660 = vpop.f32.mrb[0].mxu0
        %v661 = vadd.f32 0.0, %v660
        %v662 = vpop.f32.mrb[0].mxu0
        %663 = vmatprep.mubr.bf16.mxu0 0
        %664 = vmatmul.mubr.bf16.gmra.mrb[0].mxu0 %v573
        %v665 = vpop.f32.mrb[0].mxu0
        %v666 = vadd.f32 0.0, %v665
        %v667 = vpop.f32.mrb[0].mxu0
        %v668 = vpop.f32.mrb[0].mxu0
        %v669 = vadd.f32 0.0, %v668
        %v670 = vpop.f32.mrb[0].mxu0
        %671 = vdwg.mxu0
        %v672 = vld [vmem:[%s3] sm:$0x1]
        %v674 = vsel %vm550, %v672, 0
        %676 = vmatprep.subr.bf16.mxu0 0
        %677 = vmatpush1.bf16.xpose.msra.mxu0 %v552
        %678 = vmatprep.subr.bf16.mxu0 0
        %679 = vmatpush1.bf16.xpose.msra.mxu0 %v555
        %680 = vmatprep.subr.bf16.mxu0 0
        %681 = vmatpush1.bf16.xpose.msra.mxu0 %v558
        %682 = vmatprep.subr.bf16.mxu0 0
        %683 = vmatpush1.bf16.xpose.msra.mxu0 %v561
        %684 = vmatprep.subr.bf16.mxu0 0
        %685 = vmatpush1.bf16.xpose.msra.mxu0 %v564
        %686 = vmatprep.subr.bf16.mxu0 0
        %687 = vmatpush1.bf16.xpose.msra.mxu0 %v567
        %688 = vmatprep.subr.bf16.mxu0 0
        %689 = vmatpush1.bf16.xpose.msra.mxu0 %v570
        %690 = vmatprep.subr.bf16.mxu0 0
        %691 = vmatpush1.bf16.xpose.msra.mxu0 %v573
        %692 = vmatprep.subr.bf16.mxu0 0
        %693 = vmatpush1.bf16.xpose.msra.mxu0 0
        %694 = vmatprep.subr.bf16.mxu0 0
        %695 = vmatpush1.bf16.xpose.msra.mxu0 0
        %696 = vmatprep.subr.bf16.mxu0 0
        %697 = vmatpush1.bf16.xpose.msra.mxu0 0
        %698 = vmatprep.subr.bf16.mxu0 0
        %699 = vmatpush1.bf16.xpose.msra.mxu0 0
        %700 = vmatprep.subr.bf16.mxu0 0
        %701 = vmatpush1.bf16.xpose.msra.mxu0 0
        %702 = vmatprep.subr.bf16.mxu0 0
        %703 = vmatpush1.bf16.xpose.msra.mxu0 0
        %704 = vmatprep.subr.bf16.mxu0 0
        %705 = vmatpush1.bf16.xpose.msra.mxu0 0
        %706 = vmatprep.subr.bf16.mxu0 0
        %707 = vmatpush1.bf16.xpose.msra.mxu0 0
        %708 = vmatprep.mubr.bf16.mxu0 0
        %709 = vmatmul.mubr.bf16.gmra.mrb[0].mxu0 %v674
        %v710 = vpop.f32.mrb[0].mxu0
        %v711 = vadd.f32 0.0, %v710
        %v712 = vpop.f32.mrb[0].mxu0
        %v713 = vpop.f32.mrb[0].mxu0
        %v714 = vpop.f32.mrb[0].mxu0
        %715 = vdwg.mxu0
        %v716 = vpack.c.bf16 %v613, %v610
        %v717 = vpack.c.bf16 %v621, %v618
        %v718 = vpack.c.bf16 %v629, %v626
        %v719 = vpack.c.bf16 %v637, %v634
        %v720 = vpack.c.bf16 %v645, %v642
        %v721 = vpack.c.bf16 %v653, %v650
        %v722 = vpack.c.bf16 %v661, %v658
        %v723 = vpack.c.bf16 %v669, %v666
        %725 = vset.pattern.permute.xlu0 64
        %726 = vperm.xlu0 %725, %v610
        %v727 = vpop.permute.xlu0 %726
        %730 = vset.pattern.permute.xlu0 64
        %731 = vperm.xlu0 %730, %v613
        %v732 = vpop.permute.xlu0 %731
        %735 = vset.pattern.permute.xlu0 64
        %736 = vperm.xlu0 %735, %v618
        %v737 = vpop.permute.xlu0 %736
        %740 = vset.pattern.permute.xlu0 64
        %741 = vperm.xlu0 %740, %v621
        %v742 = vpop.permute.xlu0 %741
        %745 = vset.pattern.permute.xlu0 64
        %746 = vperm.xlu0 %745, %v626
        %v747 = vpop.permute.xlu0 %746
        %750 = vset.pattern.permute.xlu0 64
        %751 = vperm.xlu0 %750, %v629
        %v752 = vpop.permute.xlu0 %751
        %755 = vset.pattern.permute.xlu0 64
        %756 = vperm.xlu0 %755, %v634
        %v757 = vpop.permute.xlu0 %756
        %760 = vset.pattern.permute.xlu0 64
        %761 = vperm.xlu0 %760, %v637
        %v762 = vpop.permute.xlu0 %761
        %765 = vset.pattern.permute.xlu0 64
        %766 = vperm.xlu0 %765, %v642
        %v767 = vpop.permute.xlu0 %766
        %770 = vset.pattern.permute.xlu0 64
        %771 = vperm.xlu0 %770, %v645
        %v772 = vpop.permute.xlu0 %771
        %775 = vset.pattern.permute.xlu0 64
        %776 = vperm.xlu0 %775, %v650
        %v777 = vpop.permute.xlu0 %776
        %780 = vset.pattern.permute.xlu0 64
        %781 = vperm.xlu0 %780, %v653
        %v782 = vpop.permute.xlu0 %781
        %785 = vset.pattern.permute.xlu0 64
        %786 = vperm.xlu0 %785, %v658
        %v787 = vpop.permute.xlu0 %786
        %790 = vset.pattern.permute.xlu0 64
        %791 = vperm.xlu0 %790, %v661
        %v792 = vpop.permute.xlu0 %791
        %795 = vset.pattern.permute.xlu0 64
        %796 = vperm.xlu0 %795, %v666
        %v797 = vpop.permute.xlu0 %796
        %800 = vset.pattern.permute.xlu0 64
        %801 = vperm.xlu0 %800, %v669
        %v802 = vpop.permute.xlu0 %801
        %v804 = vlaneseq
        %v805 = vshrl.u32 %v804, 7
        %v806 = vsub.s32 0, %v805
        %v807 = vrot.slane %v711, %v806
        %v808 = vadd.f32 %v727, %v807
        %v809 = vadd.f32 %v732, %v807
        %v810 = vadd.f32 %v737, %v807
        %v811 = vadd.f32 %v742, %v807
        %v812 = vadd.f32 %v747, %v807
        %v813 = vadd.f32 %v752, %v807
        %v814 = vadd.f32 %v757, %v807
        %v815 = vadd.f32 %v762, %v807
        %v816 = vadd.f32 %v767, %v807
        %v817 = vadd.f32 %v772, %v807
        %v818 = vadd.f32 %v777, %v807
        %v819 = vadd.f32 %v782, %v807
        %v820 = vadd.f32 %v787, %v807
        %v821 = vadd.f32 %v792, %v807
        %v822 = vadd.f32 %v797, %v807
        %v823 = vadd.f32 %v802, %v807
        %vm824 = vcmp.gt.f32.partialorder %v808, 0.0
        %vm825 = vcmp.gt.f32.partialorder %v809, 0.0
        %vm826 = vcmp.gt.f32.partialorder %v810, 0.0
        %vm827 = vcmp.gt.f32.partialorder %v811, 0.0
        %vm828 = vcmp.gt.f32.partialorder %v812, 0.0
        %vm829 = vcmp.gt.f32.partialorder %v813, 0.0
        %vm830 = vcmp.gt.f32.partialorder %v814, 0.0
        %vm831 = vcmp.gt.f32.partialorder %v815, 0.0
        %vm832 = vcmp.gt.f32.partialorder %v816, 0.0
        %vm833 = vcmp.gt.f32.partialorder %v817, 0.0
        %vm834 = vcmp.gt.f32.partialorder %v818, 0.0
        %vm835 = vcmp.gt.f32.partialorder %v819, 0.0
        %vm836 = vcmp.gt.f32.partialorder %v820, 0.0
        %vm837 = vcmp.gt.f32.partialorder %v821, 0.0
        %vm838 = vcmp.gt.f32.partialorder %v822, 0.0
        %vm839 = vcmp.gt.f32.partialorder %v823, 0.0
        %v840 = vmul.f32 %v808, 0.2
        %v841 = vmul.f32 %v809, 0.2
        %v842 = vmul.f32 %v810, 0.2
        %v843 = vmul.f32 %v811, 0.2
        %v844 = vmul.f32 %v812, 0.2
        %v845 = vmul.f32 %v813, 0.2
        %v846 = vmul.f32 %v814, 0.2
        %v847 = vmul.f32 %v815, 0.2
        %v848 = vmul.f32 %v816, 0.2
        %v849 = vmul.f32 %v817, 0.2
        %v850 = vmul.f32 %v818, 0.2
        %v851 = vmul.f32 %v819, 0.2
        %v852 = vmul.f32 %v820, 0.2
        %v853 = vmul.f32 %v821, 0.2
        %v854 = vmul.f32 %v822, 0.2
        %v855 = vmul.f32 %v823, 0.2
        %v856 = vsel %vm824, %v808, %v840
        %v857 = vsel %vm825, %v809, %v841
        %v858 = vsel %vm826, %v810, %v842
        %v859 = vsel %vm827, %v811, %v843
        %v860 = vsel %vm828, %v812, %v844
        %v861 = vsel %vm829, %v813, %v845
        %v862 = vsel %vm830, %v814, %v846
        %v863 = vsel %vm831, %v815, %v847
        %v864 = vsel %vm832, %v816, %v848
        %v865 = vsel %vm833, %v817, %v849
        %v866 = vsel %vm834, %v818, %v850
        %v867 = vsel %vm835, %v819, %v851
        %v868 = vsel %vm836, %v820, %v852
        %v869 = vsel %vm837, %v821, %v853
        %v870 = vsel %vm838, %v822, %v854
        %v871 = vsel %vm839, %v823, %v855
        %v872 = vadd.f32 %v856, %v435
        %v873 = vadd.f32 %v857, %v436
        %v874 = vadd.f32 %v858, %v437
        %v875 = vadd.f32 %v859, %v438
        %v876 = vadd.f32 %v860, %v439
        %v877 = vadd.f32 %v861, %v440
        %v878 = vadd.f32 %v862, %v441
        %v879 = vadd.f32 %v863, %v442
        %v880 = vadd.f32 %v864, %v443
        %v881 = vadd.f32 %v865, %v444
        %v882 = vadd.f32 %v866, %v445
        %v883 = vadd.f32 %v867, %v446
        %v884 = vadd.f32 %v868, %v447
        %v885 = vadd.f32 %v869, %v448
        %v886 = vadd.f32 %v870, %v449
        %v887 = vadd.f32 %v871, %v450
        %888 = vmax.xlane.f32.xlu0 %v872
        %v889 = vpop.xlane.xlu0 %888
        %890 = vmax.xlane.f32.xlu0 %v873
        %v891 = vpop.xlane.xlu0 %890
        %892 = vmax.xlane.f32.xlu0 %v874
        %v893 = vpop.xlane.xlu0 %892
        %894 = vmax.xlane.f32.xlu0 %v875
        %v895 = vpop.xlane.xlu0 %894
        %896 = vmax.xlane.f32.xlu0 %v876
        %v897 = vpop.xlane.xlu0 %896
        %898 = vmax.xlane.f32.xlu0 %v877
        %v899 = vpop.xlane.xlu0 %898
        %900 = vmax.xlane.f32.xlu0 %v878
        %v901 = vpop.xlane.xlu0 %900
        %902 = vmax.xlane.f32.xlu0 %v879
        %v903 = vpop.xlane.xlu0 %902
        %904 = vmax.xlane.f32.xlu0 %v880
        %v905 = vpop.xlane.xlu0 %904
        %906 = vmax.xlane.f32.xlu0 %v881
        %v907 = vpop.xlane.xlu0 %906
        %908 = vmax.xlane.f32.xlu0 %v882
        %v909 = vpop.xlane.xlu0 %908
        %910 = vmax.xlane.f32.xlu0 %v883
        %v911 = vpop.xlane.xlu0 %910
        %912 = vmax.xlane.f32.xlu0 %v884
        %v913 = vpop.xlane.xlu0 %912
        %914 = vmax.xlane.f32.xlu0 %v885
        %v915 = vpop.xlane.xlu0 %914
        %916 = vmax.xlane.f32.xlu0 %v886
        %v917 = vpop.xlane.xlu0 %916
        %918 = vmax.xlane.f32.xlu0 %v887
        %v919 = vpop.xlane.xlu0 %918
        %v920 = vsub.f32 %v872, %v889
        %v921 = vsub.f32 %v873, %v891
        %v922 = vsub.f32 %v874, %v893
        %v923 = vsub.f32 %v875, %v895
        %v924 = vsub.f32 %v876, %v897
        %v925 = vsub.f32 %v877, %v899
        %v926 = vsub.f32 %v878, %v901
        %v927 = vsub.f32 %v879, %v903
        %v928 = vsub.f32 %v880, %v905
        %v929 = vsub.f32 %v881, %v907
        %v930 = vsub.f32 %v882, %v909
        %v931 = vsub.f32 %v883, %v911
        %v932 = vsub.f32 %v884, %v913
        %v933 = vsub.f32 %v885, %v915
        %v934 = vsub.f32 %v886, %v917
        %v935 = vsub.f32 %v887, %v919
        %v936 = vmul.f32 %v920, 1.442695
        %v937 = vpow.pop %v936
        %v938 = vmul.f32 %v921, 1.442695
        %v939 = vpow.pop %v938
        %v940 = vmul.f32 %v922, 1.442695
        %v941 = vpow.pop %v940
        %v942 = vmul.f32 %v923, 1.442695
        %v943 = vpow.pop %v942
        %v944 = vmul.f32 %v924, 1.442695
        %v945 = vpow.pop %v944
        %v946 = vmul.f32 %v925, 1.442695
        %v947 = vpow.pop %v946
        %v948 = vmul.f32 %v926, 1.442695
        %v949 = vpow.pop %v948
        %v950 = vmul.f32 %v927, 1.442695
        %v951 = vpow.pop %v950
        %v952 = vmul.f32 %v928, 1.442695
        %v953 = vpow.pop %v952
        %v954 = vmul.f32 %v929, 1.442695
        %v955 = vpow.pop %v954
        %v956 = vmul.f32 %v930, 1.442695
        %v957 = vpow.pop %v956
        %v958 = vmul.f32 %v931, 1.442695
        %v959 = vpow.pop %v958
        %v960 = vmul.f32 %v932, 1.442695
        %v961 = vpow.pop %v960
        %v962 = vmul.f32 %v933, 1.442695
        %v963 = vpow.pop %v962
        %v964 = vmul.f32 %v934, 1.442695
        %v965 = vpow.pop %v964
        %v966 = vmul.f32 %v935, 1.442695
        %v967 = vpow.pop %v966
        %968 = vadd.xlane.f32.xlu0 %v937
        %v969 = vpop.xlane.xlu0 %968
        %970 = vadd.xlane.f32.xlu0 %v939
        %v971 = vpop.xlane.xlu0 %970
        %972 = vadd.xlane.f32.xlu0 %v941
        %v973 = vpop.xlane.xlu0 %972
        %974 = vadd.xlane.f32.xlu0 %v943
        %v975 = vpop.xlane.xlu0 %974
        %976 = vadd.xlane.f32.xlu0 %v945
        %v977 = vpop.xlane.xlu0 %976
        %978 = vadd.xlane.f32.xlu0 %v947
        %v979 = vpop.xlane.xlu0 %978
        %980 = vadd.xlane.f32.xlu0 %v949
        %v981 = vpop.xlane.xlu0 %980
        %982 = vadd.xlane.f32.xlu0 %v951
        %v983 = vpop.xlane.xlu0 %982
        %984 = vadd.xlane.f32.xlu0 %v953
        %v985 = vpop.xlane.xlu0 %984
        %986 = vadd.xlane.f32.xlu0 %v955
        %v987 = vpop.xlane.xlu0 %986
        %988 = vadd.xlane.f32.xlu0 %v957
        %v989 = vpop.xlane.xlu0 %988
        %990 = vadd.xlane.f32.xlu0 %v959
        %v991 = vpop.xlane.xlu0 %990
        %992 = vadd.xlane.f32.xlu0 %v961
        %v993 = vpop.xlane.xlu0 %992
        %994 = vadd.xlane.f32.xlu0 %v963
        %v995 = vpop.xlane.xlu0 %994
        %996 = vadd.xlane.f32.xlu0 %v965
        %v997 = vpop.xlane.xlu0 %996
        %998 = vadd.xlane.f32.xlu0 %v967
        %v999 = vpop.xlane.xlu0 %998
        %v1000 = vpack.c.bf16 %v939, %v937
        %v1001 = vpack.c.bf16 %v943, %v941
        %v1002 = vpack.c.bf16 %v947, %v945
        %v1003 = vpack.c.bf16 %v951, %v949
        %v1004 = vpack.c.bf16 %v955, %v953
        %v1005 = vpack.c.bf16 %v959, %v957
        %v1006 = vpack.c.bf16 %v963, %v961
        %v1007 = vpack.c.bf16 %v967, %v965
        %1008 = vmatprep.subr.bf16.mxu0 0
        %1009 = vmatpush1.bf16.msra.mxu0 %v716
        %1010 = vmatprep.subr.bf16.mxu0 0
        %1011 = vmatpush1.bf16.msra.mxu0 %v717
        %1012 = vmatprep.subr.bf16.mxu0 0
        %1013 = vmatpush1.bf16.msra.mxu0 %v718
        %1014 = vmatprep.subr.bf16.mxu0 0
        %1015 = vmatpush1.bf16.msra.mxu0 %v719
        %1016 = vmatprep.subr.bf16.mxu0 0
        %1017 = vmatpush1.bf16.msra.mxu0 %v720
        %1018 = vmatprep.subr.bf16.mxu0 0
        %1019 = vmatpush1.bf16.msra.mxu0 %v721
        %1020 = vmatprep.subr.bf16.mxu0 0
        %1021 = vmatpush1.bf16.msra.mxu0 %v722
        %1022 = vmatprep.subr.bf16.mxu0 0
        %1023 = vmatpush1.bf16.msra.mxu0 %v723
        %1024 = vmatprep.subr.bf16.mxu0 0
        %1025 = vmatpush1.bf16.msra.mxu0 0
        %1026 = vmatprep.subr.bf16.mxu0 0
        %1027 = vmatpush1.bf16.msra.mxu0 0
        %1028 = vmatprep.subr.bf16.mxu0 0
        %1029 = vmatpush1.bf16.msra.mxu0 0
        %1030 = vmatprep.subr.bf16.mxu0 0
        %1031 = vmatpush1.bf16.msra.mxu0 0
        %1032 = vmatprep.subr.bf16.mxu0 0
        %1033 = vmatpush1.bf16.msra.mxu0 0
        %1034 = vmatprep.subr.bf16.mxu0 0
        %1035 = vmatpush1.bf16.msra.mxu0 0
        %1036 = vmatprep.subr.bf16.mxu0 0
        %1037 = vmatpush1.bf16.msra.mxu0 0
        %1038 = vmatprep.subr.bf16.mxu0 0
        %1039 = vmatpush1.bf16.msra.mxu0 0
        %1040 = vmatprep.mubr.bf16.mxu0 0
        %1041 = vmatmul.mubr.bf16.gmra.mrb[0].mxu0 %v1000
        %v1042 = vpop.f32.mrb[0].mxu0
        %v1043 = vadd.f32 0.0, %v1042
        %v1044 = vpop.f32.mrb[0].mxu0
        %v1045 = vpop.f32.mrb[0].mxu0
        %v1046 = vadd.f32 0.0, %v1045
        %v1047 = vpop.f32.mrb[0].mxu0
        %1048 = vmatprep.mubr.bf16.mxu0 0
        %1049 = vmatmul.mubr.bf16.gmra.mrb[0].mxu0 %v1001
        %v1050 = vpop.f32.mrb[0].mxu0
        %v1051 = vadd.f32 0.0, %v1050
        %v1052 = vpop.f32.mrb[0].mxu0
        %v1053 = vpop.f32.mrb[0].mxu0
        %v1054 = vadd.f32 0.0, %v1053
        %v1055 = vpop.f32.mrb[0].mxu0
        %1056 = vmatprep.mubr.bf16.mxu0 0
        %1057 = vmatmul.mubr.bf16.gmra.mrb[0].mxu0 %v1002
        %v1058 = vpop.f32.mrb[0].mxu0
        %v1059 = vadd.f32 0.0, %v1058
        %v1060 = vpop.f32.mrb[0].mxu0
        %v1061 = vpop.f32.mrb[0].mxu0
        %v1062 = vadd.f32 0.0, %v1061
        %v1063 = vpop.f32.mrb[0].mxu0
        %1064 = vmatprep.mubr.bf16.mxu0 0
        %1065 = vmatmul.mubr.bf16.gmra.mrb[0].mxu0 %v1003
        %v1066 = vpop.f32.mrb[0].mxu0
        %v1067 = vadd.f32 0.0, %v1066
        %v1068 = vpop.f32.mrb[0].mxu0
        %v1069 = vpop.f32.mrb[0].mxu0
        %v1070 = vadd.f32 0.0, %v1069
        %v1071 = vpop.f32.mrb[0].mxu0
        %1072 = vmatprep.mubr.bf16.mxu0 0
        %1073 = vmatmul.mubr.bf16.gmra.mrb[0].mxu0 %v1004
        %v1074 = vpop.f32.mrb[0].mxu0
        %v1075 = vadd.f32 0.0, %v1074
        %v1076 = vpop.f32.mrb[0].mxu0
        %v1077 = vpop.f32.mrb[0].mxu0
        %v1078 = vadd.f32 0.0, %v1077
        %v1079 = vpop.f32.mrb[0].mxu0
        %1080 = vmatprep.mubr.bf16.mxu0 0
        %1081 = vmatmul.mubr.bf16.gmra.mrb[0].mxu0 %v1005
        %v1082 = vpop.f32.mrb[0].mxu0
        %v1083 = vadd.f32 0.0, %v1082
        %v1084 = vpop.f32.mrb[0].mxu0
        %v1085 = vpop.f32.mrb[0].mxu0
        %v1086 = vadd.f32 0.0, %v1085
        %v1087 = vpop.f32.mrb[0].mxu0
        %1088 = vmatprep.mubr.bf16.mxu0 0
        %1089 = vmatmul.mubr.bf16.gmra.mrb[0].mxu0 %v1006
        %v1090 = vpop.f32.mrb[0].mxu0
        %v1091 = vadd.f32 0.0, %v1090
        %v1092 = vpop.f32.mrb[0].mxu0
        %v1093 = vpop.f32.mrb[0].mxu0
        %v1094 = vadd.f32 0.0, %v1093
        %v1095 = vpop.f32.mrb[0].mxu0
        %1096 = vmatprep.mubr.bf16.mxu0 0
        %1097 = vmatmul.mubr.bf16.gmra.mrb[0].mxu0 %v1007
        %v1098 = vpop.f32.mrb[0].mxu0
        %v1099 = vadd.f32 0.0, %v1098
        %v1100 = vpop.f32.mrb[0].mxu0
        %v1101 = vpop.f32.mrb[0].mxu0
        %v1102 = vadd.f32 0.0, %v1101
        %v1103 = vpop.f32.mrb[0].mxu0
        %1104 = vdwg.mxu0
        %v1105 = vrcp.pop %v969
        %v1106 = vrcp.pop %v971
        %v1107 = vrcp.pop %v973
        %v1108 = vrcp.pop %v975
        %v1109 = vrcp.pop %v977
        %v1110 = vrcp.pop %v979
        %v1111 = vrcp.pop %v981
        %v1112 = vrcp.pop %v983
        %v1113 = vrcp.pop %v985
        %v1114 = vrcp.pop %v987
        %v1115 = vrcp.pop %v989
        %v1116 = vrcp.pop %v991
        %v1117 = vrcp.pop %v993
        %v1118 = vrcp.pop %v995
        %v1119 = vrcp.pop %v997
        %v1120 = vrcp.pop %v999
        %v1121 = vmul.f32 %v1043, %v1105
        %v1122 = vmul.f32 %v1046, %v1106
        %v1123 = vmul.f32 %v1051, %v1107
        %v1124 = vmul.f32 %v1054, %v1108
        %v1125 = vmul.f32 %v1059, %v1109
        %v1126 = vmul.f32 %v1062, %v1110
        %v1127 = vmul.f32 %v1067, %v1111
        %v1128 = vmul.f32 %v1070, %v1112
        %v1129 = vmul.f32 %v1075, %v1113
        %v1130 = vmul.f32 %v1078, %v1114
        %v1131 = vmul.f32 %v1083, %v1115
        %v1132 = vmul.f32 %v1086, %v1116
        %v1133 = vmul.f32 %v1091, %v1117
        %v1134 = vmul.f32 %v1094, %v1118
        %v1135 = vmul.f32 %v1099, %v1119
        %v1136 = vmul.f32 %v1102, %v1120
        %1137 = vrot.lane.b32.xlu0 %v610, 96
        %v1138 = vpop.permute.xlu0 %1137
        %1139 = vrot.lane.b32.xlu0 %v613, 96
        %v1140 = vpop.permute.xlu0 %1139
        %1141 = vrot.lane.b32.xlu0 %v618, 96
        %v1142 = vpop.permute.xlu0 %1141
        %1143 = vrot.lane.b32.xlu0 %v621, 96
        %v1144 = vpop.permute.xlu0 %1143
        %1145 = vrot.lane.b32.xlu0 %v626, 96
        %v1146 = vpop.permute.xlu0 %1145
        %1147 = vrot.lane.b32.xlu0 %v629, 96
        %v1148 = vpop.permute.xlu0 %1147
        %1149 = vrot.lane.b32.xlu0 %v634, 96
        %v1150 = vpop.permute.xlu0 %1149
        %1151 = vrot.lane.b32.xlu0 %v637, 96
        %v1152 = vpop.permute.xlu0 %1151
        %1153 = vrot.lane.b32.xlu0 %v642, 96
        %v1154 = vpop.permute.xlu0 %1153
        %1155 = vrot.lane.b32.xlu0 %v645, 96
        %v1156 = vpop.permute.xlu0 %1155
        %1157 = vrot.lane.b32.xlu0 %v650, 96
        %v1158 = vpop.permute.xlu0 %1157
        %1159 = vrot.lane.b32.xlu0 %v653, 96
        %v1160 = vpop.permute.xlu0 %1159
        %1161 = vrot.lane.b32.xlu0 %v658, 96
        %v1162 = vpop.permute.xlu0 %1161
        %1163 = vrot.lane.b32.xlu0 %v661, 96
        %v1164 = vpop.permute.xlu0 %1163
        %1165 = vrot.lane.b32.xlu0 %v666, 96
        %v1166 = vpop.permute.xlu0 %1165
        %1167 = vrot.lane.b32.xlu0 %v669, 96
        %v1168 = vpop.permute.xlu0 %1167
        %v1185 = vadd.f32 %v1121, %v1138
        %v1186 = vadd.f32 %v1122, %v1140
        %v1187 = vadd.f32 %v1123, %v1142
        %v1188 = vadd.f32 %v1124, %v1144
        %v1189 = vadd.f32 %v1125, %v1146
        %v1190 = vadd.f32 %v1126, %v1148
        %v1191 = vadd.f32 %v1127, %v1150
        %v1192 = vadd.f32 %v1128, %v1152
        %v1193 = vadd.f32 %v1129, %v1154
        %v1194 = vadd.f32 %v1130, %v1156
        %v1195 = vadd.f32 %v1131, %v1158
        %v1196 = vadd.f32 %v1132, %v1160
        %v1197 = vadd.f32 %v1133, %v1162
        %v1198 = vadd.f32 %v1134, %v1164
        %v1199 = vadd.f32 %v1135, %v1166
        %v1200 = vadd.f32 %v1136, %v1168
        %1201 = vset.pattern.permute.xlu0 65
        %1202 = vperm.xlu0 %1201, %v610
        %v1203 = vpop.permute.xlu0 %1202
        %1205 = vset.pattern.permute.xlu0 65
        %1206 = vperm.xlu0 %1205, %v613
        %v1207 = vpop.permute.xlu0 %1206
        %1209 = vset.pattern.permute.xlu0 65
        %1210 = vperm.xlu0 %1209, %v618
        %v1211 = vpop.permute.xlu0 %1210
        %1213 = vset.pattern.permute.xlu0 65
        %1214 = vperm.xlu0 %1213, %v621
        %v1215 = vpop.permute.xlu0 %1214
        %1217 = vset.pattern.permute.xlu0 65
        %1218 = vperm.xlu0 %1217, %v626
        %v1219 = vpop.permute.xlu0 %1218
        %1221 = vset.pattern.permute.xlu0 65
        %1222 = vperm.xlu0 %1221, %v629
        %v1223 = vpop.permute.xlu0 %1222
        %1225 = vset.pattern.permute.xlu0 65
        %1226 = vperm.xlu0 %1225, %v634
        %v1227 = vpop.permute.xlu0 %1226
        %1229 = vset.pattern.permute.xlu0 65
        %1230 = vperm.xlu0 %1229, %v637
        %v1231 = vpop.permute.xlu0 %1230
        %1233 = vset.pattern.permute.xlu0 65
        %1234 = vperm.xlu0 %1233, %v642
        %v1235 = vpop.permute.xlu0 %1234
        %1237 = vset.pattern.permute.xlu0 65
        %1238 = vperm.xlu0 %1237, %v645
        %v1239 = vpop.permute.xlu0 %1238
        %1241 = vset.pattern.permute.xlu0 65
        %1242 = vperm.xlu0 %1241, %v650
        %v1243 = vpop.permute.xlu0 %1242
        %1245 = vset.pattern.permute.xlu0 65
        %1246 = vperm.xlu0 %1245, %v653
        %v1247 = vpop.permute.xlu0 %1246
        %1249 = vset.pattern.permute.xlu0 65
        %1250 = vperm.xlu0 %1249, %v658
        %v1251 = vpop.permute.xlu0 %1250
        %1253 = vset.pattern.permute.xlu0 65
        %1254 = vperm.xlu0 %1253, %v661
        %v1255 = vpop.permute.xlu0 %1254
        %1257 = vset.pattern.permute.xlu0 65
        %1258 = vperm.xlu0 %1257, %v666
        %v1259 = vpop.permute.xlu0 %1258
        %1261 = vset.pattern.permute.xlu0 65
        %1262 = vperm.xlu0 %1261, %v669
        %v1263 = vpop.permute.xlu0 %1262
        %v1265 = vlaneseq
        %v1266 = vshrl.u32 %v1265, 7
        %v1267 = vsub.s32 1, %v1266
        %v1268 = vrot.slane %v711, %v1267
        %v1269 = vadd.f32 %v1203, %v1268
        %v1270 = vadd.f32 %v1207, %v1268
        %v1271 = vadd.f32 %v1211, %v1268
        %v1272 = vadd.f32 %v1215, %v1268
        %v1273 = vadd.f32 %v1219, %v1268
        %v1274 = vadd.f32 %v1223, %v1268
        %v1275 = vadd.f32 %v1227, %v1268
        %v1276 = vadd.f32 %v1231, %v1268
        %v1277 = vadd.f32 %v1235, %v1268
        %v1278 = vadd.f32 %v1239, %v1268
        %v1279 = vadd.f32 %v1243, %v1268
        %v1280 = vadd.f32 %v1247, %v1268
        %v1281 = vadd.f32 %v1251, %v1268
        %v1282 = vadd.f32 %v1255, %v1268
        %v1283 = vadd.f32 %v1259, %v1268
        %v1284 = vadd.f32 %v1263, %v1268
        %vm1285 = vcmp.gt.f32.partialorder %v1269, 0.0
        %vm1286 = vcmp.gt.f32.partialorder %v1270, 0.0
        %vm1287 = vcmp.gt.f32.partialorder %v1271, 0.0
        %vm1288 = vcmp.gt.f32.partialorder %v1272, 0.0
        %vm1289 = vcmp.gt.f32.partialorder %v1273, 0.0
        %vm1290 = vcmp.gt.f32.partialorder %v1274, 0.0
        %vm1291 = vcmp.gt.f32.partialorder %v1275, 0.0
        %vm1292 = vcmp.gt.f32.partialorder %v1276, 0.0
        %vm1293 = vcmp.gt.f32.partialorder %v1277, 0.0
        %vm1294 = vcmp.gt.f32.partialorder %v1278, 0.0
        %vm1295 = vcmp.gt.f32.partialorder %v1279, 0.0
        %vm1296 = vcmp.gt.f32.partialorder %v1280, 0.0
        %vm1297 = vcmp.gt.f32.partialorder %v1281, 0.0
        %vm1298 = vcmp.gt.f32.partialorder %v1282, 0.0
        %vm1299 = vcmp.gt.f32.partialorder %v1283, 0.0
        %vm1300 = vcmp.gt.f32.partialorder %v1284, 0.0
        %v1301 = vmul.f32 %v1269, 0.2
        %v1302 = vmul.f32 %v1270, 0.2
        %v1303 = vmul.f32 %v1271, 0.2
        %v1304 = vmul.f32 %v1272, 0.2
        %v1305 = vmul.f32 %v1273, 0.2
        %v1306 = vmul.f32 %v1274, 0.2
        %v1307 = vmul.f32 %v1275, 0.2
        %v1308 = vmul.f32 %v1276, 0.2
        %v1309 = vmul.f32 %v1277, 0.2
        %v1310 = vmul.f32 %v1278, 0.2
        %v1311 = vmul.f32 %v1279, 0.2
        %v1312 = vmul.f32 %v1280, 0.2
        %v1313 = vmul.f32 %v1281, 0.2
        %v1314 = vmul.f32 %v1282, 0.2
        %v1315 = vmul.f32 %v1283, 0.2
        %v1316 = vmul.f32 %v1284, 0.2
        %v1317 = vsel %vm1285, %v1269, %v1301
        %v1318 = vsel %vm1286, %v1270, %v1302
        %v1319 = vsel %vm1287, %v1271, %v1303
        %v1320 = vsel %vm1288, %v1272, %v1304
        %v1321 = vsel %vm1289, %v1273, %v1305
        %v1322 = vsel %vm1290, %v1274, %v1306
        %v1323 = vsel %vm1291, %v1275, %v1307
        %v1324 = vsel %vm1292, %v1276, %v1308
        %v1325 = vsel %vm1293, %v1277, %v1309
        %v1326 = vsel %vm1294, %v1278, %v1310
        %v1327 = vsel %vm1295, %v1279, %v1311
        %v1328 = vsel %vm1296, %v1280, %v1312
        %v1329 = vsel %vm1297, %v1281, %v1313
        %v1330 = vsel %vm1298, %v1282, %v1314
        %v1331 = vsel %vm1299, %v1283, %v1315
        %v1332 = vsel %vm1300, %v1284, %v1316
        %v1333 = vadd.f32 %v1317, %v435
        %v1334 = vadd.f32 %v1318, %v436
        %v1335 = vadd.f32 %v1319, %v437
        %v1336 = vadd.f32 %v1320, %v438
        %v1337 = vadd.f32 %v1321, %v439
        %v1338 = vadd.f32 %v1322, %v440
        %v1339 = vadd.f32 %v1323, %v441
        %v1340 = vadd.f32 %v1324, %v442
        %v1341 = vadd.f32 %v1325, %v443
        %v1342 = vadd.f32 %v1326, %v444
        %v1343 = vadd.f32 %v1327, %v445
        %v1344 = vadd.f32 %v1328, %v446
        %v1345 = vadd.f32 %v1329, %v447
        %v1346 = vadd.f32 %v1330, %v448
        %v1347 = vadd.f32 %v1331, %v449
        %v1348 = vadd.f32 %v1332, %v450
        %1349 = vmax.xlane.f32.xlu0 %v1333
        %v1350 = vpop.xlane.xlu0 %1349
        %1351 = vmax.xlane.f32.xlu0 %v1334
        %v1352 = vpop.xlane.xlu0 %1351
        %1353 = vmax.xlane.f32.xlu0 %v1335
        %v1354 = vpop.xlane.xlu0 %1353
        %1355 = vmax.xlane.f32.xlu0 %v1336
        %v1356 = vpop.xlane.xlu0 %1355
        %1357 = vmax.xlane.f32.xlu0 %v1337
        %v1358 = vpop.xlane.xlu0 %1357
        %1359 = vmax.xlane.f32.xlu0 %v1338
        %v1360 = vpop.xlane.xlu0 %1359
        %1361 = vmax.xlane.f32.xlu0 %v1339
        %v1362 = vpop.xlane.xlu0 %1361
        %1363 = vmax.xlane.f32.xlu0 %v1340
        %v1364 = vpop.xlane.xlu0 %1363
        %1365 = vmax.xlane.f32.xlu0 %v1341
        %v1366 = vpop.xlane.xlu0 %1365
        %1367 = vmax.xlane.f32.xlu0 %v1342
        %v1368 = vpop.xlane.xlu0 %1367
        %1369 = vmax.xlane.f32.xlu0 %v1343
        %v1370 = vpop.xlane.xlu0 %1369
        %1371 = vmax.xlane.f32.xlu0 %v1344
        %v1372 = vpop.xlane.xlu0 %1371
        %1373 = vmax.xlane.f32.xlu0 %v1345
        %v1374 = vpop.xlane.xlu0 %1373
        %1375 = vmax.xlane.f32.xlu0 %v1346
        %v1376 = vpop.xlane.xlu0 %1375
        %1377 = vmax.xlane.f32.xlu0 %v1347
        %v1378 = vpop.xlane.xlu0 %1377
        %1379 = vmax.xlane.f32.xlu0 %v1348
        %v1380 = vpop.xlane.xlu0 %1379
        %v1381 = vsub.f32 %v1333, %v1350
        %v1382 = vsub.f32 %v1334, %v1352
        %v1383 = vsub.f32 %v1335, %v1354
        %v1384 = vsub.f32 %v1336, %v1356
        %v1385 = vsub.f32 %v1337, %v1358
        %v1386 = vsub.f32 %v1338, %v1360
        %v1387 = vsub.f32 %v1339, %v1362
        %v1388 = vsub.f32 %v1340, %v1364
        %v1389 = vsub.f32 %v1341, %v1366
        %v1390 = vsub.f32 %v1342, %v1368
        %v1391 = vsub.f32 %v1343, %v1370
        %v1392 = vsub.f32 %v1344, %v1372
        %v1393 = vsub.f32 %v1345, %v1374
        %v1394 = vsub.f32 %v1346, %v1376
        %v1395 = vsub.f32 %v1347, %v1378
        %v1396 = vsub.f32 %v1348, %v1380
        %v1397 = vmul.f32 %v1381, 1.442695
        %v1398 = vpow.pop %v1397
        %v1399 = vmul.f32 %v1382, 1.442695
        %v1400 = vpow.pop %v1399
        %v1401 = vmul.f32 %v1383, 1.442695
        %v1402 = vpow.pop %v1401
        %v1403 = vmul.f32 %v1384, 1.442695
        %v1404 = vpow.pop %v1403
        %v1405 = vmul.f32 %v1385, 1.442695
        %v1406 = vpow.pop %v1405
        %v1407 = vmul.f32 %v1386, 1.442695
        %v1408 = vpow.pop %v1407
        %v1409 = vmul.f32 %v1387, 1.442695
        %v1410 = vpow.pop %v1409
        %v1411 = vmul.f32 %v1388, 1.442695
        %v1412 = vpow.pop %v1411
        %v1413 = vmul.f32 %v1389, 1.442695
        %v1414 = vpow.pop %v1413
        %v1415 = vmul.f32 %v1390, 1.442695
        %v1416 = vpow.pop %v1415
        %v1417 = vmul.f32 %v1391, 1.442695
        %v1418 = vpow.pop %v1417
        %v1419 = vmul.f32 %v1392, 1.442695
        %v1420 = vpow.pop %v1419
        %v1421 = vmul.f32 %v1393, 1.442695
        %v1422 = vpow.pop %v1421
        %v1423 = vmul.f32 %v1394, 1.442695
        %v1424 = vpow.pop %v1423
        %v1425 = vmul.f32 %v1395, 1.442695
        %v1426 = vpow.pop %v1425
        %v1427 = vmul.f32 %v1396, 1.442695
        %v1428 = vpow.pop %v1427
        %1429 = vadd.xlane.f32.xlu0 %v1398
        %v1430 = vpop.xlane.xlu0 %1429
        %1431 = vadd.xlane.f32.xlu0 %v1400
        %v1432 = vpop.xlane.xlu0 %1431
        %1433 = vadd.xlane.f32.xlu0 %v1402
        %v1434 = vpop.xlane.xlu0 %1433
        %1435 = vadd.xlane.f32.xlu0 %v1404
        %v1436 = vpop.xlane.xlu0 %1435
        %1437 = vadd.xlane.f32.xlu0 %v1406
        %v1438 = vpop.xlane.xlu0 %1437
        %1439 = vadd.xlane.f32.xlu0 %v1408
        %v1440 = vpop.xlane.xlu0 %1439
        %1441 = vadd.xlane.f32.xlu0 %v1410
        %v1442 = vpop.xlane.xlu0 %1441
        %1443 = vadd.xlane.f32.xlu0 %v1412
        %v1444 = vpop.xlane.xlu0 %1443
        %1445 = vadd.xlane.f32.xlu0 %v1414
        %v1446 = vpop.xlane.xlu0 %1445
        %1447 = vadd.xlane.f32.xlu0 %v1416
        %v1448 = vpop.xlane.xlu0 %1447
        %1449 = vadd.xlane.f32.xlu0 %v1418
        %v1450 = vpop.xlane.xlu0 %1449
        %1451 = vadd.xlane.f32.xlu0 %v1420
        %v1452 = vpop.xlane.xlu0 %1451
        %1453 = vadd.xlane.f32.xlu0 %v1422
        %v1454 = vpop.xlane.xlu0 %1453
        %1455 = vadd.xlane.f32.xlu0 %v1424
        %v1456 = vpop.xlane.xlu0 %1455
        %1457 = vadd.xlane.f32.xlu0 %v1426
        %v1458 = vpop.xlane.xlu0 %1457
        %1459 = vadd.xlane.f32.xlu0 %v1428
        %v1460 = vpop.xlane.xlu0 %1459
        %v1461 = vpack.c.bf16 %v1400, %v1398
        %v1462 = vpack.c.bf16 %v1404, %v1402
        %v1463 = vpack.c.bf16 %v1408, %v1406
        %v1464 = vpack.c.bf16 %v1412, %v1410
        %v1465 = vpack.c.bf16 %v1416, %v1414
        %v1466 = vpack.c.bf16 %v1420, %v1418
        %v1467 = vpack.c.bf16 %v1424, %v1422
        %v1468 = vpack.c.bf16 %v1428, %v1426
        %1477 = vrot.lane.b32.xlu0 %v716, 112
        %v1478 = vpop.permute.xlu0 %1477
        %1479 = vrot.lane.b32.xlu0 %v717, 112
        %v1480 = vpop.permute.xlu0 %1479
        %1481 = vrot.lane.b32.xlu0 %v718, 112
        %v1482 = vpop.permute.xlu0 %1481
        %1483 = vrot.lane.b32.xlu0 %v719, 112
        %v1484 = vpop.permute.xlu0 %1483
        %1485 = vrot.lane.b32.xlu0 %v720, 112
        %v1486 = vpop.permute.xlu0 %1485
        %1487 = vrot.lane.b32.xlu0 %v721, 112
        %v1488 = vpop.permute.xlu0 %1487
        %1489 = vrot.lane.b32.xlu0 %v722, 112
        %v1490 = vpop.permute.xlu0 %1489
        %1491 = vrot.lane.b32.xlu0 %v723, 112
        %v1492 = vpop.permute.xlu0 %1491
        %1501 = vmatprep.subr.bf16.mxu0 0
        %1502 = vmatpush1.bf16.msra.mxu0 %v1478
        %1503 = vmatprep.subr.bf16.mxu0 0
        %1504 = vmatpush1.bf16.msra.mxu0 %v1480
        %1505 = vmatprep.subr.bf16.mxu0 0
        %1506 = vmatpush1.bf16.msra.mxu0 %v1482
        %1507 = vmatprep.subr.bf16.mxu0 0
        %1508 = vmatpush1.bf16.msra.mxu0 %v1484
        %1509 = vmatprep.subr.bf16.mxu0 0
        %1510 = vmatpush1.bf16.msra.mxu0 %v1486
        %1511 = vmatprep.subr.bf16.mxu0 0
        %1512 = vmatpush1.bf16.msra.mxu0 %v1488
        %1513 = vmatprep.subr.bf16.mxu0 0
        %1514 = vmatpush1.bf16.msra.mxu0 %v1490
        %1515 = vmatprep.subr.bf16.mxu0 0
        %1516 = vmatpush1.bf16.msra.mxu0 %v1492
        %1517 = vmatprep.subr.bf16.mxu0 0
        %1518 = vmatpush1.bf16.msra.mxu0 0
        %1519 = vmatprep.subr.bf16.mxu0 0
        %1520 = vmatpush1.bf16.msra.mxu0 0
        %1521 = vmatprep.subr.bf16.mxu0 0
        %1522 = vmatpush1.bf16.msra.mxu0 0
        %1523 = vmatprep.subr.bf16.mxu0 0
        %1524 = vmatpush1.bf16.msra.mxu0 0
        %1525 = vmatprep.subr.bf16.mxu0 0
        %1526 = vmatpush1.bf16.msra.mxu0 0
        %1527 = vmatprep.subr.bf16.mxu0 0
        %1528 = vmatpush1.bf16.msra.mxu0 0
        %1529 = vmatprep.subr.bf16.mxu0 0
        %1530 = vmatpush1.bf16.msra.mxu0 0
        %1531 = vmatprep.subr.bf16.mxu0 0
        %1532 = vmatpush1.bf16.msra.mxu0 0
        %1533 = vmatprep.mubr.bf16.mxu0 0
        %1534 = vmatmul.mubr.bf16.gmra.mrb[0].mxu0 %v1461
        %v1535 = vpop.f32.mrb[0].mxu0
        %v1536 = vadd.f32 0.0, %v1535
        %v1537 = vpop.f32.mrb[0].mxu0
        %v1538 = vpop.f32.mrb[0].mxu0
        %v1539 = vadd.f32 0.0, %v1538
        %v1540 = vpop.f32.mrb[0].mxu0
        %1541 = vmatprep.mubr.bf16.mxu0 0
        %1542 = vmatmul.mubr.bf16.gmra.mrb[0].mxu0 %v1462
        %v1543 = vpop.f32.mrb[0].mxu0
        %v1544 = vadd.f32 0.0, %v1543
        %v1545 = vpop.f32.mrb[0].mxu0
        %v1546 = vpop.f32.mrb[0].mxu0
        %v1547 = vadd.f32 0.0, %v1546
        %v1548 = vpop.f32.mrb[0].mxu0
        %1549 = vmatprep.mubr.bf16.mxu0 0
        %1550 = vmatmul.mubr.bf16.gmra.mrb[0].mxu0 %v1463
        %v1551 = vpop.f32.mrb[0].mxu0
        %v1552 = vadd.f32 0.0, %v1551
        %v1553 = vpop.f32.mrb[0].mxu0
        %v1554 = vpop.f32.mrb[0].mxu0
        %v1555 = vadd.f32 0.0, %v1554
        %v1556 = vpop.f32.mrb[0].mxu0
        %1557 = vmatprep.mubr.bf16.mxu0 0
        %1558 = vmatmul.mubr.bf16.gmra.mrb[0].mxu0 %v1464
        %v1559 = vpop.f32.mrb[0].mxu0
        %v1560 = vadd.f32 0.0, %v1559
        %v1561 = vpop.f32.mrb[0].mxu0
        %v1562 = vpop.f32.mrb[0].mxu0
        %v1563 = vadd.f32 0.0, %v1562
        %v1564 = vpop.f32.mrb[0].mxu0
        %1565 = vmatprep.mubr.bf16.mxu0 0
        %1566 = vmatmul.mubr.bf16.gmra.mrb[0].mxu0 %v1465
        %v1567 = vpop.f32.mrb[0].mxu0
        %v1568 = vadd.f32 0.0, %v1567
        %v1569 = vpop.f32.mrb[0].mxu0
        %v1570 = vpop.f32.mrb[0].mxu0
        %v1571 = vadd.f32 0.0, %v1570
        %v1572 = vpop.f32.mrb[0].mxu0
        %1573 = vmatprep.mubr.bf16.mxu0 0
        %1574 = vmatmul.mubr.bf16.gmra.mrb[0].mxu0 %v1466
        %v1575 = vpop.f32.mrb[0].mxu0
        %v1576 = vadd.f32 0.0, %v1575
        %v1577 = vpop.f32.mrb[0].mxu0
        %v1578 = vpop.f32.mrb[0].mxu0
        %v1579 = vadd.f32 0.0, %v1578
        %v1580 = vpop.f32.mrb[0].mxu0
        %1581 = vmatprep.mubr.bf16.mxu0 0
        %1582 = vmatmul.mubr.bf16.gmra.mrb[0].mxu0 %v1467
        %v1583 = vpop.f32.mrb[0].mxu0
        %v1584 = vadd.f32 0.0, %v1583
        %v1585 = vpop.f32.mrb[0].mxu0
        %v1586 = vpop.f32.mrb[0].mxu0
        %v1587 = vadd.f32 0.0, %v1586
        %v1588 = vpop.f32.mrb[0].mxu0
        %1589 = vmatprep.mubr.bf16.mxu0 0
        %1590 = vmatmul.mubr.bf16.gmra.mrb[0].mxu0 %v1468
        %v1591 = vpop.f32.mrb[0].mxu0
        %v1592 = vadd.f32 0.0, %v1591
        %v1593 = vpop.f32.mrb[0].mxu0
        %v1594 = vpop.f32.mrb[0].mxu0
        %v1595 = vadd.f32 0.0, %v1594
        %v1596 = vpop.f32.mrb[0].mxu0
        %1597 = vdwg.mxu0
        %v1598 = vrcp.pop %v1430
        %v1599 = vrcp.pop %v1432
        %v1600 = vrcp.pop %v1434
        %v1601 = vrcp.pop %v1436
        %v1602 = vrcp.pop %v1438
        %v1603 = vrcp.pop %v1440
        %v1604 = vrcp.pop %v1442
        %v1605 = vrcp.pop %v1444
        %v1606 = vrcp.pop %v1446
        %v1607 = vrcp.pop %v1448
        %v1608 = vrcp.pop %v1450
        %v1609 = vrcp.pop %v1452
        %v1610 = vrcp.pop %v1454
        %v1611 = vrcp.pop %v1456
        %v1612 = vrcp.pop %v1458
        %v1613 = vrcp.pop %v1460
        %v1614 = vmul.f32 %v1536, %v1598
        %v1615 = vmul.f32 %v1539, %v1599
        %v1616 = vmul.f32 %v1544, %v1600
        %v1617 = vmul.f32 %v1547, %v1601
        %v1618 = vmul.f32 %v1552, %v1602
        %v1619 = vmul.f32 %v1555, %v1603
        %v1620 = vmul.f32 %v1560, %v1604
        %v1621 = vmul.f32 %v1563, %v1605
        %v1622 = vmul.f32 %v1568, %v1606
        %v1623 = vmul.f32 %v1571, %v1607
        %v1624 = vmul.f32 %v1576, %v1608
        %v1625 = vmul.f32 %v1579, %v1609
        %v1626 = vmul.f32 %v1584, %v1610
        %v1627 = vmul.f32 %v1587, %v1611
        %v1628 = vmul.f32 %v1592, %v1612
        %v1629 = vmul.f32 %v1595, %v1613
        %1630 = vrot.lane.b32.xlu0 %v610, 80
        %v1631 = vpop.permute.xlu0 %1630
        %1632 = vrot.lane.b32.xlu0 %v613, 80
        %v1633 = vpop.permute.xlu0 %1632
        %1634 = vrot.lane.b32.xlu0 %v618, 80
        %v1635 = vpop.permute.xlu0 %1634
        %1636 = vrot.lane.b32.xlu0 %v621, 80
        %v1637 = vpop.permute.xlu0 %1636
        %1638 = vrot.lane.b32.xlu0 %v626, 80
        %v1639 = vpop.permute.xlu0 %1638
        %1640 = vrot.lane.b32.xlu0 %v629, 80
        %v1641 = vpop.permute.xlu0 %1640
        %1642 = vrot.lane.b32.xlu0 %v634, 80
        %v1643 = vpop.permute.xlu0 %1642
        %1644 = vrot.lane.b32.xlu0 %v637, 80
        %v1645 = vpop.permute.xlu0 %1644
        %1646 = vrot.lane.b32.xlu0 %v642, 80
        %v1647 = vpop.permute.xlu0 %1646
        %1648 = vrot.lane.b32.xlu0 %v645, 80
        %v1649 = vpop.permute.xlu0 %1648
        %1650 = vrot.lane.b32.xlu0 %v650, 80
        %v1651 = vpop.permute.xlu0 %1650
        %1652 = vrot.lane.b32.xlu0 %v653, 80
        %v1653 = vpop.permute.xlu0 %1652
        %1654 = vrot.lane.b32.xlu0 %v658, 80
        %v1655 = vpop.permute.xlu0 %1654
        %1656 = vrot.lane.b32.xlu0 %v661, 80
        %v1657 = vpop.permute.xlu0 %1656
        %1658 = vrot.lane.b32.xlu0 %v666, 80
        %v1659 = vpop.permute.xlu0 %1658
        %1660 = vrot.lane.b32.xlu0 %v669, 80
        %v1661 = vpop.permute.xlu0 %1660
        %v1678 = vadd.f32 %v1614, %v1631
        %v1679 = vadd.f32 %v1615, %v1633
        %v1680 = vadd.f32 %v1616, %v1635
        %v1681 = vadd.f32 %v1617, %v1637
        %v1682 = vadd.f32 %v1618, %v1639
        %v1683 = vadd.f32 %v1619, %v1641
        %v1684 = vadd.f32 %v1620, %v1643
        %v1685 = vadd.f32 %v1621, %v1645
        %v1686 = vadd.f32 %v1622, %v1647
        %v1687 = vadd.f32 %v1623, %v1649
        %v1688 = vadd.f32 %v1624, %v1651
        %v1689 = vadd.f32 %v1625, %v1653
        %v1690 = vadd.f32 %v1626, %v1655
        %v1691 = vadd.f32 %v1627, %v1657
        %v1692 = vadd.f32 %v1628, %v1659
        %v1693 = vadd.f32 %v1629, %v1661
        %1710 = vrot.lane.b32.xlu0 %v1678, 16
        %v1711 = vpop.permute.xlu0 %1710
        %1712 = vrot.lane.b32.xlu0 %v1679, 16
        %v1713 = vpop.permute.xlu0 %1712
        %1714 = vrot.lane.b32.xlu0 %v1680, 16
        %v1715 = vpop.permute.xlu0 %1714
        %1716 = vrot.lane.b32.xlu0 %v1681, 16
        %v1717 = vpop.permute.xlu0 %1716
        %1718 = vrot.lane.b32.xlu0 %v1682, 16
        %v1719 = vpop.permute.xlu0 %1718
        %1720 = vrot.lane.b32.xlu0 %v1683, 16
        %v1721 = vpop.permute.xlu0 %1720
        %1722 = vrot.lane.b32.xlu0 %v1684, 16
        %v1723 = vpop.permute.xlu0 %1722
        %1724 = vrot.lane.b32.xlu0 %v1685, 16
        %v1725 = vpop.permute.xlu0 %1724
        %1726 = vrot.lane.b32.xlu0 %v1686, 16
        %v1727 = vpop.permute.xlu0 %1726
        %1728 = vrot.lane.b32.xlu0 %v1687, 16
        %v1729 = vpop.permute.xlu0 %1728
        %1730 = vrot.lane.b32.xlu0 %v1688, 16
        %v1731 = vpop.permute.xlu0 %1730
        %1732 = vrot.lane.b32.xlu0 %v1689, 16
        %v1733 = vpop.permute.xlu0 %1732
        %1734 = vrot.lane.b32.xlu0 %v1690, 16
        %v1735 = vpop.permute.xlu0 %1734
        %1736 = vrot.lane.b32.xlu0 %v1691, 16
        %v1737 = vpop.permute.xlu0 %1736
        %1738 = vrot.lane.b32.xlu0 %v1692, 16
        %v1739 = vpop.permute.xlu0 %1738
        %1740 = vrot.lane.b32.xlu0 %v1693, 16
        %v1741 = vpop.permute.xlu0 %1740
        %v1758 = vsel %vm550, %v1185, %v1711
        %v1759 = vsel %vm550, %v1186, %v1713
        %v1760 = vsel %vm550, %v1187, %v1715
        %v1761 = vsel %vm550, %v1188, %v1717
        %v1762 = vsel %vm550, %v1189, %v1719
        %v1763 = vsel %vm550, %v1190, %v1721
        %v1764 = vsel %vm550, %v1191, %v1723
        %v1765 = vsel %vm550, %v1192, %v1725
        %v1766 = vsel %vm550, %v1193, %v1727
        %v1767 = vsel %vm550, %v1194, %v1729
        %v1768 = vsel %vm550, %v1195, %v1731
        %v1769 = vsel %vm550, %v1196, %v1733
        %v1770 = vsel %vm550, %v1197, %v1735
        %v1771 = vsel %vm550, %v1198, %v1737
        %v1772 = vsel %vm550, %v1199, %v1739
        %v1773 = vsel %vm550, %v1200, %v1741
        %vm1774 = vcmask 261120
        %v1775 = vsel %vm1774, %v1758, 0.0
        %1776 = vadd.xlane.f32.xlu0 %v1775
        %v1777 = vpop.xlane.xlu0 %1776
        %v1778 = vsel %vm1774, %v1759, 0.0
        %1779 = vadd.xlane.f32.xlu0 %v1778
        %v1780 = vpop.xlane.xlu0 %1779
        %v1781 = vsel %vm1774, %v1760, 0.0
        %1782 = vadd.xlane.f32.xlu0 %v1781
        %v1783 = vpop.xlane.xlu0 %1782
        %v1784 = vsel %vm1774, %v1761, 0.0
        %1785 = vadd.xlane.f32.xlu0 %v1784
        %v1786 = vpop.xlane.xlu0 %1785
        %v1787 = vsel %vm1774, %v1762, 0.0
        %1788 = vadd.xlane.f32.xlu0 %v1787
        %v1789 = vpop.xlane.xlu0 %1788
        %v1790 = vsel %vm1774, %v1763, 0.0
        %1791 = vadd.xlane.f32.xlu0 %v1790
        %v1792 = vpop.xlane.xlu0 %1791
        %v1793 = vsel %vm1774, %v1764, 0.0
        %1794 = vadd.xlane.f32.xlu0 %v1793
        %v1795 = vpop.xlane.xlu0 %1794
        %v1796 = vsel %vm1774, %v1765, 0.0
        %1797 = vadd.xlane.f32.xlu0 %v1796
        %v1798 = vpop.xlane.xlu0 %1797
        %v1799 = vsel %vm1774, %v1766, 0.0
        %1800 = vadd.xlane.f32.xlu0 %v1799
        %v1801 = vpop.xlane.xlu0 %1800
        %v1802 = vsel %vm1774, %v1767, 0.0
        %1803 = vadd.xlane.f32.xlu0 %v1802
        %v1804 = vpop.xlane.xlu0 %1803
        %v1805 = vsel %vm1774, %v1768, 0.0
        %1806 = vadd.xlane.f32.xlu0 %v1805
        %v1807 = vpop.xlane.xlu0 %1806
        %v1808 = vsel %vm1774, %v1769, 0.0
        %1809 = vadd.xlane.f32.xlu0 %v1808
        %v1810 = vpop.xlane.xlu0 %1809
        %v1811 = vsel %vm1774, %v1770, 0.0
        %1812 = vadd.xlane.f32.xlu0 %v1811
        %v1813 = vpop.xlane.xlu0 %1812
        %v1814 = vsel %vm1774, %v1771, 0.0
        %1815 = vadd.xlane.f32.xlu0 %v1814
        %v1816 = vpop.xlane.xlu0 %1815
        %v1817 = vsel %vm1774, %v1772, 0.0
        %1818 = vadd.xlane.f32.xlu0 %v1817
        %v1819 = vpop.xlane.xlu0 %1818
        %v1820 = vsel %vm1774, %v1773, 0.0
        %1821 = vadd.xlane.f32.xlu0 %v1820
        %v1822 = vpop.xlane.xlu0 %1821
        %v1823 = vrcp.pop 32.0
        %v1824 = vmul.f32 %v1777, %v1823
        %v1825 = vmul.f32 %v1780, %v1823
        %v1826 = vmul.f32 %v1783, %v1823
        %v1827 = vmul.f32 %v1786, %v1823
        %v1828 = vmul.f32 %v1789, %v1823
        %v1829 = vmul.f32 %v1792, %v1823
        %v1830 = vmul.f32 %v1795, %v1823
        %v1831 = vmul.f32 %v1798, %v1823
        %v1832 = vmul.f32 %v1801, %v1823
        %v1833 = vmul.f32 %v1804, %v1823
        %v1834 = vmul.f32 %v1807, %v1823
        %v1835 = vmul.f32 %v1810, %v1823
        %v1836 = vmul.f32 %v1813, %v1823
        %v1837 = vmul.f32 %v1816, %v1823
        %v1838 = vmul.f32 %v1819, %v1823
        %v1839 = vmul.f32 %v1822, %v1823
        %v1840 = vsub.f32 %v1758, %v1824
        %v1841 = vsub.f32 %v1759, %v1825
        %v1842 = vsub.f32 %v1760, %v1826
        %v1843 = vsub.f32 %v1761, %v1827
        %v1844 = vsub.f32 %v1762, %v1828
        %v1845 = vsub.f32 %v1763, %v1829
        %v1846 = vsub.f32 %v1764, %v1830
        %v1847 = vsub.f32 %v1765, %v1831
        %v1848 = vsub.f32 %v1766, %v1832
        %v1849 = vsub.f32 %v1767, %v1833
        %v1850 = vsub.f32 %v1768, %v1834
        %v1851 = vsub.f32 %v1769, %v1835
        %v1852 = vsub.f32 %v1770, %v1836
        %v1853 = vsub.f32 %v1771, %v1837
        %v1854 = vsub.f32 %v1772, %v1838
        %v1855 = vsub.f32 %v1773, %v1839
        %v1856 = vmul.f32 %v1840, %v1840
        %v1857 = vmul.f32 %v1841, %v1841
        %v1858 = vmul.f32 %v1842, %v1842
        %v1859 = vmul.f32 %v1843, %v1843
        %v1860 = vmul.f32 %v1844, %v1844
        %v1861 = vmul.f32 %v1845, %v1845
        %v1862 = vmul.f32 %v1846, %v1846
        %v1863 = vmul.f32 %v1847, %v1847
        %v1864 = vmul.f32 %v1848, %v1848
        %v1865 = vmul.f32 %v1849, %v1849
        %v1866 = vmul.f32 %v1850, %v1850
        %v1867 = vmul.f32 %v1851, %v1851
        %v1868 = vmul.f32 %v1852, %v1852
        %v1869 = vmul.f32 %v1853, %v1853
        %v1870 = vmul.f32 %v1854, %v1854
        %v1871 = vmul.f32 %v1855, %v1855
        %v1872 = vsel %vm1774, %v1856, 0.0
        %1873 = vadd.xlane.f32.xlu0 %v1872
        %v1874 = vpop.xlane.xlu0 %1873
        %v1875 = vsel %vm1774, %v1857, 0.0
        %1876 = vadd.xlane.f32.xlu0 %v1875
        %v1877 = vpop.xlane.xlu0 %1876
        %v1878 = vsel %vm1774, %v1858, 0.0
        %1879 = vadd.xlane.f32.xlu0 %v1878
        %v1880 = vpop.xlane.xlu0 %1879
        %v1881 = vsel %vm1774, %v1859, 0.0
        %1882 = vadd.xlane.f32.xlu0 %v1881
        %v1883 = vpop.xlane.xlu0 %1882
        %v1884 = vsel %vm1774, %v1860, 0.0
        %1885 = vadd.xlane.f32.xlu0 %v1884
        %v1886 = vpop.xlane.xlu0 %1885
        %v1887 = vsel %vm1774, %v1861, 0.0
        %1888 = vadd.xlane.f32.xlu0 %v1887
        %v1889 = vpop.xlane.xlu0 %1888
        %v1890 = vsel %vm1774, %v1862, 0.0
        %1891 = vadd.xlane.f32.xlu0 %v1890
        %v1892 = vpop.xlane.xlu0 %1891
        %v1893 = vsel %vm1774, %v1863, 0.0
        %1894 = vadd.xlane.f32.xlu0 %v1893
        %v1895 = vpop.xlane.xlu0 %1894
        %v1896 = vsel %vm1774, %v1864, 0.0
        %1897 = vadd.xlane.f32.xlu0 %v1896
        %v1898 = vpop.xlane.xlu0 %1897
        %v1899 = vsel %vm1774, %v1865, 0.0
        %1900 = vadd.xlane.f32.xlu0 %v1899
        %v1901 = vpop.xlane.xlu0 %1900
        %v1902 = vsel %vm1774, %v1866, 0.0
        %1903 = vadd.xlane.f32.xlu0 %v1902
        %v1904 = vpop.xlane.xlu0 %1903
        %v1905 = vsel %vm1774, %v1867, 0.0
        %1906 = vadd.xlane.f32.xlu0 %v1905
        %v1907 = vpop.xlane.xlu0 %1906
        %v1908 = vsel %vm1774, %v1868, 0.0
        %1909 = vadd.xlane.f32.xlu0 %v1908
        %v1910 = vpop.xlane.xlu0 %1909
        %v1911 = vsel %vm1774, %v1869, 0.0
        %1912 = vadd.xlane.f32.xlu0 %v1911
        %v1913 = vpop.xlane.xlu0 %1912
        %v1914 = vsel %vm1774, %v1870, 0.0
        %1915 = vadd.xlane.f32.xlu0 %v1914
        %v1916 = vpop.xlane.xlu0 %1915
        %v1917 = vsel %vm1774, %v1871, 0.0
        %1918 = vadd.xlane.f32.xlu0 %v1917
        %v1919 = vpop.xlane.xlu0 %1918
        %v1920 = vmul.f32 %v1874, %v1823
        %v1921 = vmul.f32 %v1877, %v1823
        %v1922 = vmul.f32 %v1880, %v1823
        %v1923 = vmul.f32 %v1883, %v1823
        %v1924 = vmul.f32 %v1886, %v1823
        %v1925 = vmul.f32 %v1889, %v1823
        %v1926 = vmul.f32 %v1892, %v1823
        %v1927 = vmul.f32 %v1895, %v1823
        %v1928 = vmul.f32 %v1898, %v1823
        %v1929 = vmul.f32 %v1901, %v1823
        %v1930 = vmul.f32 %v1904, %v1823
        %v1931 = vmul.f32 %v1907, %v1823
        %v1932 = vmul.f32 %v1910, %v1823
        %v1933 = vmul.f32 %v1913, %v1823
        %v1934 = vmul.f32 %v1916, %v1823
        %v1935 = vmul.f32 %v1919, %v1823
        %v1936 = vadd.f32 %v1920, 1e-05
        %v1937 = vadd.f32 %v1921, 1e-05
        %v1938 = vadd.f32 %v1922, 1e-05
        %v1939 = vadd.f32 %v1923, 1e-05
        %v1940 = vadd.f32 %v1924, 1e-05
        %v1941 = vadd.f32 %v1925, 1e-05
        %v1942 = vadd.f32 %v1926, 1e-05
        %v1943 = vadd.f32 %v1927, 1e-05
        %v1944 = vadd.f32 %v1928, 1e-05
        %v1945 = vadd.f32 %v1929, 1e-05
        %v1946 = vadd.f32 %v1930, 1e-05
        %v1947 = vadd.f32 %v1931, 1e-05
        %v1948 = vadd.f32 %v1932, 1e-05
        %v1949 = vadd.f32 %v1933, 1e-05
        %v1950 = vadd.f32 %v1934, 1e-05
        %v1951 = vadd.f32 %v1935, 1e-05
        %v1952 = vrsqrt.pop %v1936
        %v1953 = vrsqrt.pop %v1937
        %v1954 = vrsqrt.pop %v1938
        %v1955 = vrsqrt.pop %v1939
        %v1956 = vrsqrt.pop %v1940
        %v1957 = vrsqrt.pop %v1941
        %v1958 = vrsqrt.pop %v1942
        %v1959 = vrsqrt.pop %v1943
        %v1960 = vrsqrt.pop %v1944
        %v1961 = vrsqrt.pop %v1945
        %v1962 = vrsqrt.pop %v1946
        %v1963 = vrsqrt.pop %v1947
        %v1964 = vrsqrt.pop %v1948
        %v1965 = vrsqrt.pop %v1949
        %v1966 = vrsqrt.pop %v1950
        %v1967 = vrsqrt.pop %v1951
        %v1968 = vmul.f32 %v1840, %v1952
        %v1969 = vmul.f32 %v1841, %v1953
        %v1970 = vmul.f32 %v1842, %v1954
        %v1971 = vmul.f32 %v1843, %v1955
        %v1972 = vmul.f32 %v1844, %v1956
        %v1973 = vmul.f32 %v1845, %v1957
        %v1974 = vmul.f32 %v1846, %v1958
        %v1975 = vmul.f32 %v1847, %v1959
        %v1976 = vmul.f32 %v1848, %v1960
        %v1977 = vmul.f32 %v1849, %v1961
        %v1978 = vmul.f32 %v1850, %v1962
        %v1979 = vmul.f32 %v1851, %v1963
        %v1980 = vmul.f32 %v1852, %v1964
        %v1981 = vmul.f32 %v1853, %v1965
        %v1982 = vmul.f32 %v1854, %v1966
        %v1983 = vmul.f32 %v1855, %v1967
        %v1984 = vmul.f32 %v1758, %v502
        %v1985 = vmul.f32 %v1759, %v503
        %v1986 = vmul.f32 %v1760, %v504
        %v1987 = vmul.f32 %v1761, %v505
        %v1988 = vmul.f32 %v1762, %v506
        %v1989 = vmul.f32 %v1763, %v507
        %v1990 = vmul.f32 %v1764, %v508
        %v1991 = vmul.f32 %v1765, %v509
        %v1992 = vmul.f32 %v1766, %v510
        %v1993 = vmul.f32 %v1767, %v511
        %v1994 = vmul.f32 %v1768, %v512
        %v1995 = vmul.f32 %v1769, %v513
        %v1996 = vmul.f32 %v1770, %v514
        %v1997 = vmul.f32 %v1771, %v515
        %v1998 = vmul.f32 %v1772, %v516
        %v1999 = vmul.f32 %v1773, %v517
        %v2000 = vsel %vm1774, %v1984, 0.0
        %v2001 = vsel %vm1774, %v1985, 0.0
        %v2002 = vadd.f32 %v2000, %v2001
        %v2003 = vsel %vm1774, %v1986, 0.0
        %v2004 = vadd.f32 %v2002, %v2003
        %v2005 = vsel %vm1774, %v1987, 0.0
        %v2006 = vadd.f32 %v2004, %v2005
        %v2007 = vsel %vm1774, %v1988, 0.0
        %v2008 = vadd.f32 %v2006, %v2007
        %v2009 = vsel %vm1774, %v1989, 0.0
        %v2010 = vadd.f32 %v2008, %v2009
        %v2011 = vsel %vm1774, %v1990, 0.0
        %v2012 = vadd.f32 %v2010, %v2011
        %v2013 = vsel %vm1774, %v1991, 0.0
        %v2014 = vadd.f32 %v2012, %v2013
        %v2015 = vsel %vm1774, %v1992, 0.0
        %v2016 = vadd.f32 %v2014, %v2015
        %v2017 = vsel %vm1774, %v1993, 0.0
        %v2018 = vadd.f32 %v2016, %v2017
        %v2019 = vsel %vm1774, %v1994, 0.0
        %v2020 = vadd.f32 %v2018, %v2019
        %v2021 = vsel %vm1774, %v1995, 0.0
        %v2022 = vadd.f32 %v2020, %v2021
        %v2023 = vsel %vm1774, %v1996, 0.0
        %v2024 = vadd.f32 %v2022, %v2023
        %v2025 = vsel %vm1774, %v1997, 0.0
        %v2026 = vadd.f32 %v2024, %v2025
        %v2027 = vsel %vm1774, %v1998, 0.0
        %v2028 = vadd.f32 %v2026, %v2027
        %v2029 = vsel %vm1774, %v1999, 0.0
        %v2030 = vadd.f32 %v2028, %v2029
        %v2031 = vrot.slane %v2030, 4
        %v2032 = vadd.f32 %v2030, %v2031
        %v2033 = vrot.slane %v2032, 2
        %v2034 = vadd.f32 %v2032, %v2033
        %v2035 = vrot.slane %v2034, 1
        %v2036 = vadd.f32 %v2034, %v2035
        %v2037 = vmul.f32 %v2036, 0.015625
        %v2038 = vsub.f32 %v1758, %v2037
        %v2039 = vsub.f32 %v1759, %v2037
        %v2040 = vsub.f32 %v1760, %v2037
        %v2041 = vsub.f32 %v1761, %v2037
        %v2042 = vsub.f32 %v1762, %v2037
        %v2043 = vsub.f32 %v1763, %v2037
        %v2044 = vsub.f32 %v1764, %v2037
        %v2045 = vsub.f32 %v1765, %v2037
        %v2046 = vsub.f32 %v1766, %v2037
        %v2047 = vsub.f32 %v1767, %v2037
        %v2048 = vsub.f32 %v1768, %v2037
        %v2049 = vsub.f32 %v1769, %v2037
        %v2050 = vsub.f32 %v1770, %v2037
        %v2051 = vsub.f32 %v1771, %v2037
        %v2052 = vsub.f32 %v1772, %v2037
        %v2053 = vsub.f32 %v1773, %v2037
        %v2054 = vmul.f32 %v2038, %v2038
        %v2055 = vmul.f32 %v2039, %v2039
        %v2056 = vmul.f32 %v2040, %v2040
        %v2057 = vmul.f32 %v2041, %v2041
        %v2058 = vmul.f32 %v2042, %v2042
        %v2059 = vmul.f32 %v2043, %v2043
        %v2060 = vmul.f32 %v2044, %v2044
        %v2061 = vmul.f32 %v2045, %v2045
        %v2062 = vmul.f32 %v2046, %v2046
        %v2063 = vmul.f32 %v2047, %v2047
        %v2064 = vmul.f32 %v2048, %v2048
        %v2065 = vmul.f32 %v2049, %v2049
        %v2066 = vmul.f32 %v2050, %v2050
        %v2067 = vmul.f32 %v2051, %v2051
        %v2068 = vmul.f32 %v2052, %v2052
        %v2069 = vmul.f32 %v2053, %v2053
        %v2070 = vmul.f32 %v2054, %v502
        %v2071 = vmul.f32 %v2055, %v503
        %v2072 = vmul.f32 %v2056, %v504
        %v2073 = vmul.f32 %v2057, %v505
        %v2074 = vmul.f32 %v2058, %v506
        %v2075 = vmul.f32 %v2059, %v507
        %v2076 = vmul.f32 %v2060, %v508
        %v2077 = vmul.f32 %v2061, %v509
        %v2078 = vmul.f32 %v2062, %v510
        %v2079 = vmul.f32 %v2063, %v511
        %v2080 = vmul.f32 %v2064, %v512
        %v2081 = vmul.f32 %v2065, %v513
        %v2082 = vmul.f32 %v2066, %v514
        %v2083 = vmul.f32 %v2067, %v515
        %v2084 = vmul.f32 %v2068, %v516
        %v2085 = vmul.f32 %v2069, %v517
        %v2086 = vsel %vm1774, %v2070, 0.0
        %v2087 = vsel %vm1774, %v2071, 0.0
        %v2088 = vadd.f32 %v2086, %v2087
        %v2089 = vsel %vm1774, %v2072, 0.0
        %v2090 = vadd.f32 %v2088, %v2089
        %v2091 = vsel %vm1774, %v2073, 0.0
        %v2092 = vadd.f32 %v2090, %v2091
        %v2093 = vsel %vm1774, %v2074, 0.0
        %v2094 = vadd.f32 %v2092, %v2093
        %v2095 = vsel %vm1774, %v2075, 0.0
        %v2096 = vadd.f32 %v2094, %v2095
        %v2097 = vsel %vm1774, %v2076, 0.0
        %v2098 = vadd.f32 %v2096, %v2097
        %v2099 = vsel %vm1774, %v2077, 0.0
        %v2100 = vadd.f32 %v2098, %v2099
        %v2101 = vsel %vm1774, %v2078, 0.0
        %v2102 = vadd.f32 %v2100, %v2101
        %v2103 = vsel %vm1774, %v2079, 0.0
        %v2104 = vadd.f32 %v2102, %v2103
        %v2105 = vsel %vm1774, %v2080, 0.0
        %v2106 = vadd.f32 %v2104, %v2105
        %v2107 = vsel %vm1774, %v2081, 0.0
        %v2108 = vadd.f32 %v2106, %v2107
        %v2109 = vsel %vm1774, %v2082, 0.0
        %v2110 = vadd.f32 %v2108, %v2109
        %v2111 = vsel %vm1774, %v2083, 0.0
        %v2112 = vadd.f32 %v2110, %v2111
        %v2113 = vsel %vm1774, %v2084, 0.0
        %v2114 = vadd.f32 %v2112, %v2113
        %v2115 = vsel %vm1774, %v2085, 0.0
        %v2116 = vadd.f32 %v2114, %v2115
        %v2117 = vrot.slane %v2116, 4
        %v2118 = vadd.f32 %v2116, %v2117
        %v2119 = vrot.slane %v2118, 2
        %v2120 = vadd.f32 %v2118, %v2119
        %v2121 = vrot.slane %v2120, 1
        %v2122 = vadd.f32 %v2120, %v2121
        %v2123 = vmul.f32 %v2122, 0.015625
        %v2124 = vadd.f32 %v2123, 1e-05
        %v2125 = vrsqrt.pop %v2124
        %v2126 = vmul.f32 %v2038, %v2125
        %v2127 = vmul.f32 %v2039, %v2125
        %v2128 = vmul.f32 %v2040, %v2125
        %v2129 = vmul.f32 %v2041, %v2125
        %v2130 = vmul.f32 %v2042, %v2125
        %v2131 = vmul.f32 %v2043, %v2125
        %v2132 = vmul.f32 %v2044, %v2125
        %v2133 = vmul.f32 %v2045, %v2125
        %v2134 = vmul.f32 %v2046, %v2125
        %v2135 = vmul.f32 %v2047, %v2125
        %v2136 = vmul.f32 %v2048, %v2125
        %v2137 = vmul.f32 %v2049, %v2125
        %v2138 = vmul.f32 %v2050, %v2125
        %v2139 = vmul.f32 %v2051, %v2125
        %v2140 = vmul.f32 %v2052, %v2125
        %v2141 = vmul.f32 %v2053, %v2125
        %s2142 = sld [smem:[#allocation2]]
        %v2143 = vstv %s2142
        %v2144 = vmul.f32 %v2143, %v1758
        %v2145 = vmul.f32 %v2143, %v1759
        %v2146 = vmul.f32 %v2143, %v1760
        %v2147 = vmul.f32 %v2143, %v1761
        %v2148 = vmul.f32 %v2143, %v1762
        %v2149 = vmul.f32 %v2143, %v1763
        %v2150 = vmul.f32 %v2143, %v1764
        %v2151 = vmul.f32 %v2143, %v1765
        %v2152 = vmul.f32 %v2143, %v1766
        %v2153 = vmul.f32 %v2143, %v1767
        %v2154 = vmul.f32 %v2143, %v1768
        %v2155 = vmul.f32 %v2143, %v1769
        %v2156 = vmul.f32 %v2143, %v1770
        %v2157 = vmul.f32 %v2143, %v1771
        %v2158 = vmul.f32 %v2143, %v1772
        %v2159 = vmul.f32 %v2143, %v1773
        %s2160 = sld [smem:[#allocation2 + $0x1]]
        %v2161 = vstv %s2160
        %v2162 = vmul.f32 %v2161, %v1968
        %v2163 = vmul.f32 %v2161, %v1969
        %v2164 = vmul.f32 %v2161, %v1970
        %v2165 = vmul.f32 %v2161, %v1971
        %v2166 = vmul.f32 %v2161, %v1972
        %v2167 = vmul.f32 %v2161, %v1973
        %v2168 = vmul.f32 %v2161, %v1974
        %v2169 = vmul.f32 %v2161, %v1975
        %v2170 = vmul.f32 %v2161, %v1976
        %v2171 = vmul.f32 %v2161, %v1977
        %v2172 = vmul.f32 %v2161, %v1978
        %v2173 = vmul.f32 %v2161, %v1979
        %v2174 = vmul.f32 %v2161, %v1980
        %v2175 = vmul.f32 %v2161, %v1981
        %v2176 = vmul.f32 %v2161, %v1982
        %v2177 = vmul.f32 %v2161, %v1983
        %v2178 = vadd.f32 %v2144, %v2162
        %v2179 = vadd.f32 %v2145, %v2163
        %v2180 = vadd.f32 %v2146, %v2164
        %v2181 = vadd.f32 %v2147, %v2165
        %v2182 = vadd.f32 %v2148, %v2166
        %v2183 = vadd.f32 %v2149, %v2167
        %v2184 = vadd.f32 %v2150, %v2168
        %v2185 = vadd.f32 %v2151, %v2169
        %v2186 = vadd.f32 %v2152, %v2170
        %v2187 = vadd.f32 %v2153, %v2171
        %v2188 = vadd.f32 %v2154, %v2172
        %v2189 = vadd.f32 %v2155, %v2173
        %v2190 = vadd.f32 %v2156, %v2174
        %v2191 = vadd.f32 %v2157, %v2175
        %v2192 = vadd.f32 %v2158, %v2176
        %v2193 = vadd.f32 %v2159, %v2177
        %s2194 = sld [smem:[#allocation2 + $0x2]]
        %v2195 = vstv %s2194
        %v2196 = vmul.f32 %v2195, %v2126
        %v2197 = vmul.f32 %v2195, %v2127
        %v2198 = vmul.f32 %v2195, %v2128
        %v2199 = vmul.f32 %v2195, %v2129
        %v2200 = vmul.f32 %v2195, %v2130
        %v2201 = vmul.f32 %v2195, %v2131
        %v2202 = vmul.f32 %v2195, %v2132
        %v2203 = vmul.f32 %v2195, %v2133
        %v2204 = vmul.f32 %v2195, %v2134
        %v2205 = vmul.f32 %v2195, %v2135
        %v2206 = vmul.f32 %v2195, %v2136
        %v2207 = vmul.f32 %v2195, %v2137
        %v2208 = vmul.f32 %v2195, %v2138
        %v2209 = vmul.f32 %v2195, %v2139
        %v2210 = vmul.f32 %v2195, %v2140
        %v2211 = vmul.f32 %v2195, %v2141
        %v2212 = vadd.f32 %v2178, %v2196
        %v2213 = vadd.f32 %v2179, %v2197
        %v2214 = vadd.f32 %v2180, %v2198
        %v2215 = vadd.f32 %v2181, %v2199
        %v2216 = vadd.f32 %v2182, %v2200
        %v2217 = vadd.f32 %v2183, %v2201
        %v2218 = vadd.f32 %v2184, %v2202
        %v2219 = vadd.f32 %v2185, %v2203
        %v2220 = vadd.f32 %v2186, %v2204
        %v2221 = vadd.f32 %v2187, %v2205
        %v2222 = vadd.f32 %v2188, %v2206
        %v2223 = vadd.f32 %v2189, %v2207
        %v2224 = vadd.f32 %v2190, %v2208
        %v2225 = vadd.f32 %v2191, %v2209
        %v2226 = vadd.f32 %v2192, %v2210
        %v2227 = vadd.f32 %v2193, %v2211
        %v2228 = vlaneseq
        %v2229 = vshrl.u32 %v2228, 7
        %v2230 = vsub.s32 0, %v2229
        %v2231 = vrot.slane %v451, %v2230
        %v2232 = vmul.f32 %v2212, %v2231
        %v2233 = vmul.f32 %v2213, %v2231
        %v2234 = vmul.f32 %v2214, %v2231
        %v2235 = vmul.f32 %v2215, %v2231
        %v2236 = vmul.f32 %v2216, %v2231
        %v2237 = vmul.f32 %v2217, %v2231
        %v2238 = vmul.f32 %v2218, %v2231
        %v2239 = vmul.f32 %v2219, %v2231
        %v2240 = vmul.f32 %v2220, %v2231
        %v2241 = vmul.f32 %v2221, %v2231
        %v2242 = vmul.f32 %v2222, %v2231
        %v2243 = vmul.f32 %v2223, %v2231
        %v2244 = vmul.f32 %v2224, %v2231
        %v2245 = vmul.f32 %v2225, %v2231
        %v2246 = vmul.f32 %v2226, %v2231
        %v2247 = vmul.f32 %v2227, %v2231
        %v2248 = vlaneseq
        %v2249 = vshrl.u32 %v2248, 7
        %v2250 = vsub.s32 0, %v2249
        %v2251 = vrot.slane %v452, %v2250
        %v2252 = vadd.f32 %v2232, %v2251
        %v2253 = vadd.f32 %v2233, %v2251
        %v2254 = vadd.f32 %v2234, %v2251
        %v2255 = vadd.f32 %v2235, %v2251
        %v2256 = vadd.f32 %v2236, %v2251
        %v2257 = vadd.f32 %v2237, %v2251
        %v2258 = vadd.f32 %v2238, %v2251
        %v2259 = vadd.f32 %v2239, %v2251
        %v2260 = vadd.f32 %v2240, %v2251
        %v2261 = vadd.f32 %v2241, %v2251
        %v2262 = vadd.f32 %v2242, %v2251
        %v2263 = vadd.f32 %v2243, %v2251
        %v2264 = vadd.f32 %v2244, %v2251
        %v2265 = vadd.f32 %v2245, %v2251
        %v2266 = vadd.f32 %v2246, %v2251
        %v2267 = vadd.f32 %v2247, %v2251
        %vm2268 = vcmp.gt.f32.partialorder %v2252, 0.0
        %vm2269 = vcmp.gt.f32.partialorder %v2253, 0.0
        %vm2270 = vcmp.gt.f32.partialorder %v2254, 0.0
        %vm2271 = vcmp.gt.f32.partialorder %v2255, 0.0
        %vm2272 = vcmp.gt.f32.partialorder %v2256, 0.0
        %vm2273 = vcmp.gt.f32.partialorder %v2257, 0.0
        %vm2274 = vcmp.gt.f32.partialorder %v2258, 0.0
        %vm2275 = vcmp.gt.f32.partialorder %v2259, 0.0
        %vm2276 = vcmp.gt.f32.partialorder %v2260, 0.0
        %vm2277 = vcmp.gt.f32.partialorder %v2261, 0.0
        %vm2278 = vcmp.gt.f32.partialorder %v2262, 0.0
        %vm2279 = vcmp.gt.f32.partialorder %v2263, 0.0
        %vm2280 = vcmp.gt.f32.partialorder %v2264, 0.0
        %vm2281 = vcmp.gt.f32.partialorder %v2265, 0.0
        %vm2282 = vcmp.gt.f32.partialorder %v2266, 0.0
        %vm2283 = vcmp.gt.f32.partialorder %v2267, 0.0
        %v2284 = vmul.f32 %v2252, 0.2
        %v2285 = vmul.f32 %v2253, 0.2
        %v2286 = vmul.f32 %v2254, 0.2
        %v2287 = vmul.f32 %v2255, 0.2
        %v2288 = vmul.f32 %v2256, 0.2
        %v2289 = vmul.f32 %v2257, 0.2
        %v2290 = vmul.f32 %v2258, 0.2
        %v2291 = vmul.f32 %v2259, 0.2
        %v2292 = vmul.f32 %v2260, 0.2
        %v2293 = vmul.f32 %v2261, 0.2
        %v2294 = vmul.f32 %v2262, 0.2
        %v2295 = vmul.f32 %v2263, 0.2
        %v2296 = vmul.f32 %v2264, 0.2
        %v2297 = vmul.f32 %v2265, 0.2
        %v2298 = vmul.f32 %v2266, 0.2
        %v2299 = vmul.f32 %v2267, 0.2
        %v2300 = vsel %vm2268, %v2252, %v2284
        %v2301 = vsel %vm2269, %v2253, %v2285
        %v2302 = vsel %vm2270, %v2254, %v2286
        %v2303 = vsel %vm2271, %v2255, %v2287
        %v2304 = vsel %vm2272, %v2256, %v2288
        %v2305 = vsel %vm2273, %v2257, %v2289
        %v2306 = vsel %vm2274, %v2258, %v2290
        %v2307 = vsel %vm2275, %v2259, %v2291
        %v2308 = vsel %vm2276, %v2260, %v2292
        %v2309 = vsel %vm2277, %v2261, %v2293
        %v2310 = vsel %vm2278, %v2262, %v2294
        %v2311 = vsel %vm2279, %v2263, %v2295
        %v2312 = vsel %vm2280, %v2264, %v2296
        %v2313 = vsel %vm2281, %v2265, %v2297
        %v2314 = vsel %vm2282, %v2266, %v2298
        %v2315 = vsel %vm2283, %v2267, %v2299
        %v2316 = vpack.c.bf16 %v2301, %v2300
        %v2317 = vpack.c.bf16 %v2303, %v2302
        %v2318 = vpack.c.bf16 %v2305, %v2304
        %v2319 = vpack.c.bf16 %v2307, %v2306
        %v2320 = vpack.c.bf16 %v2309, %v2308
        %v2321 = vpack.c.bf16 %v2311, %v2310
        %v2322 = vpack.c.bf16 %v2313, %v2312
        %v2323 = vpack.c.bf16 %v2315, %v2314
        %v2324 = vld [vmem:[%s4] sm:$0xf]
        %v2325 = vld [vmem:[%s4 + $0x4] sm:$0xf]
        %v2326 = vld [vmem:[%s4 + $0x8] sm:$0xf]
        %v2327 = vld [vmem:[%s4 + $0xc] sm:$0xf]
        %v2332 = vunpack.c.l.b16 %v2324
        %v2333 = vunpack.c.l.b16 %v2325
        %v2334 = vunpack.c.l.b16 %v2326
        %v2335 = vunpack.c.l.b16 %v2327
        %v2336 = vpack.c.b16 %v2333, %v2332
        %v2337 = vpack.c.b16 %v2335, %v2334
        %v2341 = vsel %vm1774, %v2316, 0
        %v2344 = vsel %vm1774, %v2317, 0
        %v2347 = vsel %vm1774, %v2318, 0
        %v2350 = vsel %vm1774, %v2319, 0
        %v2353 = vsel %vm1774, %v2320, 0
        %v2356 = vsel %vm1774, %v2321, 0
        %v2359 = vsel %vm1774, %v2322, 0
        %v2362 = vsel %vm1774, %v2323, 0
        %2364 = vmatprep.subr.bf16.mxu0 0
        %2365 = vmatpush1.bf16.msra.mxu0 %v2336
        %2366 = vmatprep.subr.bf16.mxu0 0
        %2367 = vmatpush1.bf16.msra.mxu0 %v2337
        %2368 = vmatprep.subr.bf16.mxu0 0
        %2369 = vmatpush1.bf16.msra.mxu0 0
        %2370 = vmatprep.subr.bf16.mxu0 0
        %2371 = vmatpush1.bf16.msra.mxu0 0
        %2372 = vmatprep.subr.bf16.mxu0 0
        %2373 = vmatpush1.bf16.msra.mxu0 0
        %2374 = vmatprep.subr.bf16.mxu0 0
        %2375 = vmatpush1.bf16.msra.mxu0 0
        %2376 = vmatprep.subr.bf16.mxu0 0
        %2377 = vmatpush1.bf16.msra.mxu0 0
        %2378 = vmatprep.subr.bf16.mxu0 0
        %2379 = vmatpush1.bf16.msra.mxu0 0
        %2380 = vmatprep.subr.bf16.mxu0 0
        %2381 = vmatpush1.bf16.msra.mxu0 0
        %2382 = vmatprep.subr.bf16.mxu0 0
        %2383 = vmatpush1.bf16.msra.mxu0 0
        %2384 = vmatprep.subr.bf16.mxu0 0
        %2385 = vmatpush1.bf16.msra.mxu0 0
        %2386 = vmatprep.subr.bf16.mxu0 0
        %2387 = vmatpush1.bf16.msra.mxu0 0
        %2388 = vmatprep.subr.bf16.mxu0 0
        %2389 = vmatpush1.bf16.msra.mxu0 0
        %2390 = vmatprep.subr.bf16.mxu0 0
        %2391 = vmatpush1.bf16.msra.mxu0 0
        %2392 = vmatprep.subr.bf16.mxu0 0
        %2393 = vmatpush1.bf16.msra.mxu0 0
        %2394 = vmatprep.subr.bf16.mxu0 0
        %2395 = vmatpush1.bf16.msra.mxu0 0
        %2396 = vmatprep.mubr.bf16.mxu0 0
        %2397 = vmatmul.mubr.bf16.gmra.mrb[0].mxu0 %v2341
        %v2398 = vpop.f32.mrb[0].mxu0
        %v2399 = vadd.f32 0.0, %v2398
        %v2400 = vpop.f32.mrb[0].mxu0
        %v2401 = vpop.f32.mrb[0].mxu0
        %v2402 = vadd.f32 0.0, %v2401
        %v2403 = vpop.f32.mrb[0].mxu0
        %2404 = vmatprep.mubr.bf16.mxu0 0
        %2405 = vmatmul.mubr.bf16.gmra.mrb[0].mxu0 %v2344
        %v2406 = vpop.f32.mrb[0].mxu0
        %v2407 = vadd.f32 0.0, %v2406
        %v2408 = vpop.f32.mrb[0].mxu0
        %v2409 = vpop.f32.mrb[0].mxu0
        %v2410 = vadd.f32 0.0, %v2409
        %v2411 = vpop.f32.mrb[0].mxu0
        %2412 = vmatprep.mubr.bf16.mxu0 0
        %2413 = vmatmul.mubr.bf16.gmra.mrb[0].mxu0 %v2347
        %v2414 = vpop.f32.mrb[0].mxu0
        %v2415 = vadd.f32 0.0, %v2414
        %v2416 = vpop.f32.mrb[0].mxu0
        %v2417 = vpop.f32.mrb[0].mxu0
        %v2418 = vadd.f32 0.0, %v2417
        %v2419 = vpop.f32.mrb[0].mxu0
        %2420 = vmatprep.mubr.bf16.mxu0 0
        %2421 = vmatmul.mubr.bf16.gmra.mrb[0].mxu0 %v2350
        %v2422 = vpop.f32.mrb[0].mxu0
        %v2423 = vadd.f32 0.0, %v2422
        %v2424 = vpop.f32.mrb[0].mxu0
        %v2425 = vpop.f32.mrb[0].mxu0
        %v2426 = vadd.f32 0.0, %v2425
        %v2427 = vpop.f32.mrb[0].mxu0
        %2428 = vmatprep.mubr.bf16.mxu0 0
        %2429 = vmatmul.mubr.bf16.gmra.mrb[0].mxu0 %v2353
        %v2430 = vpop.f32.mrb[0].mxu0
        %v2431 = vadd.f32 0.0, %v2430
        %v2432 = vpop.f32.mrb[0].mxu0
        %v2433 = vpop.f32.mrb[0].mxu0
        %v2434 = vadd.f32 0.0, %v2433
        %v2435 = vpop.f32.mrb[0].mxu0
        %2436 = vmatprep.mubr.bf16.mxu0 0
        %2437 = vmatmul.mubr.bf16.gmra.mrb[0].mxu0 %v2356
        %v2438 = vpop.f32.mrb[0].mxu0
        %v2439 = vadd.f32 0.0, %v2438
        %v2440 = vpop.f32.mrb[0].mxu0
        %v2441 = vpop.f32.mrb[0].mxu0
        %v2442 = vadd.f32 0.0, %v2441
        %v2443 = vpop.f32.mrb[0].mxu0
        %2444 = vmatprep.mubr.bf16.mxu0 0
        %2445 = vmatmul.mubr.bf16.gmra.mrb[0].mxu0 %v2359
        %v2446 = vpop.f32.mrb[0].mxu0
        %v2447 = vadd.f32 0.0, %v2446
        %v2448 = vpop.f32.mrb[0].mxu0
        %v2449 = vpop.f32.mrb[0].mxu0
        %v2450 = vadd.f32 0.0, %v2449
        %v2451 = vpop.f32.mrb[0].mxu0
        %2452 = vmatprep.mubr.bf16.mxu0 0
        %2453 = vmatmul.mubr.bf16.gmra.mrb[0].mxu0 %v2362
        %v2454 = vpop.f32.mrb[0].mxu0
        %v2455 = vadd.f32 0.0, %v2454
        %v2456 = vpop.f32.mrb[0].mxu0
        %v2457 = vpop.f32.mrb[0].mxu0
        %v2458 = vadd.f32 0.0, %v2457
        %v2459 = vpop.f32.mrb[0].mxu0
        %2460 = vdwg.mxu0
        %v2461 = vld [vmem:[%s5] sm:$0x1]
        %v2463 = vsel %vm1774, %v2461, 0
        %2465 = vmatprep.subr.bf16.mxu0 0
        %2466 = vmatpush1.bf16.xpose.msra.mxu0 %v2341
        %2467 = vmatprep.subr.bf16.mxu0 0
        %2468 = vmatpush1.bf16.xpose.msra.mxu0 %v2344
        %2469 = vmatprep.subr.bf16.mxu0 0
        %2470 = vmatpush1.bf16.xpose.msra.mxu0 %v2347
        %2471 = vmatprep.subr.bf16.mxu0 0
        %2472 = vmatpush1.bf16.xpose.msra.mxu0 %v2350
        %2473 = vmatprep.subr.bf16.mxu0 0
        %2474 = vmatpush1.bf16.xpose.msra.mxu0 %v2353
        %2475 = vmatprep.subr.bf16.mxu0 0
        %2476 = vmatpush1.bf16.xpose.msra.mxu0 %v2356
        %2477 = vmatprep.subr.bf16.mxu0 0
        %2478 = vmatpush1.bf16.xpose.msra.mxu0 %v2359
        %2479 = vmatprep.subr.bf16.mxu0 0
        %2480 = vmatpush1.bf16.xpose.msra.mxu0 %v2362
        %2481 = vmatprep.subr.bf16.mxu0 0
        %2482 = vmatpush1.bf16.xpose.msra.mxu0 0
        %2483 = vmatprep.subr.bf16.mxu0 0
        %2484 = vmatpush1.bf16.xpose.msra.mxu0 0
        %2485 = vmatprep.subr.bf16.mxu0 0
        %2486 = vmatpush1.bf16.xpose.msra.mxu0 0
        %2487 = vmatprep.subr.bf16.mxu0 0
        %2488 = vmatpush1.bf16.xpose.msra.mxu0 0
        %2489 = vmatprep.subr.bf16.mxu0 0
        %2490 = vmatpush1.bf16.xpose.msra.mxu0 0
        %2491 = vmatprep.subr.bf16.mxu0 0
        %2492 = vmatpush1.bf16.xpose.msra.mxu0 0
        %2493 = vmatprep.subr.bf16.mxu0 0
        %2494 = vmatpush1.bf16.xpose.msra.mxu0 0
        %2495 = vmatprep.subr.bf16.mxu0 0
        %2496 = vmatpush1.bf16.xpose.msra.mxu0 0
        %2497 = vmatprep.mubr.bf16.mxu0 0
        %2498 = vmatmul.mubr.bf16.gmra.mrb[0].mxu0 %v2463
        %v2499 = vpop.f32.mrb[0].mxu0
        %v2500 = vadd.f32 0.0, %v2499
        %v2501 = vpop.f32.mrb[0].mxu0
        %v2502 = vpop.f32.mrb[0].mxu0
        %v2503 = vpop.f32.mrb[0].mxu0
        %2504 = vdwg.mxu0
        %v2505 = vpack.c.bf16 %v2402, %v2399
        %v2506 = vpack.c.bf16 %v2410, %v2407
        %v2507 = vpack.c.bf16 %v2418, %v2415
        %v2508 = vpack.c.bf16 %v2426, %v2423
        %v2509 = vpack.c.bf16 %v2434, %v2431
        %v2510 = vpack.c.bf16 %v2442, %v2439
        %v2511 = vpack.c.bf16 %v2450, %v2447
        %v2512 = vpack.c.bf16 %v2458, %v2455
        %2514 = vset.pattern.permute.xlu0 32
        %2515 = vperm.xlu0 %2514, %v2399
        %v2516 = vpop.permute.xlu0 %2515
        %2519 = vset.pattern.permute.xlu0 32
        %2520 = vperm.xlu0 %2519, %v2402
        %v2521 = vpop.permute.xlu0 %2520
        %2524 = vset.pattern.permute.xlu0 32
        %2525 = vperm.xlu0 %2524, %v2407
        %v2526 = vpop.permute.xlu0 %2525
        %2529 = vset.pattern.permute.xlu0 32
        %2530 = vperm.xlu0 %2529, %v2410
        %v2531 = vpop.permute.xlu0 %2530
        %2534 = vset.pattern.permute.xlu0 32
        %2535 = vperm.xlu0 %2534, %v2415
        %v2536 = vpop.permute.xlu0 %2535
        %2539 = vset.pattern.permute.xlu0 32
        %2540 = vperm.xlu0 %2539, %v2418
        %v2541 = vpop.permute.xlu0 %2540
        %2544 = vset.pattern.permute.xlu0 32
        %2545 = vperm.xlu0 %2544, %v2423
        %v2546 = vpop.permute.xlu0 %2545
        %2549 = vset.pattern.permute.xlu0 32
        %2550 = vperm.xlu0 %2549, %v2426
        %v2551 = vpop.permute.xlu0 %2550
        %2554 = vset.pattern.permute.xlu0 32
        %2555 = vperm.xlu0 %2554, %v2431
        %v2556 = vpop.permute.xlu0 %2555
        %2559 = vset.pattern.permute.xlu0 32
        %2560 = vperm.xlu0 %2559, %v2434
        %v2561 = vpop.permute.xlu0 %2560
        %2564 = vset.pattern.permute.xlu0 32
        %2565 = vperm.xlu0 %2564, %v2439
        %v2566 = vpop.permute.xlu0 %2565
        %2569 = vset.pattern.permute.xlu0 32
        %2570 = vperm.xlu0 %2569, %v2442
        %v2571 = vpop.permute.xlu0 %2570
        %2574 = vset.pattern.permute.xlu0 32
        %2575 = vperm.xlu0 %2574, %v2447
        %v2576 = vpop.permute.xlu0 %2575
        %2579 = vset.pattern.permute.xlu0 32
        %2580 = vperm.xlu0 %2579, %v2450
        %v2581 = vpop.permute.xlu0 %2580
        %2584 = vset.pattern.permute.xlu0 32
        %2585 = vperm.xlu0 %2584, %v2455
        %v2586 = vpop.permute.xlu0 %2585
        %2589 = vset.pattern.permute.xlu0 32
        %2590 = vperm.xlu0 %2589, %v2458
        %v2591 = vpop.permute.xlu0 %2590
        %v2593 = vlaneseq
        %v2594 = vshrl.u32 %v2593, 7
        %v2595 = vsub.s32 0, %v2594
        %v2596 = vrot.slane %v2500, %v2595
        %v2597 = vadd.f32 %v2516, %v2596
        %v2598 = vadd.f32 %v2521, %v2596
        %v2599 = vadd.f32 %v2526, %v2596
        %v2600 = vadd.f32 %v2531, %v2596
        %v2601 = vadd.f32 %v2536, %v2596
        %v2602 = vadd.f32 %v2541, %v2596
        %v2603 = vadd.f32 %v2546, %v2596
        %v2604 = vadd.f32 %v2551, %v2596
        %v2605 = vadd.f32 %v2556, %v2596
        %v2606 = vadd.f32 %v2561, %v2596
        %v2607 = vadd.f32 %v2566, %v2596
        %v2608 = vadd.f32 %v2571, %v2596
        %v2609 = vadd.f32 %v2576, %v2596
        %v2610 = vadd.f32 %v2581, %v2596
        %v2611 = vadd.f32 %v2586, %v2596
        %v2612 = vadd.f32 %v2591, %v2596
        %vm2613 = vcmp.gt.f32.partialorder %v2597, 0.0
        %vm2614 = vcmp.gt.f32.partialorder %v2598, 0.0
        %vm2615 = vcmp.gt.f32.partialorder %v2599, 0.0
        %vm2616 = vcmp.gt.f32.partialorder %v2600, 0.0
        %vm2617 = vcmp.gt.f32.partialorder %v2601, 0.0
        %vm2618 = vcmp.gt.f32.partialorder %v2602, 0.0
        %vm2619 = vcmp.gt.f32.partialorder %v2603, 0.0
        %vm2620 = vcmp.gt.f32.partialorder %v2604, 0.0
        %vm2621 = vcmp.gt.f32.partialorder %v2605, 0.0
        %vm2622 = vcmp.gt.f32.partialorder %v2606, 0.0
        %vm2623 = vcmp.gt.f32.partialorder %v2607, 0.0
        %vm2624 = vcmp.gt.f32.partialorder %v2608, 0.0
        %vm2625 = vcmp.gt.f32.partialorder %v2609, 0.0
        %vm2626 = vcmp.gt.f32.partialorder %v2610, 0.0
        %vm2627 = vcmp.gt.f32.partialorder %v2611, 0.0
        %vm2628 = vcmp.gt.f32.partialorder %v2612, 0.0
        %v2629 = vmul.f32 %v2597, 0.2
        %v2630 = vmul.f32 %v2598, 0.2
        %v2631 = vmul.f32 %v2599, 0.2
        %v2632 = vmul.f32 %v2600, 0.2
        %v2633 = vmul.f32 %v2601, 0.2
        %v2634 = vmul.f32 %v2602, 0.2
        %v2635 = vmul.f32 %v2603, 0.2
        %v2636 = vmul.f32 %v2604, 0.2
        %v2637 = vmul.f32 %v2605, 0.2
        %v2638 = vmul.f32 %v2606, 0.2
        %v2639 = vmul.f32 %v2607, 0.2
        %v2640 = vmul.f32 %v2608, 0.2
        %v2641 = vmul.f32 %v2609, 0.2
        %v2642 = vmul.f32 %v2610, 0.2
        %v2643 = vmul.f32 %v2611, 0.2
        %v2644 = vmul.f32 %v2612, 0.2
        %v2645 = vsel %vm2613, %v2597, %v2629
        %v2646 = vsel %vm2614, %v2598, %v2630
        %v2647 = vsel %vm2615, %v2599, %v2631
        %v2648 = vsel %vm2616, %v2600, %v2632
        %v2649 = vsel %vm2617, %v2601, %v2633
        %v2650 = vsel %vm2618, %v2602, %v2634
        %v2651 = vsel %vm2619, %v2603, %v2635
        %v2652 = vsel %vm2620, %v2604, %v2636
        %v2653 = vsel %vm2621, %v2605, %v2637
        %v2654 = vsel %vm2622, %v2606, %v2638
        %v2655 = vsel %vm2623, %v2607, %v2639
        %v2656 = vsel %vm2624, %v2608, %v2640
        %v2657 = vsel %vm2625, %v2609, %v2641
        %v2658 = vsel %vm2626, %v2610, %v2642
        %v2659 = vsel %vm2627, %v2611, %v2643
        %v2660 = vsel %vm2628, %v2612, %v2644
        %v2661 = vadd.f32 %v2645, %v435
        %v2662 = vadd.f32 %v2646, %v436
        %v2663 = vadd.f32 %v2647, %v437
        %v2664 = vadd.f32 %v2648, %v438
        %v2665 = vadd.f32 %v2649, %v439
        %v2666 = vadd.f32 %v2650, %v440
        %v2667 = vadd.f32 %v2651, %v441
        %v2668 = vadd.f32 %v2652, %v442
        %v2669 = vadd.f32 %v2653, %v443
        %v2670 = vadd.f32 %v2654, %v444
        %v2671 = vadd.f32 %v2655, %v445
        %v2672 = vadd.f32 %v2656, %v446
        %v2673 = vadd.f32 %v2657, %v447
        %v2674 = vadd.f32 %v2658, %v448
        %v2675 = vadd.f32 %v2659, %v449
        %v2676 = vadd.f32 %v2660, %v450
        %2677 = vmax.xlane.f32.xlu0 %v2661
        %v2678 = vpop.xlane.xlu0 %2677
        %2679 = vmax.xlane.f32.xlu0 %v2662
        %v2680 = vpop.xlane.xlu0 %2679
        %2681 = vmax.xlane.f32.xlu0 %v2663
        %v2682 = vpop.xlane.xlu0 %2681
        %2683 = vmax.xlane.f32.xlu0 %v2664
        %v2684 = vpop.xlane.xlu0 %2683
        %2685 = vmax.xlane.f32.xlu0 %v2665
        %v2686 = vpop.xlane.xlu0 %2685
        %2687 = vmax.xlane.f32.xlu0 %v2666
        %v2688 = vpop.xlane.xlu0 %2687
        %2689 = vmax.xlane.f32.xlu0 %v2667
        %v2690 = vpop.xlane.xlu0 %2689
        %2691 = vmax.xlane.f32.xlu0 %v2668
        %v2692 = vpop.xlane.xlu0 %2691
        %2693 = vmax.xlane.f32.xlu0 %v2669
        %v2694 = vpop.xlane.xlu0 %2693
        %2695 = vmax.xlane.f32.xlu0 %v2670
        %v2696 = vpop.xlane.xlu0 %2695
        %2697 = vmax.xlane.f32.xlu0 %v2671
        %v2698 = vpop.xlane.xlu0 %2697
        %2699 = vmax.xlane.f32.xlu0 %v2672
        %v2700 = vpop.xlane.xlu0 %2699
        %2701 = vmax.xlane.f32.xlu0 %v2673
        %v2702 = vpop.xlane.xlu0 %2701
        %2703 = vmax.xlane.f32.xlu0 %v2674
        %v2704 = vpop.xlane.xlu0 %2703
        %2705 = vmax.xlane.f32.xlu0 %v2675
        %v2706 = vpop.xlane.xlu0 %2705
        %2707 = vmax.xlane.f32.xlu0 %v2676
        %v2708 = vpop.xlane.xlu0 %2707
        %v2709 = vsub.f32 %v2661, %v2678
        %v2710 = vsub.f32 %v2662, %v2680
        %v2711 = vsub.f32 %v2663, %v2682
        %v2712 = vsub.f32 %v2664, %v2684
        %v2713 = vsub.f32 %v2665, %v2686
        %v2714 = vsub.f32 %v2666, %v2688
        %v2715 = vsub.f32 %v2667, %v2690
        %v2716 = vsub.f32 %v2668, %v2692
        %v2717 = vsub.f32 %v2669, %v2694
        %v2718 = vsub.f32 %v2670, %v2696
        %v2719 = vsub.f32 %v2671, %v2698
        %v2720 = vsub.f32 %v2672, %v2700
        %v2721 = vsub.f32 %v2673, %v2702
        %v2722 = vsub.f32 %v2674, %v2704
        %v2723 = vsub.f32 %v2675, %v2706
        %v2724 = vsub.f32 %v2676, %v2708
        %v2725 = vmul.f32 %v2709, 1.442695
        %v2726 = vpow.pop %v2725
        %v2727 = vmul.f32 %v2710, 1.442695
        %v2728 = vpow.pop %v2727
        %v2729 = vmul.f32 %v2711, 1.442695
        %v2730 = vpow.pop %v2729
        %v2731 = vmul.f32 %v2712, 1.442695
        %v2732 = vpow.pop %v2731
        %v2733 = vmul.f32 %v2713, 1.442695
        %v2734 = vpow.pop %v2733
        %v2735 = vmul.f32 %v2714, 1.442695
        %v2736 = vpow.pop %v2735
        %v2737 = vmul.f32 %v2715, 1.442695
        %v2738 = vpow.pop %v2737
        %v2739 = vmul.f32 %v2716, 1.442695
        %v2740 = vpow.pop %v2739
        %v2741 = vmul.f32 %v2717, 1.442695
        %v2742 = vpow.pop %v2741
        %v2743 = vmul.f32 %v2718, 1.442695
        %v2744 = vpow.pop %v2743
        %v2745 = vmul.f32 %v2719, 1.442695
        %v2746 = vpow.pop %v2745
        %v2747 = vmul.f32 %v2720, 1.442695
        %v2748 = vpow.pop %v2747
        %v2749 = vmul.f32 %v2721, 1.442695
        %v2750 = vpow.pop %v2749
        %v2751 = vmul.f32 %v2722, 1.442695
        %v2752 = vpow.pop %v2751
        %v2753 = vmul.f32 %v2723, 1.442695
        %v2754 = vpow.pop %v2753
        %v2755 = vmul.f32 %v2724, 1.442695
        %v2756 = vpow.pop %v2755
        %2757 = vadd.xlane.f32.xlu0 %v2726
        %v2758 = vpop.xlane.xlu0 %2757
        %2759 = vadd.xlane.f32.xlu0 %v2728
        %v2760 = vpop.xlane.xlu0 %2759
        %2761 = vadd.xlane.f32.xlu0 %v2730
        %v2762 = vpop.xlane.xlu0 %2761
        %2763 = vadd.xlane.f32.xlu0 %v2732
        %v2764 = vpop.xlane.xlu0 %2763
        %2765 = vadd.xlane.f32.xlu0 %v2734
        %v2766 = vpop.xlane.xlu0 %2765
        %2767 = vadd.xlane.f32.xlu0 %v2736
        %v2768 = vpop.xlane.xlu0 %2767
        %2769 = vadd.xlane.f32.xlu0 %v2738
        %v2770 = vpop.xlane.xlu0 %2769
        %2771 = vadd.xlane.f32.xlu0 %v2740
        %v2772 = vpop.xlane.xlu0 %2771
        %2773 = vadd.xlane.f32.xlu0 %v2742
        %v2774 = vpop.xlane.xlu0 %2773
        %2775 = vadd.xlane.f32.xlu0 %v2744
        %v2776 = vpop.xlane.xlu0 %2775
        %2777 = vadd.xlane.f32.xlu0 %v2746
        %v2778 = vpop.xlane.xlu0 %2777
        %2779 = vadd.xlane.f32.xlu0 %v2748
        %v2780 = vpop.xlane.xlu0 %2779
        %2781 = vadd.xlane.f32.xlu0 %v2750
        %v2782 = vpop.xlane.xlu0 %2781
        %2783 = vadd.xlane.f32.xlu0 %v2752
        %v2784 = vpop.xlane.xlu0 %2783
        %2785 = vadd.xlane.f32.xlu0 %v2754
        %v2786 = vpop.xlane.xlu0 %2785
        %2787 = vadd.xlane.f32.xlu0 %v2756
        %v2788 = vpop.xlane.xlu0 %2787
        %v2789 = vpack.c.bf16 %v2728, %v2726
        %v2790 = vpack.c.bf16 %v2732, %v2730
        %v2791 = vpack.c.bf16 %v2736, %v2734
        %v2792 = vpack.c.bf16 %v2740, %v2738
        %v2793 = vpack.c.bf16 %v2744, %v2742
        %v2794 = vpack.c.bf16 %v2748, %v2746
        %v2795 = vpack.c.bf16 %v2752, %v2750
        %v2796 = vpack.c.bf16 %v2756, %v2754
        %2797 = vmatprep.subr.bf16.mxu0 0
        %2798 = vmatpush1.bf16.msra.mxu0 %v2505
        %2799 = vmatprep.subr.bf16.mxu0 0
        %2800 = vmatpush1.bf16.msra.mxu0 %v2506
        %2801 = vmatprep.subr.bf16.mxu0 0
        %2802 = vmatpush1.bf16.msra.mxu0 %v2507
        %2803 = vmatprep.subr.bf16.mxu0 0
        %2804 = vmatpush1.bf16.msra.mxu0 %v2508
        %2805 = vmatprep.subr.bf16.mxu0 0
        %2806 = vmatpush1.bf16.msra.mxu0 %v2509
        %2807 = vmatprep.subr.bf16.mxu0 0
        %2808 = vmatpush1.bf16.msra.mxu0 %v2510
        %2809 = vmatprep.subr.bf16.mxu0 0
        %2810 = vmatpush1.bf16.msra.mxu0 %v2511
        %2811 = vmatprep.subr.bf16.mxu0 0
        %2812 = vmatpush1.bf16.msra.mxu0 %v2512
        %2813 = vmatprep.subr.bf16.mxu0 0
        %2814 = vmatpush1.bf16.msra.mxu0 0
        %2815 = vmatprep.subr.bf16.mxu0 0
        %2816 = vmatpush1.bf16.msra.mxu0 0
        %2817 = vmatprep.subr.bf16.mxu0 0
        %2818 = vmatpush1.bf16.msra.mxu0 0
        %2819 = vmatprep.subr.bf16.mxu0 0
        %2820 = vmatpush1.bf16.msra.mxu0 0
        %2821 = vmatprep.subr.bf16.mxu0 0
        %2822 = vmatpush1.bf16.msra.mxu0 0
        %2823 = vmatprep.subr.bf16.mxu0 0
        %2824 = vmatpush1.bf16.msra.mxu0 0
        %2825 = vmatprep.subr.bf16.mxu0 0
        %2826 = vmatpush1.bf16.msra.mxu0 0
        %2827 = vmatprep.subr.bf16.mxu0 0
        %2828 = vmatpush1.bf16.msra.mxu0 0
        %2829 = vmatprep.mubr.bf16.mxu0 0
        %2830 = vmatmul.mubr.bf16.gmra.mrb[0].mxu0 %v2789
        %v2831 = vpop.f32.mrb[0].mxu0
        %v2832 = vadd.f32 0.0, %v2831
        %v2833 = vpop.f32.mrb[0].mxu0
        %v2834 = vpop.f32.mrb[0].mxu0
        %v2835 = vadd.f32 0.0, %v2834
        %v2836 = vpop.f32.mrb[0].mxu0
        %2837 = vmatprep.mubr.bf16.mxu0 0
        %2838 = vmatmul.mubr.bf16.gmra.mrb[0].mxu0 %v2790
        %v2839 = vpop.f32.mrb[0].mxu0
        %v2840 = vadd.f32 0.0, %v2839
        %v2841 = vpop.f32.mrb[0].mxu0
        %v2842 = vpop.f32.mrb[0].mxu0
        %v2843 = vadd.f32 0.0, %v2842
        %v2844 = vpop.f32.mrb[0].mxu0
        %2845 = vmatprep.mubr.bf16.mxu0 0
        %2846 = vmatmul.mubr.bf16.gmra.mrb[0].mxu0 %v2791
        %v2847 = vpop.f32.mrb[0].mxu0
        %v2848 = vadd.f32 0.0, %v2847
        %v2849 = vpop.f32.mrb[0].mxu0
        %v2850 = vpop.f32.mrb[0].mxu0
        %v2851 = vadd.f32 0.0, %v2850
        %v2852 = vpop.f32.mrb[0].mxu0
        %2853 = vmatprep.mubr.bf16.mxu0 0
        %2854 = vmatmul.mubr.bf16.gmra.mrb[0].mxu0 %v2792
        %v2855 = vpop.f32.mrb[0].mxu0
        %v2856 = vadd.f32 0.0, %v2855
        %v2857 = vpop.f32.mrb[0].mxu0
        %v2858 = vpop.f32.mrb[0].mxu0
        %v2859 = vadd.f32 0.0, %v2858
        %v2860 = vpop.f32.mrb[0].mxu0
        %2861 = vmatprep.mubr.bf16.mxu0 0
        %2862 = vmatmul.mubr.bf16.gmra.mrb[0].mxu0 %v2793
        %v2863 = vpop.f32.mrb[0].mxu0
        %v2864 = vadd.f32 0.0, %v2863
        %v2865 = vpop.f32.mrb[0].mxu0
        %v2866 = vpop.f32.mrb[0].mxu0
        %v2867 = vadd.f32 0.0, %v2866
        %v2868 = vpop.f32.mrb[0].mxu0
        %2869 = vmatprep.mubr.bf16.mxu0 0
        %2870 = vmatmul.mubr.bf16.gmra.mrb[0].mxu0 %v2794
        %v2871 = vpop.f32.mrb[0].mxu0
        %v2872 = vadd.f32 0.0, %v2871
        %v2873 = vpop.f32.mrb[0].mxu0
        %v2874 = vpop.f32.mrb[0].mxu0
        %v2875 = vadd.f32 0.0, %v2874
        %v2876 = vpop.f32.mrb[0].mxu0
        %2877 = vmatprep.mubr.bf16.mxu0 0
        %2878 = vmatmul.mubr.bf16.gmra.mrb[0].mxu0 %v2795
        %v2879 = vpop.f32.mrb[0].mxu0
        %v2880 = vadd.f32 0.0, %v2879
        %v2881 = vpop.f32.mrb[0].mxu0
        %v2882 = vpop.f32.mrb[0].mxu0
        %v2883 = vadd.f32 0.0, %v2882
        %v2884 = vpop.f32.mrb[0].mxu0
        %2885 = vmatprep.mubr.bf16.mxu0 0
        %2886 = vmatmul.mubr.bf16.gmra.mrb[0].mxu0 %v2796
        %v2887 = vpop.f32.mrb[0].mxu0
        %v2888 = vadd.f32 0.0, %v2887
        %v2889 = vpop.f32.mrb[0].mxu0
        %v2890 = vpop.f32.mrb[0].mxu0
        %v2891 = vadd.f32 0.0, %v2890
        %v2892 = vpop.f32.mrb[0].mxu0
        %2893 = vdwg.mxu0
        %v2894 = vrcp.pop %v2758
        %v2895 = vrcp.pop %v2760
        %v2896 = vrcp.pop %v2762
        %v2897 = vrcp.pop %v2764
        %v2898 = vrcp.pop %v2766
        %v2899 = vrcp.pop %v2768
        %v2900 = vrcp.pop %v2770
        %v2901 = vrcp.pop %v2772
        %v2902 = vrcp.pop %v2774
        %v2903 = vrcp.pop %v2776
        %v2904 = vrcp.pop %v2778
        %v2905 = vrcp.pop %v2780
        %v2906 = vrcp.pop %v2782
        %v2907 = vrcp.pop %v2784
        %v2908 = vrcp.pop %v2786
        %v2909 = vrcp.pop %v2788
        %v2910 = vmul.f32 %v2832, %v2894
        %v2911 = vmul.f32 %v2835, %v2895
        %v2912 = vmul.f32 %v2840, %v2896
        %v2913 = vmul.f32 %v2843, %v2897
        %v2914 = vmul.f32 %v2848, %v2898
        %v2915 = vmul.f32 %v2851, %v2899
        %v2916 = vmul.f32 %v2856, %v2900
        %v2917 = vmul.f32 %v2859, %v2901
        %v2918 = vmul.f32 %v2864, %v2902
        %v2919 = vmul.f32 %v2867, %v2903
        %v2920 = vmul.f32 %v2872, %v2904
        %v2921 = vmul.f32 %v2875, %v2905
        %v2922 = vmul.f32 %v2880, %v2906
        %v2923 = vmul.f32 %v2883, %v2907
        %v2924 = vmul.f32 %v2888, %v2908
        %v2925 = vmul.f32 %v2891, %v2909
        %v2926 = vadd.f32 %v2910, %v2300
        %v2927 = vadd.f32 %v2911, %v2301
        %v2928 = vadd.f32 %v2912, %v2302
        %v2929 = vadd.f32 %v2913, %v2303
        %v2930 = vadd.f32 %v2914, %v2304
        %v2931 = vadd.f32 %v2915, %v2305
        %v2932 = vadd.f32 %v2916, %v2306
        %v2933 = vadd.f32 %v2917, %v2307
        %v2934 = vadd.f32 %v2918, %v2308
        %v2935 = vadd.f32 %v2919, %v2309
        %v2936 = vadd.f32 %v2920, %v2310
        %v2937 = vadd.f32 %v2921, %v2311
        %v2938 = vadd.f32 %v2922, %v2312
        %v2939 = vadd.f32 %v2923, %v2313
        %v2940 = vadd.f32 %v2924, %v2314
        %v2941 = vadd.f32 %v2925, %v2315
        %2942 = vset.pattern.permute.xlu0 33
        %2943 = vperm.xlu0 %2942, %v2399
        %v2944 = vpop.permute.xlu0 %2943
        %2946 = vset.pattern.permute.xlu0 33
        %2947 = vperm.xlu0 %2946, %v2402
        %v2948 = vpop.permute.xlu0 %2947
        %2950 = vset.pattern.permute.xlu0 33
        %2951 = vperm.xlu0 %2950, %v2407
        %v2952 = vpop.permute.xlu0 %2951
        %2954 = vset.pattern.permute.xlu0 33
        %2955 = vperm.xlu0 %2954, %v2410
        %v2956 = vpop.permute.xlu0 %2955
        %2958 = vset.pattern.permute.xlu0 33
        %2959 = vperm.xlu0 %2958, %v2415
        %v2960 = vpop.permute.xlu0 %2959
        %2962 = vset.pattern.permute.xlu0 33
        %2963 = vperm.xlu0 %2962, %v2418
        %v2964 = vpop.permute.xlu0 %2963
        %2966 = vset.pattern.permute.xlu0 33
        %2967 = vperm.xlu0 %2966, %v2423
        %v2968 = vpop.permute.xlu0 %2967
        %2970 = vset.pattern.permute.xlu0 33
        %2971 = vperm.xlu0 %2970, %v2426
        %v2972 = vpop.permute.xlu0 %2971
        %2974 = vset.pattern.permute.xlu0 33
        %2975 = vperm.xlu0 %2974, %v2431
        %v2976 = vpop.permute.xlu0 %2975
        %2978 = vset.pattern.permute.xlu0 33
        %2979 = vperm.xlu0 %2978, %v2434
        %v2980 = vpop.permute.xlu0 %2979
        %2982 = vset.pattern.permute.xlu0 33
        %2983 = vperm.xlu0 %2982, %v2439
        %v2984 = vpop.permute.xlu0 %2983
        %2986 = vset.pattern.permute.xlu0 33
        %2987 = vperm.xlu0 %2986, %v2442
        %v2988 = vpop.permute.xlu0 %2987
        %2990 = vset.pattern.permute.xlu0 33
        %2991 = vperm.xlu0 %2990, %v2447
        %v2992 = vpop.permute.xlu0 %2991
        %2994 = vset.pattern.permute.xlu0 33
        %2995 = vperm.xlu0 %2994, %v2450
        %v2996 = vpop.permute.xlu0 %2995
        %2998 = vset.pattern.permute.xlu0 33
        %2999 = vperm.xlu0 %2998, %v2455
        %v3000 = vpop.permute.xlu0 %2999
        %3002 = vset.pattern.permute.xlu0 33
        %3003 = vperm.xlu0 %3002, %v2458
        %v3004 = vpop.permute.xlu0 %3003
        %v3006 = vlaneseq
        %v3007 = vshrl.u32 %v3006, 7
        %v3008 = vsub.s32 1, %v3007
        %v3009 = vrot.slane %v2500, %v3008
        %v3010 = vadd.f32 %v2944, %v3009
        %v3011 = vadd.f32 %v2948, %v3009
        %v3012 = vadd.f32 %v2952, %v3009
        %v3013 = vadd.f32 %v2956, %v3009
        %v3014 = vadd.f32 %v2960, %v3009
        %v3015 = vadd.f32 %v2964, %v3009
        %v3016 = vadd.f32 %v2968, %v3009
        %v3017 = vadd.f32 %v2972, %v3009
        %v3018 = vadd.f32 %v2976, %v3009
        %v3019 = vadd.f32 %v2980, %v3009
        %v3020 = vadd.f32 %v2984, %v3009
        %v3021 = vadd.f32 %v2988, %v3009
        %v3022 = vadd.f32 %v2992, %v3009
        %v3023 = vadd.f32 %v2996, %v3009
        %v3024 = vadd.f32 %v3000, %v3009
        %v3025 = vadd.f32 %v3004, %v3009
        %vm3026 = vcmp.gt.f32.partialorder %v3010, 0.0
        %vm3027 = vcmp.gt.f32.partialorder %v3011, 0.0
        %vm3028 = vcmp.gt.f32.partialorder %v3012, 0.0
        %vm3029 = vcmp.gt.f32.partialorder %v3013, 0.0
        %vm3030 = vcmp.gt.f32.partialorder %v3014, 0.0
        %vm3031 = vcmp.gt.f32.partialorder %v3015, 0.0
        %vm3032 = vcmp.gt.f32.partialorder %v3016, 0.0
        %vm3033 = vcmp.gt.f32.partialorder %v3017, 0.0
        %vm3034 = vcmp.gt.f32.partialorder %v3018, 0.0
        %vm3035 = vcmp.gt.f32.partialorder %v3019, 0.0
        %vm3036 = vcmp.gt.f32.partialorder %v3020, 0.0
        %vm3037 = vcmp.gt.f32.partialorder %v3021, 0.0
        %vm3038 = vcmp.gt.f32.partialorder %v3022, 0.0
        %vm3039 = vcmp.gt.f32.partialorder %v3023, 0.0
        %vm3040 = vcmp.gt.f32.partialorder %v3024, 0.0
        %vm3041 = vcmp.gt.f32.partialorder %v3025, 0.0
        %v3042 = vmul.f32 %v3010, 0.2
        %v3043 = vmul.f32 %v3011, 0.2
        %v3044 = vmul.f32 %v3012, 0.2
        %v3045 = vmul.f32 %v3013, 0.2
        %v3046 = vmul.f32 %v3014, 0.2
        %v3047 = vmul.f32 %v3015, 0.2
        %v3048 = vmul.f32 %v3016, 0.2
        %v3049 = vmul.f32 %v3017, 0.2
        %v3050 = vmul.f32 %v3018, 0.2
        %v3051 = vmul.f32 %v3019, 0.2
        %v3052 = vmul.f32 %v3020, 0.2
        %v3053 = vmul.f32 %v3021, 0.2
        %v3054 = vmul.f32 %v3022, 0.2
        %v3055 = vmul.f32 %v3023, 0.2
        %v3056 = vmul.f32 %v3024, 0.2
        %v3057 = vmul.f32 %v3025, 0.2
        %v3058 = vsel %vm3026, %v3010, %v3042
        %v3059 = vsel %vm3027, %v3011, %v3043
        %v3060 = vsel %vm3028, %v3012, %v3044
        %v3061 = vsel %vm3029, %v3013, %v3045
        %v3062 = vsel %vm3030, %v3014, %v3046
        %v3063 = vsel %vm3031, %v3015, %v3047
        %v3064 = vsel %vm3032, %v3016, %v3048
        %v3065 = vsel %vm3033, %v3017, %v3049
        %v3066 = vsel %vm3034, %v3018, %v3050
        %v3067 = vsel %vm3035, %v3019, %v3051
        %v3068 = vsel %vm3036, %v3020, %v3052
        %v3069 = vsel %vm3037, %v3021, %v3053
        %v3070 = vsel %vm3038, %v3022, %v3054
        %v3071 = vsel %vm3039, %v3023, %v3055
        %v3072 = vsel %vm3040, %v3024, %v3056
        %v3073 = vsel %vm3041, %v3025, %v3057
        %v3074 = vadd.f32 %v3058, %v435
        %v3075 = vadd.f32 %v3059, %v436
        %v3076 = vadd.f32 %v3060, %v437
        %v3077 = vadd.f32 %v3061, %v438
        %v3078 = vadd.f32 %v3062, %v439
        %v3079 = vadd.f32 %v3063, %v440
        %v3080 = vadd.f32 %v3064, %v441
        %v3081 = vadd.f32 %v3065, %v442
        %v3082 = vadd.f32 %v3066, %v443
        %v3083 = vadd.f32 %v3067, %v444
        %v3084 = vadd.f32 %v3068, %v445
        %v3085 = vadd.f32 %v3069, %v446
        %v3086 = vadd.f32 %v3070, %v447
        %v3087 = vadd.f32 %v3071, %v448
        %v3088 = vadd.f32 %v3072, %v449
        %v3089 = vadd.f32 %v3073, %v450
        %3090 = vmax.xlane.f32.xlu0 %v3074
        %v3091 = vpop.xlane.xlu0 %3090
        %3092 = vmax.xlane.f32.xlu0 %v3075
        %v3093 = vpop.xlane.xlu0 %3092
        %3094 = vmax.xlane.f32.xlu0 %v3076
        %v3095 = vpop.xlane.xlu0 %3094
        %3096 = vmax.xlane.f32.xlu0 %v3077
        %v3097 = vpop.xlane.xlu0 %3096
        %3098 = vmax.xlane.f32.xlu0 %v3078
        %v3099 = vpop.xlane.xlu0 %3098
        %3100 = vmax.xlane.f32.xlu0 %v3079
        %v3101 = vpop.xlane.xlu0 %3100
        %3102 = vmax.xlane.f32.xlu0 %v3080
        %v3103 = vpop.xlane.xlu0 %3102
        %3104 = vmax.xlane.f32.xlu0 %v3081
        %v3105 = vpop.xlane.xlu0 %3104
        %3106 = vmax.xlane.f32.xlu0 %v3082
        %v3107 = vpop.xlane.xlu0 %3106
        %3108 = vmax.xlane.f32.xlu0 %v3083
        %v3109 = vpop.xlane.xlu0 %3108
        %3110 = vmax.xlane.f32.xlu0 %v3084
        %v3111 = vpop.xlane.xlu0 %3110
        %3112 = vmax.xlane.f32.xlu0 %v3085
        %v3113 = vpop.xlane.xlu0 %3112
        %3114 = vmax.xlane.f32.xlu0 %v3086
        %v3115 = vpop.xlane.xlu0 %3114
        %3116 = vmax.xlane.f32.xlu0 %v3087
        %v3117 = vpop.xlane.xlu0 %3116
        %3118 = vmax.xlane.f32.xlu0 %v3088
        %v3119 = vpop.xlane.xlu0 %3118
        %3120 = vmax.xlane.f32.xlu0 %v3089
        %v3121 = vpop.xlane.xlu0 %3120
        %v3122 = vsub.f32 %v3074, %v3091
        %v3123 = vsub.f32 %v3075, %v3093
        %v3124 = vsub.f32 %v3076, %v3095
        %v3125 = vsub.f32 %v3077, %v3097
        %v3126 = vsub.f32 %v3078, %v3099
        %v3127 = vsub.f32 %v3079, %v3101
        %v3128 = vsub.f32 %v3080, %v3103
        %v3129 = vsub.f32 %v3081, %v3105
        %v3130 = vsub.f32 %v3082, %v3107
        %v3131 = vsub.f32 %v3083, %v3109
        %v3132 = vsub.f32 %v3084, %v3111
        %v3133 = vsub.f32 %v3085, %v3113
        %v3134 = vsub.f32 %v3086, %v3115
        %v3135 = vsub.f32 %v3087, %v3117
        %v3136 = vsub.f32 %v3088, %v3119
        %v3137 = vsub.f32 %v3089, %v3121
        %v3138 = vmul.f32 %v3122, 1.442695
        %v3139 = vpow.pop %v3138
        %v3140 = vmul.f32 %v3123, 1.442695
        %v3141 = vpow.pop %v3140
        %v3142 = vmul.f32 %v3124, 1.442695
        %v3143 = vpow.pop %v3142
        %v3144 = vmul.f32 %v3125, 1.442695
        %v3145 = vpow.pop %v3144
        %v3146 = vmul.f32 %v3126, 1.442695
        %v3147 = vpow.pop %v3146
        %v3148 = vmul.f32 %v3127, 1.442695
        %v3149 = vpow.pop %v3148
        %v3150 = vmul.f32 %v3128, 1.442695
        %v3151 = vpow.pop %v3150
        %v3152 = vmul.f32 %v3129, 1.442695
        %v3153 = vpow.pop %v3152
        %v3154 = vmul.f32 %v3130, 1.442695
        %v3155 = vpow.pop %v3154
        %v3156 = vmul.f32 %v3131, 1.442695
        %v3157 = vpow.pop %v3156
        %v3158 = vmul.f32 %v3132, 1.442695
        %v3159 = vpow.pop %v3158
        %v3160 = vmul.f32 %v3133, 1.442695
        %v3161 = vpow.pop %v3160
        %v3162 = vmul.f32 %v3134, 1.442695
        %v3163 = vpow.pop %v3162
        %v3164 = vmul.f32 %v3135, 1.442695
        %v3165 = vpow.pop %v3164
        %v3166 = vmul.f32 %v3136, 1.442695
        %v3167 = vpow.pop %v3166
        %v3168 = vmul.f32 %v3137, 1.442695
        %v3169 = vpow.pop %v3168
        %3170 = vadd.xlane.f32.xlu0 %v3139
        %v3171 = vpop.xlane.xlu0 %3170
        %3172 = vadd.xlane.f32.xlu0 %v3141
        %v3173 = vpop.xlane.xlu0 %3172
        %3174 = vadd.xlane.f32.xlu0 %v3143
        %v3175 = vpop.xlane.xlu0 %3174
        %3176 = vadd.xlane.f32.xlu0 %v3145
        %v3177 = vpop.xlane.xlu0 %3176
        %3178 = vadd.xlane.f32.xlu0 %v3147
        %v3179 = vpop.xlane.xlu0 %3178
        %3180 = vadd.xlane.f32.xlu0 %v3149
        %v3181 = vpop.xlane.xlu0 %3180
        %3182 = vadd.xlane.f32.xlu0 %v3151
        %v3183 = vpop.xlane.xlu0 %3182
        %3184 = vadd.xlane.f32.xlu0 %v3153
        %v3185 = vpop.xlane.xlu0 %3184
        %3186 = vadd.xlane.f32.xlu0 %v3155
        %v3187 = vpop.xlane.xlu0 %3186
        %3188 = vadd.xlane.f32.xlu0 %v3157
        %v3189 = vpop.xlane.xlu0 %3188
        %3190 = vadd.xlane.f32.xlu0 %v3159
        %v3191 = vpop.xlane.xlu0 %3190
        %3192 = vadd.xlane.f32.xlu0 %v3161
        %v3193 = vpop.xlane.xlu0 %3192
        %3194 = vadd.xlane.f32.xlu0 %v3163
        %v3195 = vpop.xlane.xlu0 %3194
        %3196 = vadd.xlane.f32.xlu0 %v3165
        %v3197 = vpop.xlane.xlu0 %3196
        %3198 = vadd.xlane.f32.xlu0 %v3167
        %v3199 = vpop.xlane.xlu0 %3198
        %3200 = vadd.xlane.f32.xlu0 %v3169
        %v3201 = vpop.xlane.xlu0 %3200
        %v3202 = vpack.c.bf16 %v3141, %v3139
        %v3203 = vpack.c.bf16 %v3145, %v3143
        %v3204 = vpack.c.bf16 %v3149, %v3147
        %v3205 = vpack.c.bf16 %v3153, %v3151
        %v3206 = vpack.c.bf16 %v3157, %v3155
        %v3207 = vpack.c.bf16 %v3161, %v3159
        %v3208 = vpack.c.bf16 %v3165, %v3163
        %v3209 = vpack.c.bf16 %v3169, %v3167
        %3218 = vrot.lane.b32.xlu0 %v2505, 112
        %v3219 = vpop.permute.xlu0 %3218
        %3220 = vrot.lane.b32.xlu0 %v2506, 112
        %v3221 = vpop.permute.xlu0 %3220
        %3222 = vrot.lane.b32.xlu0 %v2507, 112
        %v3223 = vpop.permute.xlu0 %3222
        %3224 = vrot.lane.b32.xlu0 %v2508, 112
        %v3225 = vpop.permute.xlu0 %3224
        %3226 = vrot.lane.b32.xlu0 %v2509, 112
        %v3227 = vpop.permute.xlu0 %3226
        %3228 = vrot.lane.b32.xlu0 %v2510, 112
        %v3229 = vpop.permute.xlu0 %3228
        %3230 = vrot.lane.b32.xlu0 %v2511, 112
        %v3231 = vpop.permute.xlu0 %3230
        %3232 = vrot.lane.b32.xlu0 %v2512, 112
        %v3233 = vpop.permute.xlu0 %3232
        %3242 = vmatprep.subr.bf16.mxu0 0
        %3243 = vmatpush1.bf16.msra.mxu0 %v3219
        %3244 = vmatprep.subr.bf16.mxu0 0
        %3245 = vmatpush1.bf16.msra.mxu0 %v3221
        %3246 = vmatprep.subr.bf16.mxu0 0
        %3247 = vmatpush1.bf16.msra.mxu0 %v3223
        %3248 = vmatprep.subr.bf16.mxu0 0
        %3249 = vmatpush1.bf16.msra.mxu0 %v3225
        %3250 = vmatprep.subr.bf16.mxu0 0
        %3251 = vmatpush1.bf16.msra.mxu0 %v3227
        %3252 = vmatprep.subr.bf16.mxu0 0
        %3253 = vmatpush1.bf16.msra.mxu0 %v3229
        %3254 = vmatprep.subr.bf16.mxu0 0
        %3255 = vmatpush1.bf16.msra.mxu0 %v3231
        %3256 = vmatprep.subr.bf16.mxu0 0
        %3257 = vmatpush1.bf16.msra.mxu0 %v3233
        %3258 = vmatprep.subr.bf16.mxu0 0
        %3259 = vmatpush1.bf16.msra.mxu0 0
        %3260 = vmatprep.subr.bf16.mxu0 0
        %3261 = vmatpush1.bf16.msra.mxu0 0
        %3262 = vmatprep.subr.bf16.mxu0 0
        %3263 = vmatpush1.bf16.msra.mxu0 0
        %3264 = vmatprep.subr.bf16.mxu0 0
        %3265 = vmatpush1.bf16.msra.mxu0 0
        %3266 = vmatprep.subr.bf16.mxu0 0
        %3267 = vmatpush1.bf16.msra.mxu0 0
        %3268 = vmatprep.subr.bf16.mxu0 0
        %3269 = vmatpush1.bf16.msra.mxu0 0
        %3270 = vmatprep.subr.bf16.mxu0 0
        %3271 = vmatpush1.bf16.msra.mxu0 0
        %3272 = vmatprep.subr.bf16.mxu0 0
        %3273 = vmatpush1.bf16.msra.mxu0 0
        %3274 = vmatprep.mubr.bf16.mxu0 0
        %3275 = vmatmul.mubr.bf16.gmra.mrb[0].mxu0 %v3202
        %v3276 = vpop.f32.mrb[0].mxu0
        %v3277 = vadd.f32 0.0, %v3276
        %v3278 = vpop.f32.mrb[0].mxu0
        %v3279 = vpop.f32.mrb[0].mxu0
        %v3280 = vadd.f32 0.0, %v3279
        %v3281 = vpop.f32.mrb[0].mxu0
        %3282 = vmatprep.mubr.bf16.mxu0 0
        %3283 = vmatmul.mubr.bf16.gmra.mrb[0].mxu0 %v3203
        %v3284 = vpop.f32.mrb[0].mxu0
        %v3285 = vadd.f32 0.0, %v3284
        %v3286 = vpop.f32.mrb[0].mxu0
        %v3287 = vpop.f32.mrb[0].mxu0
        %v3288 = vadd.f32 0.0, %v3287
        %v3289 = vpop.f32.mrb[0].mxu0
        %3290 = vmatprep.mubr.bf16.mxu0 0
        %3291 = vmatmul.mubr.bf16.gmra.mrb[0].mxu0 %v3204
        %v3292 = vpop.f32.mrb[0].mxu0
        %v3293 = vadd.f32 0.0, %v3292
        %v3294 = vpop.f32.mrb[0].mxu0
        %v3295 = vpop.f32.mrb[0].mxu0
        %v3296 = vadd.f32 0.0, %v3295
        %v3297 = vpop.f32.mrb[0].mxu0
        %3298 = vmatprep.mubr.bf16.mxu0 0
        %3299 = vmatmul.mubr.bf16.gmra.mrb[0].mxu0 %v3205
        %v3300 = vpop.f32.mrb[0].mxu0
        %v3301 = vadd.f32 0.0, %v3300
        %v3302 = vpop.f32.mrb[0].mxu0
        %v3303 = vpop.f32.mrb[0].mxu0
        %v3304 = vadd.f32 0.0, %v3303
        %v3305 = vpop.f32.mrb[0].mxu0
        %3306 = vmatprep.mubr.bf16.mxu0 0
        %3307 = vmatmul.mubr.bf16.gmra.mrb[0].mxu0 %v3206
        %v3308 = vpop.f32.mrb[0].mxu0
        %v3309 = vadd.f32 0.0, %v3308
        %v3310 = vpop.f32.mrb[0].mxu0
        %v3311 = vpop.f32.mrb[0].mxu0
        %v3312 = vadd.f32 0.0, %v3311
        %v3313 = vpop.f32.mrb[0].mxu0
        %3314 = vmatprep.mubr.bf16.mxu0 0
        %3315 = vmatmul.mubr.bf16.gmra.mrb[0].mxu0 %v3207
        %v3316 = vpop.f32.mrb[0].mxu0
        %v3317 = vadd.f32 0.0, %v3316
        %v3318 = vpop.f32.mrb[0].mxu0
        %v3319 = vpop.f32.mrb[0].mxu0
        %v3320 = vadd.f32 0.0, %v3319
        %v3321 = vpop.f32.mrb[0].mxu0
        %3322 = vmatprep.mubr.bf16.mxu0 0
        %3323 = vmatmul.mubr.bf16.gmra.mrb[0].mxu0 %v3208
        %v3324 = vpop.f32.mrb[0].mxu0
        %v3325 = vadd.f32 0.0, %v3324
        %v3326 = vpop.f32.mrb[0].mxu0
        %v3327 = vpop.f32.mrb[0].mxu0
        %v3328 = vadd.f32 0.0, %v3327
        %v3329 = vpop.f32.mrb[0].mxu0
        %3330 = vmatprep.mubr.bf16.mxu0 0
        %3331 = vmatmul.mubr.bf16.gmra.mrb[0].mxu0 %v3209
        %v3332 = vpop.f32.mrb[0].mxu0
        %v3333 = vadd.f32 0.0, %v3332
        %v3334 = vpop.f32.mrb[0].mxu0
        %v3335 = vpop.f32.mrb[0].mxu0
        %v3336 = vadd.f32 0.0, %v3335
        %v3337 = vpop.f32.mrb[0].mxu0
        %3338 = vdwg.mxu0
        %v3339 = vrcp.pop %v3171
        %v3340 = vrcp.pop %v3173
        %v3341 = vrcp.pop %v3175
        %v3342 = vrcp.pop %v3177
        %v3343 = vrcp.pop %v3179
        %v3344 = vrcp.pop %v3181
        %v3345 = vrcp.pop %v3183
        %v3346 = vrcp.pop %v3185
        %v3347 = vrcp.pop %v3187
        %v3348 = vrcp.pop %v3189
        %v3349 = vrcp.pop %v3191
        %v3350 = vrcp.pop %v3193
        %v3351 = vrcp.pop %v3195
        %v3352 = vrcp.pop %v3197
        %v3353 = vrcp.pop %v3199
        %v3354 = vrcp.pop %v3201
        %v3355 = vmul.f32 %v3277, %v3339
        %v3356 = vmul.f32 %v3280, %v3340
        %v3357 = vmul.f32 %v3285, %v3341
        %v3358 = vmul.f32 %v3288, %v3342
        %v3359 = vmul.f32 %v3293, %v3343
        %v3360 = vmul.f32 %v3296, %v3344
        %v3361 = vmul.f32 %v3301, %v3345
        %v3362 = vmul.f32 %v3304, %v3346
        %v3363 = vmul.f32 %v3309, %v3347
        %v3364 = vmul.f32 %v3312, %v3348
        %v3365 = vmul.f32 %v3317, %v3349
        %v3366 = vmul.f32 %v3320, %v3350
        %v3367 = vmul.f32 %v3325, %v3351
        %v3368 = vmul.f32 %v3328, %v3352
        %v3369 = vmul.f32 %v3333, %v3353
        %v3370 = vmul.f32 %v3336, %v3354
        %3387 = vrot.lane.b32.xlu0 %v2300, 112
        %v3388 = vpop.permute.xlu0 %3387
        %3389 = vrot.lane.b32.xlu0 %v2301, 112
        %v3390 = vpop.permute.xlu0 %3389
        %3391 = vrot.lane.b32.xlu0 %v2302, 112
        %v3392 = vpop.permute.xlu0 %3391
        %3393 = vrot.lane.b32.xlu0 %v2303, 112
        %v3394 = vpop.permute.xlu0 %3393
        %3395 = vrot.lane.b32.xlu0 %v2304, 112
        %v3396 = vpop.permute.xlu0 %3395
        %3397 = vrot.lane.b32.xlu0 %v2305, 112
        %v3398 = vpop.permute.xlu0 %3397
        %3399 = vrot.lane.b32.xlu0 %v2306, 112
        %v3400 = vpop.permute.xlu0 %3399
        %3401 = vrot.lane.b32.xlu0 %v2307, 112
        %v3402 = vpop.permute.xlu0 %3401
        %3403 = vrot.lane.b32.xlu0 %v2308, 112
        %v3404 = vpop.permute.xlu0 %3403
        %3405 = vrot.lane.b32.xlu0 %v2309, 112
        %v3406 = vpop.permute.xlu0 %3405
        %3407 = vrot.lane.b32.xlu0 %v2310, 112
        %v3408 = vpop.permute.xlu0 %3407
        %3409 = vrot.lane.b32.xlu0 %v2311, 112
        %v3410 = vpop.permute.xlu0 %3409
        %3411 = vrot.lane.b32.xlu0 %v2312, 112
        %v3412 = vpop.permute.xlu0 %3411
        %3413 = vrot.lane.b32.xlu0 %v2313, 112
        %v3414 = vpop.permute.xlu0 %3413
        %3415 = vrot.lane.b32.xlu0 %v2314, 112
        %v3416 = vpop.permute.xlu0 %3415
        %3417 = vrot.lane.b32.xlu0 %v2315, 112
        %v3418 = vpop.permute.xlu0 %3417
        %v3435 = vadd.f32 %v3355, %v3388
        %v3436 = vadd.f32 %v3356, %v3390
        %v3437 = vadd.f32 %v3357, %v3392
        %v3438 = vadd.f32 %v3358, %v3394
        %v3439 = vadd.f32 %v3359, %v3396
        %v3440 = vadd.f32 %v3360, %v3398
        %v3441 = vadd.f32 %v3361, %v3400
        %v3442 = vadd.f32 %v3362, %v3402
        %v3443 = vadd.f32 %v3363, %v3404
        %v3444 = vadd.f32 %v3364, %v3406
        %v3445 = vadd.f32 %v3365, %v3408
        %v3446 = vadd.f32 %v3366, %v3410
        %v3447 = vadd.f32 %v3367, %v3412
        %v3448 = vadd.f32 %v3368, %v3414
        %v3449 = vadd.f32 %v3369, %v3416
        %v3450 = vadd.f32 %v3370, %v3418
        %3467 = vrot.lane.b32.xlu0 %v3435, 16
        %v3468 = vpop.permute.xlu0 %3467
        %3469 = vrot.lane.b32.xlu0 %v3436, 16
        %v3470 = vpop.permute.xlu0 %3469
        %3471 = vrot.lane.b32.xlu0 %v3437, 16
        %v3472 = vpop.permute.xlu0 %3471
        %3473 = vrot.lane.b32.xlu0 %v3438, 16
        %v3474 = vpop.permute.xlu0 %3473
        %3475 = vrot.lane.b32.xlu0 %v3439, 16
        %v3476 = vpop.permute.xlu0 %3475
        %3477 = vrot.lane.b32.xlu0 %v3440, 16
        %v3478 = vpop.permute.xlu0 %3477
        %3479 = vrot.lane.b32.xlu0 %v3441, 16
        %v3480 = vpop.permute.xlu0 %3479
        %3481 = vrot.lane.b32.xlu0 %v3442, 16
        %v3482 = vpop.permute.xlu0 %3481
        %3483 = vrot.lane.b32.xlu0 %v3443, 16
        %v3484 = vpop.permute.xlu0 %3483
        %3485 = vrot.lane.b32.xlu0 %v3444, 16
        %v3486 = vpop.permute.xlu0 %3485
        %3487 = vrot.lane.b32.xlu0 %v3445, 16
        %v3488 = vpop.permute.xlu0 %3487
        %3489 = vrot.lane.b32.xlu0 %v3446, 16
        %v3490 = vpop.permute.xlu0 %3489
        %3491 = vrot.lane.b32.xlu0 %v3447, 16
        %v3492 = vpop.permute.xlu0 %3491
        %3493 = vrot.lane.b32.xlu0 %v3448, 16
        %v3494 = vpop.permute.xlu0 %3493
        %3495 = vrot.lane.b32.xlu0 %v3449, 16
        %v3496 = vpop.permute.xlu0 %3495
        %3497 = vrot.lane.b32.xlu0 %v3450, 16
        %v3498 = vpop.permute.xlu0 %3497
        %v3515 = vsel %vm550, %v2926, %v3468
        %v3516 = vsel %vm550, %v2927, %v3470
        %v3517 = vsel %vm550, %v2928, %v3472
        %v3518 = vsel %vm550, %v2929, %v3474
        %v3519 = vsel %vm550, %v2930, %v3476
        %v3520 = vsel %vm550, %v2931, %v3478
        %v3521 = vsel %vm550, %v2932, %v3480
        %v3522 = vsel %vm550, %v2933, %v3482
        %v3523 = vsel %vm550, %v2934, %v3484
        %v3524 = vsel %vm550, %v2935, %v3486
        %v3525 = vsel %vm550, %v2936, %v3488
        %v3526 = vsel %vm550, %v2937, %v3490
        %v3527 = vsel %vm550, %v2938, %v3492
        %v3528 = vsel %vm550, %v2939, %v3494
        %v3529 = vsel %vm550, %v2940, %v3496
        %v3530 = vsel %vm550, %v2941, %v3498
        %v3531 = vsel %vm1774, %v3515, 0.0
        %3532 = vadd.xlane.f32.xlu0 %v3531
        %v3533 = vpop.xlane.xlu0 %3532
        %v3534 = vsel %vm1774, %v3516, 0.0
        %3535 = vadd.xlane.f32.xlu0 %v3534
        %v3536 = vpop.xlane.xlu0 %3535
        %v3537 = vsel %vm1774, %v3517, 0.0
        %3538 = vadd.xlane.f32.xlu0 %v3537
        %v3539 = vpop.xlane.xlu0 %3538
        %v3540 = vsel %vm1774, %v3518, 0.0
        %3541 = vadd.xlane.f32.xlu0 %v3540
        %v3542 = vpop.xlane.xlu0 %3541
        %v3543 = vsel %vm1774, %v3519, 0.0
        %3544 = vadd.xlane.f32.xlu0 %v3543
        %v3545 = vpop.xlane.xlu0 %3544
        %v3546 = vsel %vm1774, %v3520, 0.0
        %3547 = vadd.xlane.f32.xlu0 %v3546
        %v3548 = vpop.xlane.xlu0 %3547
        %v3549 = vsel %vm1774, %v3521, 0.0
        %3550 = vadd.xlane.f32.xlu0 %v3549
        %v3551 = vpop.xlane.xlu0 %3550
        %v3552 = vsel %vm1774, %v3522, 0.0
        %3553 = vadd.xlane.f32.xlu0 %v3552
        %v3554 = vpop.xlane.xlu0 %3553
        %v3555 = vsel %vm1774, %v3523, 0.0
        %3556 = vadd.xlane.f32.xlu0 %v3555
        %v3557 = vpop.xlane.xlu0 %3556
        %v3558 = vsel %vm1774, %v3524, 0.0
        %3559 = vadd.xlane.f32.xlu0 %v3558
        %v3560 = vpop.xlane.xlu0 %3559
        %v3561 = vsel %vm1774, %v3525, 0.0
        %3562 = vadd.xlane.f32.xlu0 %v3561
        %v3563 = vpop.xlane.xlu0 %3562
        %v3564 = vsel %vm1774, %v3526, 0.0
        %3565 = vadd.xlane.f32.xlu0 %v3564
        %v3566 = vpop.xlane.xlu0 %3565
        %v3567 = vsel %vm1774, %v3527, 0.0
        %3568 = vadd.xlane.f32.xlu0 %v3567
        %v3569 = vpop.xlane.xlu0 %3568
        %v3570 = vsel %vm1774, %v3528, 0.0
        %3571 = vadd.xlane.f32.xlu0 %v3570
        %v3572 = vpop.xlane.xlu0 %3571
        %v3573 = vsel %vm1774, %v3529, 0.0
        %3574 = vadd.xlane.f32.xlu0 %v3573
        %v3575 = vpop.xlane.xlu0 %3574
        %v3576 = vsel %vm1774, %v3530, 0.0
        %3577 = vadd.xlane.f32.xlu0 %v3576
        %v3578 = vpop.xlane.xlu0 %3577
        %v3579 = vmul.f32 %v3533, %v1823
        %v3580 = vmul.f32 %v3536, %v1823
        %v3581 = vmul.f32 %v3539, %v1823
        %v3582 = vmul.f32 %v3542, %v1823
        %v3583 = vmul.f32 %v3545, %v1823
        %v3584 = vmul.f32 %v3548, %v1823
        %v3585 = vmul.f32 %v3551, %v1823
        %v3586 = vmul.f32 %v3554, %v1823
        %v3587 = vmul.f32 %v3557, %v1823
        %v3588 = vmul.f32 %v3560, %v1823
        %v3589 = vmul.f32 %v3563, %v1823
        %v3590 = vmul.f32 %v3566, %v1823
        %v3591 = vmul.f32 %v3569, %v1823
        %v3592 = vmul.f32 %v3572, %v1823
        %v3593 = vmul.f32 %v3575, %v1823
        %v3594 = vmul.f32 %v3578, %v1823
        %v3595 = vsub.f32 %v3515, %v3579
        %v3596 = vsub.f32 %v3516, %v3580
        %v3597 = vsub.f32 %v3517, %v3581
        %v3598 = vsub.f32 %v3518, %v3582
        %v3599 = vsub.f32 %v3519, %v3583
        %v3600 = vsub.f32 %v3520, %v3584
        %v3601 = vsub.f32 %v3521, %v3585
        %v3602 = vsub.f32 %v3522, %v3586
        %v3603 = vsub.f32 %v3523, %v3587
        %v3604 = vsub.f32 %v3524, %v3588
        %v3605 = vsub.f32 %v3525, %v3589
        %v3606 = vsub.f32 %v3526, %v3590
        %v3607 = vsub.f32 %v3527, %v3591
        %v3608 = vsub.f32 %v3528, %v3592
        %v3609 = vsub.f32 %v3529, %v3593
        %v3610 = vsub.f32 %v3530, %v3594
        %v3611 = vmul.f32 %v3595, %v3595
        %v3612 = vmul.f32 %v3596, %v3596
        %v3613 = vmul.f32 %v3597, %v3597
        %v3614 = vmul.f32 %v3598, %v3598
        %v3615 = vmul.f32 %v3599, %v3599
        %v3616 = vmul.f32 %v3600, %v3600
        %v3617 = vmul.f32 %v3601, %v3601
        %v3618 = vmul.f32 %v3602, %v3602
        %v3619 = vmul.f32 %v3603, %v3603
        %v3620 = vmul.f32 %v3604, %v3604
        %v3621 = vmul.f32 %v3605, %v3605
        %v3622 = vmul.f32 %v3606, %v3606
        %v3623 = vmul.f32 %v3607, %v3607
        %v3624 = vmul.f32 %v3608, %v3608
        %v3625 = vmul.f32 %v3609, %v3609
        %v3626 = vmul.f32 %v3610, %v3610
        %v3627 = vsel %vm1774, %v3611, 0.0
        %3628 = vadd.xlane.f32.xlu0 %v3627
        %v3629 = vpop.xlane.xlu0 %3628
        %v3630 = vsel %vm1774, %v3612, 0.0
        %3631 = vadd.xlane.f32.xlu0 %v3630
        %v3632 = vpop.xlane.xlu0 %3631
        %v3633 = vsel %vm1774, %v3613, 0.0
        %3634 = vadd.xlane.f32.xlu0 %v3633
        %v3635 = vpop.xlane.xlu0 %3634
        %v3636 = vsel %vm1774, %v3614, 0.0
        %3637 = vadd.xlane.f32.xlu0 %v3636
        %v3638 = vpop.xlane.xlu0 %3637
        %v3639 = vsel %vm1774, %v3615, 0.0
        %3640 = vadd.xlane.f32.xlu0 %v3639
        %v3641 = vpop.xlane.xlu0 %3640
        %v3642 = vsel %vm1774, %v3616, 0.0
        %3643 = vadd.xlane.f32.xlu0 %v3642
        %v3644 = vpop.xlane.xlu0 %3643
        %v3645 = vsel %vm1774, %v3617, 0.0
        %3646 = vadd.xlane.f32.xlu0 %v3645
        %v3647 = vpop.xlane.xlu0 %3646
        %v3648 = vsel %vm1774, %v3618, 0.0
        %3649 = vadd.xlane.f32.xlu0 %v3648
        %v3650 = vpop.xlane.xlu0 %3649
        %v3651 = vsel %vm1774, %v3619, 0.0
        %3652 = vadd.xlane.f32.xlu0 %v3651
        %v3653 = vpop.xlane.xlu0 %3652
        %v3654 = vsel %vm1774, %v3620, 0.0
        %3655 = vadd.xlane.f32.xlu0 %v3654
        %v3656 = vpop.xlane.xlu0 %3655
        %v3657 = vsel %vm1774, %v3621, 0.0
        %3658 = vadd.xlane.f32.xlu0 %v3657
        %v3659 = vpop.xlane.xlu0 %3658
        %v3660 = vsel %vm1774, %v3622, 0.0
        %3661 = vadd.xlane.f32.xlu0 %v3660
        %v3662 = vpop.xlane.xlu0 %3661
        %v3663 = vsel %vm1774, %v3623, 0.0
        %3664 = vadd.xlane.f32.xlu0 %v3663
        %v3665 = vpop.xlane.xlu0 %3664
        %v3666 = vsel %vm1774, %v3624, 0.0
        %3667 = vadd.xlane.f32.xlu0 %v3666
        %v3668 = vpop.xlane.xlu0 %3667
        %v3669 = vsel %vm1774, %v3625, 0.0
        %3670 = vadd.xlane.f32.xlu0 %v3669
        %v3671 = vpop.xlane.xlu0 %3670
        %v3672 = vsel %vm1774, %v3626, 0.0
        %3673 = vadd.xlane.f32.xlu0 %v3672
        %v3674 = vpop.xlane.xlu0 %3673
        %v3675 = vmul.f32 %v3629, %v1823
        %v3676 = vmul.f32 %v3632, %v1823
        %v3677 = vmul.f32 %v3635, %v1823
        %v3678 = vmul.f32 %v3638, %v1823
        %v3679 = vmul.f32 %v3641, %v1823
        %v3680 = vmul.f32 %v3644, %v1823
        %v3681 = vmul.f32 %v3647, %v1823
        %v3682 = vmul.f32 %v3650, %v1823
        %v3683 = vmul.f32 %v3653, %v1823
        %v3684 = vmul.f32 %v3656, %v1823
        %v3685 = vmul.f32 %v3659, %v1823
        %v3686 = vmul.f32 %v3662, %v1823
        %v3687 = vmul.f32 %v3665, %v1823
        %v3688 = vmul.f32 %v3668, %v1823
        %v3689 = vmul.f32 %v3671, %v1823
        %v3690 = vmul.f32 %v3674, %v1823
        %v3691 = vadd.f32 %v3675, 1e-05
        %v3692 = vadd.f32 %v3676, 1e-05
        %v3693 = vadd.f32 %v3677, 1e-05
        %v3694 = vadd.f32 %v3678, 1e-05
        %v3695 = vadd.f32 %v3679, 1e-05
        %v3696 = vadd.f32 %v3680, 1e-05
        %v3697 = vadd.f32 %v3681, 1e-05
        %v3698 = vadd.f32 %v3682, 1e-05
        %v3699 = vadd.f32 %v3683, 1e-05
        %v3700 = vadd.f32 %v3684, 1e-05
        %v3701 = vadd.f32 %v3685, 1e-05
        %v3702 = vadd.f32 %v3686, 1e-05
        %v3703 = vadd.f32 %v3687, 1e-05
        %v3704 = vadd.f32 %v3688, 1e-05
        %v3705 = vadd.f32 %v3689, 1e-05
        %v3706 = vadd.f32 %v3690, 1e-05
        %v3707 = vrsqrt.pop %v3691
        %v3708 = vrsqrt.pop %v3692
        %v3709 = vrsqrt.pop %v3693
        %v3710 = vrsqrt.pop %v3694
        %v3711 = vrsqrt.pop %v3695
        %v3712 = vrsqrt.pop %v3696
        %v3713 = vrsqrt.pop %v3697
        %v3714 = vrsqrt.pop %v3698
        %v3715 = vrsqrt.pop %v3699
        %v3716 = vrsqrt.pop %v3700
        %v3717 = vrsqrt.pop %v3701
        %v3718 = vrsqrt.pop %v3702
        %v3719 = vrsqrt.pop %v3703
        %v3720 = vrsqrt.pop %v3704
        %v3721 = vrsqrt.pop %v3705
        %v3722 = vrsqrt.pop %v3706
        %v3723 = vmul.f32 %v3595, %v3707
        %v3724 = vmul.f32 %v3596, %v3708
        %v3725 = vmul.f32 %v3597, %v3709
        %v3726 = vmul.f32 %v3598, %v3710
        %v3727 = vmul.f32 %v3599, %v3711
        %v3728 = vmul.f32 %v3600, %v3712
        %v3729 = vmul.f32 %v3601, %v3713
        %v3730 = vmul.f32 %v3602, %v3714
        %v3731 = vmul.f32 %v3603, %v3715
        %v3732 = vmul.f32 %v3604, %v3716
        %v3733 = vmul.f32 %v3605, %v3717
        %v3734 = vmul.f32 %v3606, %v3718
        %v3735 = vmul.f32 %v3607, %v3719
        %v3736 = vmul.f32 %v3608, %v3720
        %v3737 = vmul.f32 %v3609, %v3721
        %v3738 = vmul.f32 %v3610, %v3722
        %v3739 = vmul.f32 %v3515, %v502
        %v3740 = vmul.f32 %v3516, %v503
        %v3741 = vmul.f32 %v3517, %v504
        %v3742 = vmul.f32 %v3518, %v505
        %v3743 = vmul.f32 %v3519, %v506
        %v3744 = vmul.f32 %v3520, %v507
        %v3745 = vmul.f32 %v3521, %v508
        %v3746 = vmul.f32 %v3522, %v509
        %v3747 = vmul.f32 %v3523, %v510
        %v3748 = vmul.f32 %v3524, %v511
        %v3749 = vmul.f32 %v3525, %v512
        %v3750 = vmul.f32 %v3526, %v513
        %v3751 = vmul.f32 %v3527, %v514
        %v3752 = vmul.f32 %v3528, %v515
        %v3753 = vmul.f32 %v3529, %v516
        %v3754 = vmul.f32 %v3530, %v517
        %v3755 = vsel %vm1774, %v3739, 0.0
        %v3756 = vsel %vm1774, %v3740, 0.0
        %v3757 = vadd.f32 %v3755, %v3756
        %v3758 = vsel %vm1774, %v3741, 0.0
        %v3759 = vadd.f32 %v3757, %v3758
        %v3760 = vsel %vm1774, %v3742, 0.0
        %v3761 = vadd.f32 %v3759, %v3760
        %v3762 = vsel %vm1774, %v3743, 0.0
        %v3763 = vadd.f32 %v3761, %v3762
        %v3764 = vsel %vm1774, %v3744, 0.0
        %v3765 = vadd.f32 %v3763, %v3764
        %v3766 = vsel %vm1774, %v3745, 0.0
        %v3767 = vadd.f32 %v3765, %v3766
        %v3768 = vsel %vm1774, %v3746, 0.0
        %v3769 = vadd.f32 %v3767, %v3768
        %v3770 = vsel %vm1774, %v3747, 0.0
        %v3771 = vadd.f32 %v3769, %v3770
        %v3772 = vsel %vm1774, %v3748, 0.0
        %v3773 = vadd.f32 %v3771, %v3772
        %v3774 = vsel %vm1774, %v3749, 0.0
        %v3775 = vadd.f32 %v3773, %v3774
        %v3776 = vsel %vm1774, %v3750, 0.0
        %v3777 = vadd.f32 %v3775, %v3776
        %v3778 = vsel %vm1774, %v3751, 0.0
        %v3779 = vadd.f32 %v3777, %v3778
        %v3780 = vsel %vm1774, %v3752, 0.0
        %v3781 = vadd.f32 %v3779, %v3780
        %v3782 = vsel %vm1774, %v3753, 0.0
        %v3783 = vadd.f32 %v3781, %v3782
        %v3784 = vsel %vm1774, %v3754, 0.0
        %v3785 = vadd.f32 %v3783, %v3784
        %v3786 = vrot.slane %v3785, 4
        %v3787 = vadd.f32 %v3785, %v3786
        %v3788 = vrot.slane %v3787, 2
        %v3789 = vadd.f32 %v3787, %v3788
        %v3790 = vrot.slane %v3789, 1
        %v3791 = vadd.f32 %v3789, %v3790
        %v3792 = vmul.f32 %v3791, 0.015625
        %v3793 = vsub.f32 %v3515, %v3792
        %v3794 = vsub.f32 %v3516, %v3792
        %v3795 = vsub.f32 %v3517, %v3792
        %v3796 = vsub.f32 %v3518, %v3792
        %v3797 = vsub.f32 %v3519, %v3792
        %v3798 = vsub.f32 %v3520, %v3792
        %v3799 = vsub.f32 %v3521, %v3792
        %v3800 = vsub.f32 %v3522, %v3792
        %v3801 = vsub.f32 %v3523, %v3792
        %v3802 = vsub.f32 %v3524, %v3792
        %v3803 = vsub.f32 %v3525, %v3792
        %v3804 = vsub.f32 %v3526, %v3792
        %v3805 = vsub.f32 %v3527, %v3792
        %v3806 = vsub.f32 %v3528, %v3792
        %v3807 = vsub.f32 %v3529, %v3792
        %v3808 = vsub.f32 %v3530, %v3792
        %v3809 = vmul.f32 %v3793, %v3793
        %v3810 = vmul.f32 %v3794, %v3794
        %v3811 = vmul.f32 %v3795, %v3795
        %v3812 = vmul.f32 %v3796, %v3796
        %v3813 = vmul.f32 %v3797, %v3797
        %v3814 = vmul.f32 %v3798, %v3798
        %v3815 = vmul.f32 %v3799, %v3799
        %v3816 = vmul.f32 %v3800, %v3800
        %v3817 = vmul.f32 %v3801, %v3801
        %v3818 = vmul.f32 %v3802, %v3802
        %v3819 = vmul.f32 %v3803, %v3803
        %v3820 = vmul.f32 %v3804, %v3804
        %v3821 = vmul.f32 %v3805, %v3805
        %v3822 = vmul.f32 %v3806, %v3806
        %v3823 = vmul.f32 %v3807, %v3807
        %v3824 = vmul.f32 %v3808, %v3808
        %v3825 = vmul.f32 %v3809, %v502
        %v3826 = vmul.f32 %v3810, %v503
        %v3827 = vmul.f32 %v3811, %v504
        %v3828 = vmul.f32 %v3812, %v505
        %v3829 = vmul.f32 %v3813, %v506
        %v3830 = vmul.f32 %v3814, %v507
        %v3831 = vmul.f32 %v3815, %v508
        %v3832 = vmul.f32 %v3816, %v509
        %v3833 = vmul.f32 %v3817, %v510
        %v3834 = vmul.f32 %v3818, %v511
        %v3835 = vmul.f32 %v3819, %v512
        %v3836 = vmul.f32 %v3820, %v513
        %v3837 = vmul.f32 %v3821, %v514
        %v3838 = vmul.f32 %v3822, %v515
        %v3839 = vmul.f32 %v3823, %v516
        %v3840 = vmul.f32 %v3824, %v517
        %v3841 = vsel %vm1774, %v3825, 0.0
        %v3842 = vsel %vm1774, %v3826, 0.0
        %v3843 = vadd.f32 %v3841, %v3842
        %v3844 = vsel %vm1774, %v3827, 0.0
        %v3845 = vadd.f32 %v3843, %v3844
        %v3846 = vsel %vm1774, %v3828, 0.0
        %v3847 = vadd.f32 %v3845, %v3846
        %v3848 = vsel %vm1774, %v3829, 0.0
        %v3849 = vadd.f32 %v3847, %v3848
        %v3850 = vsel %vm1774, %v3830, 0.0
        %v3851 = vadd.f32 %v3849, %v3850
        %v3852 = vsel %vm1774, %v3831, 0.0
        %v3853 = vadd.f32 %v3851, %v3852
        %v3854 = vsel %vm1774, %v3832, 0.0
        %v3855 = vadd.f32 %v3853, %v3854
        %v3856 = vsel %vm1774, %v3833, 0.0
        %v3857 = vadd.f32 %v3855, %v3856
        %v3858 = vsel %vm1774, %v3834, 0.0
        %v3859 = vadd.f32 %v3857, %v3858
        %v3860 = vsel %vm1774, %v3835, 0.0
        %v3861 = vadd.f32 %v3859, %v3860
        %v3862 = vsel %vm1774, %v3836, 0.0
        %v3863 = vadd.f32 %v3861, %v3862
        %v3864 = vsel %vm1774, %v3837, 0.0
        %v3865 = vadd.f32 %v3863, %v3864
        %v3866 = vsel %vm1774, %v3838, 0.0
        %v3867 = vadd.f32 %v3865, %v3866
        %v3868 = vsel %vm1774, %v3839, 0.0
        %v3869 = vadd.f32 %v3867, %v3868
        %v3870 = vsel %vm1774, %v3840, 0.0
        %v3871 = vadd.f32 %v3869, %v3870
        %v3872 = vrot.slane %v3871, 4
        %v3873 = vadd.f32 %v3871, %v3872
        %v3874 = vrot.slane %v3873, 2
        %v3875 = vadd.f32 %v3873, %v3874
        %v3876 = vrot.slane %v3875, 1
        %v3877 = vadd.f32 %v3875, %v3876
        %v3878 = vmul.f32 %v3877, 0.015625
        %v3879 = vadd.f32 %v3878, 1e-05
        %v3880 = vrsqrt.pop %v3879
        %v3881 = vmul.f32 %v3793, %v3880
        %v3882 = vmul.f32 %v3794, %v3880
        %v3883 = vmul.f32 %v3795, %v3880
        %v3884 = vmul.f32 %v3796, %v3880
        %v3885 = vmul.f32 %v3797, %v3880
        %v3886 = vmul.f32 %v3798, %v3880
        %v3887 = vmul.f32 %v3799, %v3880
        %v3888 = vmul.f32 %v3800, %v3880
        %v3889 = vmul.f32 %v3801, %v3880
        %v3890 = vmul.f32 %v3802, %v3880
        %v3891 = vmul.f32 %v3803, %v3880
        %v3892 = vmul.f32 %v3804, %v3880
        %v3893 = vmul.f32 %v3805, %v3880
        %v3894 = vmul.f32 %v3806, %v3880
        %v3895 = vmul.f32 %v3807, %v3880
        %v3896 = vmul.f32 %v3808, %v3880
        %s3897 = sld [smem:[#allocation2 + $0x3]]
        %v3898 = vstv %s3897
        %v3899 = vmul.f32 %v3898, %v3515
        %v3900 = vmul.f32 %v3898, %v3516
        %v3901 = vmul.f32 %v3898, %v3517
        %v3902 = vmul.f32 %v3898, %v3518
        %v3903 = vmul.f32 %v3898, %v3519
        %v3904 = vmul.f32 %v3898, %v3520
        %v3905 = vmul.f32 %v3898, %v3521
        %v3906 = vmul.f32 %v3898, %v3522
        %v3907 = vmul.f32 %v3898, %v3523
        %v3908 = vmul.f32 %v3898, %v3524
        %v3909 = vmul.f32 %v3898, %v3525
        %v3910 = vmul.f32 %v3898, %v3526
        %v3911 = vmul.f32 %v3898, %v3527
        %v3912 = vmul.f32 %v3898, %v3528
        %v3913 = vmul.f32 %v3898, %v3529
        %v3914 = vmul.f32 %v3898, %v3530
        %s3915 = sld [smem:[#allocation2 + $0x4]]
        %v3916 = vstv %s3915
        %v3917 = vmul.f32 %v3916, %v3723
        %v3918 = vmul.f32 %v3916, %v3724
        %v3919 = vmul.f32 %v3916, %v3725
        %v3920 = vmul.f32 %v3916, %v3726
        %v3921 = vmul.f32 %v3916, %v3727
        %v3922 = vmul.f32 %v3916, %v3728
        %v3923 = vmul.f32 %v3916, %v3729
        %v3924 = vmul.f32 %v3916, %v3730
        %v3925 = vmul.f32 %v3916, %v3731
        %v3926 = vmul.f32 %v3916, %v3732
        %v3927 = vmul.f32 %v3916, %v3733
        %v3928 = vmul.f32 %v3916, %v3734
        %v3929 = vmul.f32 %v3916, %v3735
        %v3930 = vmul.f32 %v3916, %v3736
        %v3931 = vmul.f32 %v3916, %v3737
        %v3932 = vmul.f32 %v3916, %v3738
        %v3933 = vadd.f32 %v3899, %v3917
        %v3934 = vadd.f32 %v3900, %v3918
        %v3935 = vadd.f32 %v3901, %v3919
        %v3936 = vadd.f32 %v3902, %v3920
        %v3937 = vadd.f32 %v3903, %v3921
        %v3938 = vadd.f32 %v3904, %v3922
        %v3939 = vadd.f32 %v3905, %v3923
        %v3940 = vadd.f32 %v3906, %v3924
        %v3941 = vadd.f32 %v3907, %v3925
        %v3942 = vadd.f32 %v3908, %v3926
        %v3943 = vadd.f32 %v3909, %v3927
        %v3944 = vadd.f32 %v3910, %v3928
        %v3945 = vadd.f32 %v3911, %v3929
        %v3946 = vadd.f32 %v3912, %v3930
        %v3947 = vadd.f32 %v3913, %v3931
        %v3948 = vadd.f32 %v3914, %v3932
        %s3949 = sld [smem:[#allocation2 + $0x5]]
        %v3950 = vstv %s3949
        %v3951 = vmul.f32 %v3950, %v3881
        %v3952 = vmul.f32 %v3950, %v3882
        %v3953 = vmul.f32 %v3950, %v3883
        %v3954 = vmul.f32 %v3950, %v3884
        %v3955 = vmul.f32 %v3950, %v3885
        %v3956 = vmul.f32 %v3950, %v3886
        %v3957 = vmul.f32 %v3950, %v3887
        %v3958 = vmul.f32 %v3950, %v3888
        %v3959 = vmul.f32 %v3950, %v3889
        %v3960 = vmul.f32 %v3950, %v3890
        %v3961 = vmul.f32 %v3950, %v3891
        %v3962 = vmul.f32 %v3950, %v3892
        %v3963 = vmul.f32 %v3950, %v3893
        %v3964 = vmul.f32 %v3950, %v3894
        %v3965 = vmul.f32 %v3950, %v3895
        %v3966 = vmul.f32 %v3950, %v3896
        %v3967 = vadd.f32 %v3933, %v3951
        %v3968 = vadd.f32 %v3934, %v3952
        %v3969 = vadd.f32 %v3935, %v3953
        %v3970 = vadd.f32 %v3936, %v3954
        %v3971 = vadd.f32 %v3937, %v3955
        %v3972 = vadd.f32 %v3938, %v3956
        %v3973 = vadd.f32 %v3939, %v3957
        %v3974 = vadd.f32 %v3940, %v3958
        %v3975 = vadd.f32 %v3941, %v3959
        %v3976 = vadd.f32 %v3942, %v3960
        %v3977 = vadd.f32 %v3943, %v3961
        %v3978 = vadd.f32 %v3944, %v3962
        %v3979 = vadd.f32 %v3945, %v3963
        %v3980 = vadd.f32 %v3946, %v3964
        %v3981 = vadd.f32 %v3947, %v3965
        %v3982 = vadd.f32 %v3948, %v3966
        %v3983 = vlaneseq
        %v3984 = vshrl.u32 %v3983, 7
        %v3985 = vsub.s32 1, %v3984
        %v3986 = vrot.slane %v451, %v3985
        %v3987 = vmul.f32 %v3967, %v3986
        %v3988 = vmul.f32 %v3968, %v3986
        %v3989 = vmul.f32 %v3969, %v3986
        %v3990 = vmul.f32 %v3970, %v3986
        %v3991 = vmul.f32 %v3971, %v3986
        %v3992 = vmul.f32 %v3972, %v3986
        %v3993 = vmul.f32 %v3973, %v3986
        %v3994 = vmul.f32 %v3974, %v3986
        %v3995 = vmul.f32 %v3975, %v3986
        %v3996 = vmul.f32 %v3976, %v3986
        %v3997 = vmul.f32 %v3977, %v3986
        %v3998 = vmul.f32 %v3978, %v3986
        %v3999 = vmul.f32 %v3979, %v3986
        %v4000 = vmul.f32 %v3980, %v3986
        %v4001 = vmul.f32 %v3981, %v3986
        %v4002 = vmul.f32 %v3982, %v3986
        %v4003 = vlaneseq
        %v4004 = vshrl.u32 %v4003, 7
        %v4005 = vsub.s32 1, %v4004
        %v4006 = vrot.slane %v452, %v4005
        %v4007 = vadd.f32 %v3987, %v4006
        %v4008 = vadd.f32 %v3988, %v4006
        %v4009 = vadd.f32 %v3989, %v4006
        %v4010 = vadd.f32 %v3990, %v4006
        %v4011 = vadd.f32 %v3991, %v4006
        %v4012 = vadd.f32 %v3992, %v4006
        %v4013 = vadd.f32 %v3993, %v4006
        %v4014 = vadd.f32 %v3994, %v4006
        %v4015 = vadd.f32 %v3995, %v4006
        %v4016 = vadd.f32 %v3996, %v4006
        %v4017 = vadd.f32 %v3997, %v4006
        %v4018 = vadd.f32 %v3998, %v4006
        %v4019 = vadd.f32 %v3999, %v4006
        %v4020 = vadd.f32 %v4000, %v4006
        %v4021 = vadd.f32 %v4001, %v4006
        %v4022 = vadd.f32 %v4002, %v4006
        %vm4023 = vcmp.gt.f32.partialorder %v4007, 0.0
        %vm4024 = vcmp.gt.f32.partialorder %v4008, 0.0
        %vm4025 = vcmp.gt.f32.partialorder %v4009, 0.0
        %vm4026 = vcmp.gt.f32.partialorder %v4010, 0.0
        %vm4027 = vcmp.gt.f32.partialorder %v4011, 0.0
        %vm4028 = vcmp.gt.f32.partialorder %v4012, 0.0
        %vm4029 = vcmp.gt.f32.partialorder %v4013, 0.0
        %vm4030 = vcmp.gt.f32.partialorder %v4014, 0.0
        %vm4031 = vcmp.gt.f32.partialorder %v4015, 0.0
        %vm4032 = vcmp.gt.f32.partialorder %v4016, 0.0
        %vm4033 = vcmp.gt.f32.partialorder %v4017, 0.0
        %vm4034 = vcmp.gt.f32.partialorder %v4018, 0.0
        %vm4035 = vcmp.gt.f32.partialorder %v4019, 0.0
        %vm4036 = vcmp.gt.f32.partialorder %v4020, 0.0
        %vm4037 = vcmp.gt.f32.partialorder %v4021, 0.0
        %vm4038 = vcmp.gt.f32.partialorder %v4022, 0.0
        %v4039 = vmul.f32 %v4007, 0.2
        %v4040 = vmul.f32 %v4008, 0.2
        %v4041 = vmul.f32 %v4009, 0.2
        %v4042 = vmul.f32 %v4010, 0.2
        %v4043 = vmul.f32 %v4011, 0.2
        %v4044 = vmul.f32 %v4012, 0.2
        %v4045 = vmul.f32 %v4013, 0.2
        %v4046 = vmul.f32 %v4014, 0.2
        %v4047 = vmul.f32 %v4015, 0.2
        %v4048 = vmul.f32 %v4016, 0.2
        %v4049 = vmul.f32 %v4017, 0.2
        %v4050 = vmul.f32 %v4018, 0.2
        %v4051 = vmul.f32 %v4019, 0.2
        %v4052 = vmul.f32 %v4020, 0.2
        %v4053 = vmul.f32 %v4021, 0.2
        %v4054 = vmul.f32 %v4022, 0.2
        %v4055 = vsel %vm4023, %v4007, %v4039
        %v4056 = vsel %vm4024, %v4008, %v4040
        %v4057 = vsel %vm4025, %v4009, %v4041
        %v4058 = vsel %vm4026, %v4010, %v4042
        %v4059 = vsel %vm4027, %v4011, %v4043
        %v4060 = vsel %vm4028, %v4012, %v4044
        %v4061 = vsel %vm4029, %v4013, %v4045
        %v4062 = vsel %vm4030, %v4014, %v4046
        %v4063 = vsel %vm4031, %v4015, %v4047
        %v4064 = vsel %vm4032, %v4016, %v4048
        %v4065 = vsel %vm4033, %v4017, %v4049
        %v4066 = vsel %vm4034, %v4018, %v4050
        %v4067 = vsel %vm4035, %v4019, %v4051
        %v4068 = vsel %vm4036, %v4020, %v4052
        %v4069 = vsel %vm4037, %v4021, %v4053
        %v4070 = vsel %vm4038, %v4022, %v4054
        %v4071 = vpack.c.bf16 %v4056, %v4055
        %v4072 = vpack.c.bf16 %v4058, %v4057
        %v4073 = vpack.c.bf16 %v4060, %v4059
        %v4074 = vpack.c.bf16 %v4062, %v4061
        %v4075 = vpack.c.bf16 %v4064, %v4063
        %v4076 = vpack.c.bf16 %v4066, %v4065
        %v4077 = vpack.c.bf16 %v4068, %v4067
        %v4078 = vpack.c.bf16 %v4070, %v4069
        %v4079 = vld [vmem:[%s6] sm:$0xf]
        %v4080 = vld [vmem:[%s6 + $0x4] sm:$0xf]
        %v4081 = vld [vmem:[%s6 + $0x8] sm:$0xf]
        %v4082 = vld [vmem:[%s6 + $0xc] sm:$0xf]
        %v4087 = vunpack.c.l.b16 %v4079
        %v4088 = vunpack.c.l.b16 %v4080
        %v4089 = vunpack.c.l.b16 %v4081
        %v4090 = vunpack.c.l.b16 %v4082
        %v4091 = vpack.c.b16 %v4088, %v4087
        %v4092 = vpack.c.b16 %v4090, %v4089
        %v4096 = vsel %vm1774, %v4071, 0
        %v4099 = vsel %vm1774, %v4072, 0
        %v4102 = vsel %vm1774, %v4073, 0
        %v4105 = vsel %vm1774, %v4074, 0
        %v4108 = vsel %vm1774, %v4075, 0
        %v4111 = vsel %vm1774, %v4076, 0
        %v4114 = vsel %vm1774, %v4077, 0
        %v4117 = vsel %vm1774, %v4078, 0
        %4119 = vmatprep.subr.bf16.mxu0 0
        %4120 = vmatpush1.bf16.msra.mxu0 %v4091
        %4121 = vmatprep.subr.bf16.mxu0 0
        %4122 = vmatpush1.bf16.msra.mxu0 %v4092
        %4123 = vmatprep.subr.bf16.mxu0 0
        %4124 = vmatpush1.bf16.msra.mxu0 0
        %4125 = vmatprep.subr.bf16.mxu0 0
        %4126 = vmatpush1.bf16.msra.mxu0 0
        %4127 = vmatprep.subr.bf16.mxu0 0
        %4128 = vmatpush1.bf16.msra.mxu0 0
        %4129 = vmatprep.subr.bf16.mxu0 0
        %4130 = vmatpush1.bf16.msra.mxu0 0
        %4131 = vmatprep.subr.bf16.mxu0 0
        %4132 = vmatpush1.bf16.msra.mxu0 0
        %4133 = vmatprep.subr.bf16.mxu0 0
        %4134 = vmatpush1.bf16.msra.mxu0 0
        %4135 = vmatprep.subr.bf16.mxu0 0
        %4136 = vmatpush1.bf16.msra.mxu0 0
        %4137 = vmatprep.subr.bf16.mxu0 0
        %4138 = vmatpush1.bf16.msra.mxu0 0
        %4139 = vmatprep.subr.bf16.mxu0 0
        %4140 = vmatpush1.bf16.msra.mxu0 0
        %4141 = vmatprep.subr.bf16.mxu0 0
        %4142 = vmatpush1.bf16.msra.mxu0 0
        %4143 = vmatprep.subr.bf16.mxu0 0
        %4144 = vmatpush1.bf16.msra.mxu0 0
        %4145 = vmatprep.subr.bf16.mxu0 0
        %4146 = vmatpush1.bf16.msra.mxu0 0
        %4147 = vmatprep.subr.bf16.mxu0 0
        %4148 = vmatpush1.bf16.msra.mxu0 0
        %4149 = vmatprep.subr.bf16.mxu0 0
        %4150 = vmatpush1.bf16.msra.mxu0 0
        %4151 = vmatprep.mubr.bf16.mxu0 0
        %4152 = vmatmul.mubr.bf16.gmra.mrb[0].mxu0 %v4096
        %v4153 = vpop.f32.mrb[0].mxu0
        %v4154 = vadd.f32 0.0, %v4153
        %v4155 = vpop.f32.mrb[0].mxu0
        %v4156 = vpop.f32.mrb[0].mxu0
        %v4157 = vadd.f32 0.0, %v4156
        %v4158 = vpop.f32.mrb[0].mxu0
        %4159 = vmatprep.mubr.bf16.mxu0 0
        %4160 = vmatmul.mubr.bf16.gmra.mrb[0].mxu0 %v4099
        %v4161 = vpop.f32.mrb[0].mxu0
        %v4162 = vadd.f32 0.0, %v4161
        %v4163 = vpop.f32.mrb[0].mxu0
        %v4164 = vpop.f32.mrb[0].mxu0
        %v4165 = vadd.f32 0.0, %v4164
        %v4166 = vpop.f32.mrb[0].mxu0
        %4167 = vmatprep.mubr.bf16.mxu0 0
        %4168 = vmatmul.mubr.bf16.gmra.mrb[0].mxu0 %v4102
        %v4169 = vpop.f32.mrb[0].mxu0
        %v4170 = vadd.f32 0.0, %v4169
        %v4171 = vpop.f32.mrb[0].mxu0
        %v4172 = vpop.f32.mrb[0].mxu0
        %v4173 = vadd.f32 0.0, %v4172
        %v4174 = vpop.f32.mrb[0].mxu0
        %4175 = vmatprep.mubr.bf16.mxu0 0
        %4176 = vmatmul.mubr.bf16.gmra.mrb[0].mxu0 %v4105
        %v4177 = vpop.f32.mrb[0].mxu0
        %v4178 = vadd.f32 0.0, %v4177
        %v4179 = vpop.f32.mrb[0].mxu0
        %v4180 = vpop.f32.mrb[0].mxu0
        %v4181 = vadd.f32 0.0, %v4180
        %v4182 = vpop.f32.mrb[0].mxu0
        %4183 = vmatprep.mubr.bf16.mxu0 0
        %4184 = vmatmul.mubr.bf16.gmra.mrb[0].mxu0 %v4108
        %v4185 = vpop.f32.mrb[0].mxu0
        %v4186 = vadd.f32 0.0, %v4185
        %v4187 = vpop.f32.mrb[0].mxu0
        %v4188 = vpop.f32.mrb[0].mxu0
        %v4189 = vadd.f32 0.0, %v4188
        %v4190 = vpop.f32.mrb[0].mxu0
        %4191 = vmatprep.mubr.bf16.mxu0 0
        %4192 = vmatmul.mubr.bf16.gmra.mrb[0].mxu0 %v4111
        %v4193 = vpop.f32.mrb[0].mxu0
        %v4194 = vadd.f32 0.0, %v4193
        %v4195 = vpop.f32.mrb[0].mxu0
        %v4196 = vpop.f32.mrb[0].mxu0
        %v4197 = vadd.f32 0.0, %v4196
        %v4198 = vpop.f32.mrb[0].mxu0
        %4199 = vmatprep.mubr.bf16.mxu0 0
        %4200 = vmatmul.mubr.bf16.gmra.mrb[0].mxu0 %v4114
        %v4201 = vpop.f32.mrb[0].mxu0
        %v4202 = vadd.f32 0.0, %v4201
        %v4203 = vpop.f32.mrb[0].mxu0
        %v4204 = vpop.f32.mrb[0].mxu0
        %v4205 = vadd.f32 0.0, %v4204
        %v4206 = vpop.f32.mrb[0].mxu0
        %4207 = vmatprep.mubr.bf16.mxu0 0
        %4208 = vmatmul.mubr.bf16.gmra.mrb[0].mxu0 %v4117
        %v4209 = vpop.f32.mrb[0].mxu0
        %v4210 = vadd.f32 0.0, %v4209
        %v4211 = vpop.f32.mrb[0].mxu0
        %v4212 = vpop.f32.mrb[0].mxu0
        %v4213 = vadd.f32 0.0, %v4212
        %v4214 = vpop.f32.mrb[0].mxu0
        %4215 = vdwg.mxu0
        %v4216 = vld [vmem:[%s7] sm:$0x1]
        %v4218 = vsel %vm1774, %v4216, 0
        %4220 = vmatprep.subr.bf16.mxu0 0
        %4221 = vmatpush1.bf16.xpose.msra.mxu0 %v4096
        %4222 = vmatprep.subr.bf16.mxu0 0
        %4223 = vmatpush1.bf16.xpose.msra.mxu0 %v4099
        %4224 = vmatprep.subr.bf16.mxu0 0
        %4225 = vmatpush1.bf16.xpose.msra.mxu0 %v4102
        %4226 = vmatprep.subr.bf16.mxu0 0
        %4227 = vmatpush1.bf16.xpose.msra.mxu0 %v4105
        %4228 = vmatprep.subr.bf16.mxu0 0
        %4229 = vmatpush1.bf16.xpose.msra.mxu0 %v4108
        %4230 = vmatprep.subr.bf16.mxu0 0
        %4231 = vmatpush1.bf16.xpose.msra.mxu0 %v4111
        %4232 = vmatprep.subr.bf16.mxu0 0
        %4233 = vmatpush1.bf16.xpose.msra.mxu0 %v4114
        %4234 = vmatprep.subr.bf16.mxu0 0
        %4235 = vmatpush1.bf16.xpose.msra.mxu0 %v4117
        %4236 = vmatprep.subr.bf16.mxu0 0
        %4237 = vmatpush1.bf16.xpose.msra.mxu0 0
        %4238 = vmatprep.subr.bf16.mxu0 0
        %4239 = vmatpush1.bf16.xpose.msra.mxu0 0
        %4240 = vmatprep.subr.bf16.mxu0 0
        %4241 = vmatpush1.bf16.xpose.msra.mxu0 0
        %4242 = vmatprep.subr.bf16.mxu0 0
        %4243 = vmatpush1.bf16.xpose.msra.mxu0 0
        %4244 = vmatprep.subr.bf16.mxu0 0
        %4245 = vmatpush1.bf16.xpose.msra.mxu0 0
        %4246 = vmatprep.subr.bf16.mxu0 0
        %4247 = vmatpush1.bf16.xpose.msra.mxu0 0
        %4248 = vmatprep.subr.bf16.mxu0 0
        %4249 = vmatpush1.bf16.xpose.msra.mxu0 0
        %4250 = vmatprep.subr.bf16.mxu0 0
        %4251 = vmatpush1.bf16.xpose.msra.mxu0 0
        %4252 = vmatprep.mubr.bf16.mxu0 0
        %4253 = vmatmul.mubr.bf16.gmra.mrb[0].mxu0 %v4218
        %v4254 = vpop.f32.mrb[0].mxu0
        %v4255 = vadd.f32 0.0, %v4254
        %v4256 = vpop.f32.mrb[0].mxu0
        %v4257 = vpop.f32.mrb[0].mxu0
        %v4258 = vpop.f32.mrb[0].mxu0
        %4259 = vdwg.mxu0
        %v4260 = vpack.c.bf16 %v4157, %v4154
        %v4261 = vpack.c.bf16 %v4165, %v4162
        %v4262 = vpack.c.bf16 %v4173, %v4170
        %v4263 = vpack.c.bf16 %v4181, %v4178
        %v4264 = vpack.c.bf16 %v4189, %v4186
        %v4265 = vpack.c.bf16 %v4197, %v4194
        %v4266 = vpack.c.bf16 %v4205, %v4202
        %v4267 = vpack.c.bf16 %v4213, %v4210
        %4269 = vset.pattern.permute.xlu0 32
        %4270 = vperm.xlu0 %4269, %v4154
        %v4271 = vpop.permute.xlu0 %4270
        %4274 = vset.pattern.permute.xlu0 32
        %4275 = vperm.xlu0 %4274, %v4157
        %v4276 = vpop.permute.xlu0 %4275
        %4279 = vset.pattern.permute.xlu0 32
        %4280 = vperm.xlu0 %4279, %v4162
        %v4281 = vpop.permute.xlu0 %4280
        %4284 = vset.pattern.permute.xlu0 32
        %4285 = vperm.xlu0 %4284, %v4165
        %v4286 = vpop.permute.xlu0 %4285
        %4289 = vset.pattern.permute.xlu0 32
        %4290 = vperm.xlu0 %4289, %v4170
        %v4291 = vpop.permute.xlu0 %4290
        %4294 = vset.pattern.permute.xlu0 32
        %4295 = vperm.xlu0 %4294, %v4173
        %v4296 = vpop.permute.xlu0 %4295
        %4299 = vset.pattern.permute.xlu0 32
        %4300 = vperm.xlu0 %4299, %v4178
        %v4301 = vpop.permute.xlu0 %4300
        %4304 = vset.pattern.permute.xlu0 32
        %4305 = vperm.xlu0 %4304, %v4181
        %v4306 = vpop.permute.xlu0 %4305
        %4309 = vset.pattern.permute.xlu0 32
        %4310 = vperm.xlu0 %4309, %v4186
        %v4311 = vpop.permute.xlu0 %4310
        %4314 = vset.pattern.permute.xlu0 32
        %4315 = vperm.xlu0 %4314, %v4189
        %v4316 = vpop.permute.xlu0 %4315
        %4319 = vset.pattern.permute.xlu0 32
        %4320 = vperm.xlu0 %4319, %v4194
        %v4321 = vpop.permute.xlu0 %4320
        %4324 = vset.pattern.permute.xlu0 32
        %4325 = vperm.xlu0 %4324, %v4197
        %v4326 = vpop.permute.xlu0 %4325
        %4329 = vset.pattern.permute.xlu0 32
        %4330 = vperm.xlu0 %4329, %v4202
        %v4331 = vpop.permute.xlu0 %4330
        %4334 = vset.pattern.permute.xlu0 32
        %4335 = vperm.xlu0 %4334, %v4205
        %v4336 = vpop.permute.xlu0 %4335
        %4339 = vset.pattern.permute.xlu0 32
        %4340 = vperm.xlu0 %4339, %v4210
        %v4341 = vpop.permute.xlu0 %4340
        %4344 = vset.pattern.permute.xlu0 32
        %4345 = vperm.xlu0 %4344, %v4213
        %v4346 = vpop.permute.xlu0 %4345
        %v4348 = vlaneseq
        %v4349 = vshrl.u32 %v4348, 7
        %v4350 = vsub.s32 0, %v4349
        %v4351 = vrot.slane %v4255, %v4350
        %v4352 = vadd.f32 %v4271, %v4351
        %v4353 = vadd.f32 %v4276, %v4351
        %v4354 = vadd.f32 %v4281, %v4351
        %v4355 = vadd.f32 %v4286, %v4351
        %v4356 = vadd.f32 %v4291, %v4351
        %v4357 = vadd.f32 %v4296, %v4351
        %v4358 = vadd.f32 %v4301, %v4351
        %v4359 = vadd.f32 %v4306, %v4351
        %v4360 = vadd.f32 %v4311, %v4351
        %v4361 = vadd.f32 %v4316, %v4351
        %v4362 = vadd.f32 %v4321, %v4351
        %v4363 = vadd.f32 %v4326, %v4351
        %v4364 = vadd.f32 %v4331, %v4351
        %v4365 = vadd.f32 %v4336, %v4351
        %v4366 = vadd.f32 %v4341, %v4351
        %v4367 = vadd.f32 %v4346, %v4351
        %vm4368 = vcmp.gt.f32.partialorder %v4352, 0.0
        %vm4369 = vcmp.gt.f32.partialorder %v4353, 0.0
        %vm4370 = vcmp.gt.f32.partialorder %v4354, 0.0
        %vm4371 = vcmp.gt.f32.partialorder %v4355, 0.0
        %vm4372 = vcmp.gt.f32.partialorder %v4356, 0.0
        %vm4373 = vcmp.gt.f32.partialorder %v4357, 0.0
        %vm4374 = vcmp.gt.f32.partialorder %v4358, 0.0
        %vm4375 = vcmp.gt.f32.partialorder %v4359, 0.0
        %vm4376 = vcmp.gt.f32.partialorder %v4360, 0.0
        %vm4377 = vcmp.gt.f32.partialorder %v4361, 0.0
        %vm4378 = vcmp.gt.f32.partialorder %v4362, 0.0
        %vm4379 = vcmp.gt.f32.partialorder %v4363, 0.0
        %vm4380 = vcmp.gt.f32.partialorder %v4364, 0.0
        %vm4381 = vcmp.gt.f32.partialorder %v4365, 0.0
        %vm4382 = vcmp.gt.f32.partialorder %v4366, 0.0
        %vm4383 = vcmp.gt.f32.partialorder %v4367, 0.0
        %v4384 = vmul.f32 %v4352, 0.2
        %v4385 = vmul.f32 %v4353, 0.2
        %v4386 = vmul.f32 %v4354, 0.2
        %v4387 = vmul.f32 %v4355, 0.2
        %v4388 = vmul.f32 %v4356, 0.2
        %v4389 = vmul.f32 %v4357, 0.2
        %v4390 = vmul.f32 %v4358, 0.2
        %v4391 = vmul.f32 %v4359, 0.2
        %v4392 = vmul.f32 %v4360, 0.2
        %v4393 = vmul.f32 %v4361, 0.2
        %v4394 = vmul.f32 %v4362, 0.2
        %v4395 = vmul.f32 %v4363, 0.2
        %v4396 = vmul.f32 %v4364, 0.2
        %v4397 = vmul.f32 %v4365, 0.2
        %v4398 = vmul.f32 %v4366, 0.2
        %v4399 = vmul.f32 %v4367, 0.2
        %v4400 = vsel %vm4368, %v4352, %v4384
        %v4401 = vsel %vm4369, %v4353, %v4385
        %v4402 = vsel %vm4370, %v4354, %v4386
        %v4403 = vsel %vm4371, %v4355, %v4387
        %v4404 = vsel %vm4372, %v4356, %v4388
        %v4405 = vsel %vm4373, %v4357, %v4389
        %v4406 = vsel %vm4374, %v4358, %v4390
        %v4407 = vsel %vm4375, %v4359, %v4391
        %v4408 = vsel %vm4376, %v4360, %v4392
        %v4409 = vsel %vm4377, %v4361, %v4393
        %v4410 = vsel %vm4378, %v4362, %v4394
        %v4411 = vsel %vm4379, %v4363, %v4395
        %v4412 = vsel %vm4380, %v4364, %v4396
        %v4413 = vsel %vm4381, %v4365, %v4397
        %v4414 = vsel %vm4382, %v4366, %v4398
        %v4415 = vsel %vm4383, %v4367, %v4399
        %v4416 = vadd.f32 %v4400, %v435
        %v4417 = vadd.f32 %v4401, %v436
        %v4418 = vadd.f32 %v4402, %v437
        %v4419 = vadd.f32 %v4403, %v438
        %v4420 = vadd.f32 %v4404, %v439
        %v4421 = vadd.f32 %v4405, %v440
        %v4422 = vadd.f32 %v4406, %v441
        %v4423 = vadd.f32 %v4407, %v442
        %v4424 = vadd.f32 %v4408, %v443
        %v4425 = vadd.f32 %v4409, %v444
        %v4426 = vadd.f32 %v4410, %v445
        %v4427 = vadd.f32 %v4411, %v446
        %v4428 = vadd.f32 %v4412, %v447
        %v4429 = vadd.f32 %v4413, %v448
        %v4430 = vadd.f32 %v4414, %v449
        %v4431 = vadd.f32 %v4415, %v450
        %4432 = vmax.xlane.f32.xlu0 %v4416
        %v4433 = vpop.xlane.xlu0 %4432
        %4434 = vmax.xlane.f32.xlu0 %v4417
        %v4435 = vpop.xlane.xlu0 %4434
        %4436 = vmax.xlane.f32.xlu0 %v4418
        %v4437 = vpop.xlane.xlu0 %4436
        %4438 = vmax.xlane.f32.xlu0 %v4419
        %v4439 = vpop.xlane.xlu0 %4438
        %4440 = vmax.xlane.f32.xlu0 %v4420
        %v4441 = vpop.xlane.xlu0 %4440
        %4442 = vmax.xlane.f32.xlu0 %v4421
        %v4443 = vpop.xlane.xlu0 %4442
        %4444 = vmax.xlane.f32.xlu0 %v4422
        %v4445 = vpop.xlane.xlu0 %4444
        %4446 = vmax.xlane.f32.xlu0 %v4423
        %v4447 = vpop.xlane.xlu0 %4446
        %4448 = vmax.xlane.f32.xlu0 %v4424
        %v4449 = vpop.xlane.xlu0 %4448
        %4450 = vmax.xlane.f32.xlu0 %v4425
        %v4451 = vpop.xlane.xlu0 %4450
        %4452 = vmax.xlane.f32.xlu0 %v4426
        %v4453 = vpop.xlane.xlu0 %4452
        %4454 = vmax.xlane.f32.xlu0 %v4427
        %v4455 = vpop.xlane.xlu0 %4454
        %4456 = vmax.xlane.f32.xlu0 %v4428
        %v4457 = vpop.xlane.xlu0 %4456
        %4458 = vmax.xlane.f32.xlu0 %v4429
        %v4459 = vpop.xlane.xlu0 %4458
        %4460 = vmax.xlane.f32.xlu0 %v4430
        %v4461 = vpop.xlane.xlu0 %4460
        %4462 = vmax.xlane.f32.xlu0 %v4431
        %v4463 = vpop.xlane.xlu0 %4462
        %v4464 = vsub.f32 %v4416, %v4433
        %v4465 = vsub.f32 %v4417, %v4435
        %v4466 = vsub.f32 %v4418, %v4437
        %v4467 = vsub.f32 %v4419, %v4439
        %v4468 = vsub.f32 %v4420, %v4441
        %v4469 = vsub.f32 %v4421, %v4443
        %v4470 = vsub.f32 %v4422, %v4445
        %v4471 = vsub.f32 %v4423, %v4447
        %v4472 = vsub.f32 %v4424, %v4449
        %v4473 = vsub.f32 %v4425, %v4451
        %v4474 = vsub.f32 %v4426, %v4453
        %v4475 = vsub.f32 %v4427, %v4455
        %v4476 = vsub.f32 %v4428, %v4457
        %v4477 = vsub.f32 %v4429, %v4459
        %v4478 = vsub.f32 %v4430, %v4461
        %v4479 = vsub.f32 %v4431, %v4463
        %v4480 = vmul.f32 %v4464, 1.442695
        %v4481 = vpow.pop %v4480
        %v4482 = vmul.f32 %v4465, 1.442695
        %v4483 = vpow.pop %v4482
        %v4484 = vmul.f32 %v4466, 1.442695
        %v4485 = vpow.pop %v4484
        %v4486 = vmul.f32 %v4467, 1.442695
        %v4487 = vpow.pop %v4486
        %v4488 = vmul.f32 %v4468, 1.442695
        %v4489 = vpow.pop %v4488
        %v4490 = vmul.f32 %v4469, 1.442695
        %v4491 = vpow.pop %v4490
        %v4492 = vmul.f32 %v4470, 1.442695
        %v4493 = vpow.pop %v4492
        %v4494 = vmul.f32 %v4471, 1.442695
        %v4495 = vpow.pop %v4494
        %v4496 = vmul.f32 %v4472, 1.442695
        %v4497 = vpow.pop %v4496
        %v4498 = vmul.f32 %v4473, 1.442695
        %v4499 = vpow.pop %v4498
        %v4500 = vmul.f32 %v4474, 1.442695
        %v4501 = vpow.pop %v4500
        %v4502 = vmul.f32 %v4475, 1.442695
        %v4503 = vpow.pop %v4502
        %v4504 = vmul.f32 %v4476, 1.442695
        %v4505 = vpow.pop %v4504
        %v4506 = vmul.f32 %v4477, 1.442695
        %v4507 = vpow.pop %v4506
        %v4508 = vmul.f32 %v4478, 1.442695
        %v4509 = vpow.pop %v4508
        %v4510 = vmul.f32 %v4479, 1.442695
        %v4511 = vpow.pop %v4510
        %4512 = vadd.xlane.f32.xlu0 %v4481
        %v4513 = vpop.xlane.xlu0 %4512
        %4514 = vadd.xlane.f32.xlu0 %v4483
        %v4515 = vpop.xlane.xlu0 %4514
        %4516 = vadd.xlane.f32.xlu0 %v4485
        %v4517 = vpop.xlane.xlu0 %4516
        %4518 = vadd.xlane.f32.xlu0 %v4487
        %v4519 = vpop.xlane.xlu0 %4518
        %4520 = vadd.xlane.f32.xlu0 %v4489
        %v4521 = vpop.xlane.xlu0 %4520
        %4522 = vadd.xlane.f32.xlu0 %v4491
        %v4523 = vpop.xlane.xlu0 %4522
        %4524 = vadd.xlane.f32.xlu0 %v4493
        %v4525 = vpop.xlane.xlu0 %4524
        %4526 = vadd.xlane.f32.xlu0 %v4495
        %v4527 = vpop.xlane.xlu0 %4526
        %4528 = vadd.xlane.f32.xlu0 %v4497
        %v4529 = vpop.xlane.xlu0 %4528
        %4530 = vadd.xlane.f32.xlu0 %v4499
        %v4531 = vpop.xlane.xlu0 %4530
        %4532 = vadd.xlane.f32.xlu0 %v4501
        %v4533 = vpop.xlane.xlu0 %4532
        %4534 = vadd.xlane.f32.xlu0 %v4503
        %v4535 = vpop.xlane.xlu0 %4534
        %4536 = vadd.xlane.f32.xlu0 %v4505
        %v4537 = vpop.xlane.xlu0 %4536
        %4538 = vadd.xlane.f32.xlu0 %v4507
        %v4539 = vpop.xlane.xlu0 %4538
        %4540 = vadd.xlane.f32.xlu0 %v4509
        %v4541 = vpop.xlane.xlu0 %4540
        %4542 = vadd.xlane.f32.xlu0 %v4511
        %v4543 = vpop.xlane.xlu0 %4542
        %v4544 = vpack.c.bf16 %v4483, %v4481
        %v4545 = vpack.c.bf16 %v4487, %v4485
        %v4546 = vpack.c.bf16 %v4491, %v4489
        %v4547 = vpack.c.bf16 %v4495, %v4493
        %v4548 = vpack.c.bf16 %v4499, %v4497
        %v4549 = vpack.c.bf16 %v4503, %v4501
        %v4550 = vpack.c.bf16 %v4507, %v4505
        %v4551 = vpack.c.bf16 %v4511, %v4509
        %4552 = vmatprep.subr.bf16.mxu0 0
        %4553 = vmatpush1.bf16.msra.mxu0 %v4260
        %4554 = vmatprep.subr.bf16.mxu0 0
        %4555 = vmatpush1.bf16.msra.mxu0 %v4261
        %4556 = vmatprep.subr.bf16.mxu0 0
        %4557 = vmatpush1.bf16.msra.mxu0 %v4262
        %4558 = vmatprep.subr.bf16.mxu0 0
        %4559 = vmatpush1.bf16.msra.mxu0 %v4263
        %4560 = vmatprep.subr.bf16.mxu0 0
        %4561 = vmatpush1.bf16.msra.mxu0 %v4264
        %4562 = vmatprep.subr.bf16.mxu0 0
        %4563 = vmatpush1.bf16.msra.mxu0 %v4265
        %4564 = vmatprep.subr.bf16.mxu0 0
        %4565 = vmatpush1.bf16.msra.mxu0 %v4266
        %4566 = vmatprep.subr.bf16.mxu0 0
        %4567 = vmatpush1.bf16.msra.mxu0 %v4267
        %4568 = vmatprep.subr.bf16.mxu0 0
        %4569 = vmatpush1.bf16.msra.mxu0 0
        %4570 = vmatprep.subr.bf16.mxu0 0
        %4571 = vmatpush1.bf16.msra.mxu0 0
        %4572 = vmatprep.subr.bf16.mxu0 0
        %4573 = vmatpush1.bf16.msra.mxu0 0
        %4574 = vmatprep.subr.bf16.mxu0 0
        %4575 = vmatpush1.bf16.msra.mxu0 0
        %4576 = vmatprep.subr.bf16.mxu0 0
        %4577 = vmatpush1.bf16.msra.mxu0 0
        %4578 = vmatprep.subr.bf16.mxu0 0
        %4579 = vmatpush1.bf16.msra.mxu0 0
        %4580 = vmatprep.subr.bf16.mxu0 0
        %4581 = vmatpush1.bf16.msra.mxu0 0
        %4582 = vmatprep.subr.bf16.mxu0 0
        %4583 = vmatpush1.bf16.msra.mxu0 0
        %4584 = vmatprep.mubr.bf16.mxu0 0
        %4585 = vmatmul.mubr.bf16.gmra.mrb[0].mxu0 %v4544
        %v4586 = vpop.f32.mrb[0].mxu0
        %v4587 = vadd.f32 0.0, %v4586
        %v4588 = vpop.f32.mrb[0].mxu0
        %v4589 = vpop.f32.mrb[0].mxu0
        %v4590 = vadd.f32 0.0, %v4589
        %v4591 = vpop.f32.mrb[0].mxu0
        %4592 = vmatprep.mubr.bf16.mxu0 0
        %4593 = vmatmul.mubr.bf16.gmra.mrb[0].mxu0 %v4545
        %v4594 = vpop.f32.mrb[0].mxu0
        %v4595 = vadd.f32 0.0, %v4594
        %v4596 = vpop.f32.mrb[0].mxu0
        %v4597 = vpop.f32.mrb[0].mxu0
        %v4598 = vadd.f32 0.0, %v4597
        %v4599 = vpop.f32.mrb[0].mxu0
        %4600 = vmatprep.mubr.bf16.mxu0 0
        %4601 = vmatmul.mubr.bf16.gmra.mrb[0].mxu0 %v4546
        %v4602 = vpop.f32.mrb[0].mxu0
        %v4603 = vadd.f32 0.0, %v4602
        %v4604 = vpop.f32.mrb[0].mxu0
        %v4605 = vpop.f32.mrb[0].mxu0
        %v4606 = vadd.f32 0.0, %v4605
        %v4607 = vpop.f32.mrb[0].mxu0
        %4608 = vmatprep.mubr.bf16.mxu0 0
        %4609 = vmatmul.mubr.bf16.gmra.mrb[0].mxu0 %v4547
        %v4610 = vpop.f32.mrb[0].mxu0
        %v4611 = vadd.f32 0.0, %v4610
        %v4612 = vpop.f32.mrb[0].mxu0
        %v4613 = vpop.f32.mrb[0].mxu0
        %v4614 = vadd.f32 0.0, %v4613
        %v4615 = vpop.f32.mrb[0].mxu0
        %4616 = vmatprep.mubr.bf16.mxu0 0
        %4617 = vmatmul.mubr.bf16.gmra.mrb[0].mxu0 %v4548
        %v4618 = vpop.f32.mrb[0].mxu0
        %v4619 = vadd.f32 0.0, %v4618
        %v4620 = vpop.f32.mrb[0].mxu0
        %v4621 = vpop.f32.mrb[0].mxu0
        %v4622 = vadd.f32 0.0, %v4621
        %v4623 = vpop.f32.mrb[0].mxu0
        %4624 = vmatprep.mubr.bf16.mxu0 0
        %4625 = vmatmul.mubr.bf16.gmra.mrb[0].mxu0 %v4549
        %v4626 = vpop.f32.mrb[0].mxu0
        %v4627 = vadd.f32 0.0, %v4626
        %v4628 = vpop.f32.mrb[0].mxu0
        %v4629 = vpop.f32.mrb[0].mxu0
        %v4630 = vadd.f32 0.0, %v4629
        %v4631 = vpop.f32.mrb[0].mxu0
        %4632 = vmatprep.mubr.bf16.mxu0 0
        %4633 = vmatmul.mubr.bf16.gmra.mrb[0].mxu0 %v4550
        %v4634 = vpop.f32.mrb[0].mxu0
        %v4635 = vadd.f32 0.0, %v4634
        %v4636 = vpop.f32.mrb[0].mxu0
        %v4637 = vpop.f32.mrb[0].mxu0
        %v4638 = vadd.f32 0.0, %v4637
        %v4639 = vpop.f32.mrb[0].mxu0
        %4640 = vmatprep.mubr.bf16.mxu0 0
        %4641 = vmatmul.mubr.bf16.gmra.mrb[0].mxu0 %v4551
        %v4642 = vpop.f32.mrb[0].mxu0
        %v4643 = vadd.f32 0.0, %v4642
        %v4644 = vpop.f32.mrb[0].mxu0
        %v4645 = vpop.f32.mrb[0].mxu0
        %v4646 = vadd.f32 0.0, %v4645
        %v4647 = vpop.f32.mrb[0].mxu0
        %4648 = vdwg.mxu0
        %v4649 = vrcp.pop %v4513
        %v4650 = vrcp.pop %v4515
        %v4651 = vrcp.pop %v4517
        %v4652 = vrcp.pop %v4519
        %v4653 = vrcp.pop %v4521
        %v4654 = vrcp.pop %v4523
        %v4655 = vrcp.pop %v4525
        %v4656 = vrcp.pop %v4527
        %v4657 = vrcp.pop %v4529
        %v4658 = vrcp.pop %v4531
        %v4659 = vrcp.pop %v4533
        %v4660 = vrcp.pop %v4535
        %v4661 = vrcp.pop %v4537
        %v4662 = vrcp.pop %v4539
        %v4663 = vrcp.pop %v4541
        %v4664 = vrcp.pop %v4543
        %v4665 = vmul.f32 %v4587, %v4649
        %v4666 = vmul.f32 %v4590, %v4650
        %v4667 = vmul.f32 %v4595, %v4651
        %v4668 = vmul.f32 %v4598, %v4652
        %v4669 = vmul.f32 %v4603, %v4653
        %v4670 = vmul.f32 %v4606, %v4654
        %v4671 = vmul.f32 %v4611, %v4655
        %v4672 = vmul.f32 %v4614, %v4656
        %v4673 = vmul.f32 %v4619, %v4657
        %v4674 = vmul.f32 %v4622, %v4658
        %v4675 = vmul.f32 %v4627, %v4659
        %v4676 = vmul.f32 %v4630, %v4660
        %v4677 = vmul.f32 %v4635, %v4661
        %v4678 = vmul.f32 %v4638, %v4662
        %v4679 = vmul.f32 %v4643, %v4663
        %v4680 = vmul.f32 %v4646, %v4664
        %v4681 = vadd.f32 %v4665, %v4055
        %v4682 = vadd.f32 %v4666, %v4056
        %v4683 = vadd.f32 %v4667, %v4057
        %v4684 = vadd.f32 %v4668, %v4058
        %v4685 = vadd.f32 %v4669, %v4059
        %v4686 = vadd.f32 %v4670, %v4060
        %v4687 = vadd.f32 %v4671, %v4061
        %v4688 = vadd.f32 %v4672, %v4062
        %v4689 = vadd.f32 %v4673, %v4063
        %v4690 = vadd.f32 %v4674, %v4064
        %v4691 = vadd.f32 %v4675, %v4065
        %v4692 = vadd.f32 %v4676, %v4066
        %v4693 = vadd.f32 %v4677, %v4067
        %v4694 = vadd.f32 %v4678, %v4068
        %v4695 = vadd.f32 %v4679, %v4069
        %v4696 = vadd.f32 %v4680, %v4070
        %4697 = vset.pattern.permute.xlu0 33
        %4698 = vperm.xlu0 %4697, %v4154
        %v4699 = vpop.permute.xlu0 %4698
        %4701 = vset.pattern.permute.xlu0 33
        %4702 = vperm.xlu0 %4701, %v4157
        %v4703 = vpop.permute.xlu0 %4702
        %4705 = vset.pattern.permute.xlu0 33
        %4706 = vperm.xlu0 %4705, %v4162
        %v4707 = vpop.permute.xlu0 %4706
        %4709 = vset.pattern.permute.xlu0 33
        %4710 = vperm.xlu0 %4709, %v4165
        %v4711 = vpop.permute.xlu0 %4710
        %4713 = vset.pattern.permute.xlu0 33
        %4714 = vperm.xlu0 %4713, %v4170
        %v4715 = vpop.permute.xlu0 %4714
        %4717 = vset.pattern.permute.xlu0 33
        %4718 = vperm.xlu0 %4717, %v4173
        %v4719 = vpop.permute.xlu0 %4718
        %4721 = vset.pattern.permute.xlu0 33
        %4722 = vperm.xlu0 %4721, %v4178
        %v4723 = vpop.permute.xlu0 %4722
        %4725 = vset.pattern.permute.xlu0 33
        %4726 = vperm.xlu0 %4725, %v4181
        %v4727 = vpop.permute.xlu0 %4726
        %4729 = vset.pattern.permute.xlu0 33
        %4730 = vperm.xlu0 %4729, %v4186
        %v4731 = vpop.permute.xlu0 %4730
        %4733 = vset.pattern.permute.xlu0 33
        %4734 = vperm.xlu0 %4733, %v4189
        %v4735 = vpop.permute.xlu0 %4734
        %4737 = vset.pattern.permute.xlu0 33
        %4738 = vperm.xlu0 %4737, %v4194
        %v4739 = vpop.permute.xlu0 %4738
        %4741 = vset.pattern.permute.xlu0 33
        %4742 = vperm.xlu0 %4741, %v4197
        %v4743 = vpop.permute.xlu0 %4742
        %4745 = vset.pattern.permute.xlu0 33
        %4746 = vperm.xlu0 %4745, %v4202
        %v4747 = vpop.permute.xlu0 %4746
        %4749 = vset.pattern.permute.xlu0 33
        %4750 = vperm.xlu0 %4749, %v4205
        %v4751 = vpop.permute.xlu0 %4750
        %4753 = vset.pattern.permute.xlu0 33
        %4754 = vperm.xlu0 %4753, %v4210
        %v4755 = vpop.permute.xlu0 %4754
        %4757 = vset.pattern.permute.xlu0 33
        %4758 = vperm.xlu0 %4757, %v4213
        %v4759 = vpop.permute.xlu0 %4758
        %v4761 = vlaneseq
        %v4762 = vshrl.u32 %v4761, 7
        %v4763 = vsub.s32 1, %v4762
        %v4764 = vrot.slane %v4255, %v4763
        %v4765 = vadd.f32 %v4699, %v4764
        %v4766 = vadd.f32 %v4703, %v4764
        %v4767 = vadd.f32 %v4707, %v4764
        %v4768 = vadd.f32 %v4711, %v4764
        %v4769 = vadd.f32 %v4715, %v4764
        %v4770 = vadd.f32 %v4719, %v4764
        %v4771 = vadd.f32 %v4723, %v4764
        %v4772 = vadd.f32 %v4727, %v4764
        %v4773 = vadd.f32 %v4731, %v4764
        %v4774 = vadd.f32 %v4735, %v4764
        %v4775 = vadd.f32 %v4739, %v4764
        %v4776 = vadd.f32 %v4743, %v4764
        %v4777 = vadd.f32 %v4747, %v4764
        %v4778 = vadd.f32 %v4751, %v4764
        %v4779 = vadd.f32 %v4755, %v4764
        %v4780 = vadd.f32 %v4759, %v4764
        %vm4781 = vcmp.gt.f32.partialorder %v4765, 0.0
        %vm4782 = vcmp.gt.f32.partialorder %v4766, 0.0
        %vm4783 = vcmp.gt.f32.partialorder %v4767, 0.0
        %vm4784 = vcmp.gt.f32.partialorder %v4768, 0.0
        %vm4785 = vcmp.gt.f32.partialorder %v4769, 0.0
        %vm4786 = vcmp.gt.f32.partialorder %v4770, 0.0
        %vm4787 = vcmp.gt.f32.partialorder %v4771, 0.0
        %vm4788 = vcmp.gt.f32.partialorder %v4772, 0.0
        %vm4789 = vcmp.gt.f32.partialorder %v4773, 0.0
        %vm4790 = vcmp.gt.f32.partialorder %v4774, 0.0
        %vm4791 = vcmp.gt.f32.partialorder %v4775, 0.0
        %vm4792 = vcmp.gt.f32.partialorder %v4776, 0.0
        %vm4793 = vcmp.gt.f32.partialorder %v4777, 0.0
        %vm4794 = vcmp.gt.f32.partialorder %v4778, 0.0
        %vm4795 = vcmp.gt.f32.partialorder %v4779, 0.0
        %vm4796 = vcmp.gt.f32.partialorder %v4780, 0.0
        %v4797 = vmul.f32 %v4765, 0.2
        %v4798 = vmul.f32 %v4766, 0.2
        %v4799 = vmul.f32 %v4767, 0.2
        %v4800 = vmul.f32 %v4768, 0.2
        %v4801 = vmul.f32 %v4769, 0.2
        %v4802 = vmul.f32 %v4770, 0.2
        %v4803 = vmul.f32 %v4771, 0.2
        %v4804 = vmul.f32 %v4772, 0.2
        %v4805 = vmul.f32 %v4773, 0.2
        %v4806 = vmul.f32 %v4774, 0.2
        %v4807 = vmul.f32 %v4775, 0.2
        %v4808 = vmul.f32 %v4776, 0.2
        %v4809 = vmul.f32 %v4777, 0.2
        %v4810 = vmul.f32 %v4778, 0.2
        %v4811 = vmul.f32 %v4779, 0.2
        %v4812 = vmul.f32 %v4780, 0.2
        %v4813 = vsel %vm4781, %v4765, %v4797
        %v4814 = vsel %vm4782, %v4766, %v4798
        %v4815 = vsel %vm4783, %v4767, %v4799
        %v4816 = vsel %vm4784, %v4768, %v4800
        %v4817 = vsel %vm4785, %v4769, %v4801
        %v4818 = vsel %vm4786, %v4770, %v4802
        %v4819 = vsel %vm4787, %v4771, %v4803
        %v4820 = vsel %vm4788, %v4772, %v4804
        %v4821 = vsel %vm4789, %v4773, %v4805
        %v4822 = vsel %vm4790, %v4774, %v4806
        %v4823 = vsel %vm4791, %v4775, %v4807
        %v4824 = vsel %vm4792, %v4776, %v4808
        %v4825 = vsel %vm4793, %v4777, %v4809
        %v4826 = vsel %vm4794, %v4778, %v4810
        %v4827 = vsel %vm4795, %v4779, %v4811
        %v4828 = vsel %vm4796, %v4780, %v4812
        %v4829 = vadd.f32 %v4813, %v435
        %v4830 = vadd.f32 %v4814, %v436
        %v4831 = vadd.f32 %v4815, %v437
        %v4832 = vadd.f32 %v4816, %v438
        %v4833 = vadd.f32 %v4817, %v439
        %v4834 = vadd.f32 %v4818, %v440
        %v4835 = vadd.f32 %v4819, %v441
        %v4836 = vadd.f32 %v4820, %v442
        %v4837 = vadd.f32 %v4821, %v443
        %v4838 = vadd.f32 %v4822, %v444
        %v4839 = vadd.f32 %v4823, %v445
        %v4840 = vadd.f32 %v4824, %v446
        %v4841 = vadd.f32 %v4825, %v447
        %v4842 = vadd.f32 %v4826, %v448
        %v4843 = vadd.f32 %v4827, %v449
        %v4844 = vadd.f32 %v4828, %v450
        %4845 = vmax.xlane.f32.xlu0 %v4829
        %v4846 = vpop.xlane.xlu0 %4845
        %4847 = vmax.xlane.f32.xlu0 %v4830
        %v4848 = vpop.xlane.xlu0 %4847
        %4849 = vmax.xlane.f32.xlu0 %v4831
        %v4850 = vpop.xlane.xlu0 %4849
        %4851 = vmax.xlane.f32.xlu0 %v4832
        %v4852 = vpop.xlane.xlu0 %4851
        %4853 = vmax.xlane.f32.xlu0 %v4833
        %v4854 = vpop.xlane.xlu0 %4853
        %4855 = vmax.xlane.f32.xlu0 %v4834
        %v4856 = vpop.xlane.xlu0 %4855
        %4857 = vmax.xlane.f32.xlu0 %v4835
        %v4858 = vpop.xlane.xlu0 %4857
        %4859 = vmax.xlane.f32.xlu0 %v4836
        %v4860 = vpop.xlane.xlu0 %4859
        %4861 = vmax.xlane.f32.xlu0 %v4837
        %v4862 = vpop.xlane.xlu0 %4861
        %4863 = vmax.xlane.f32.xlu0 %v4838
        %v4864 = vpop.xlane.xlu0 %4863
        %4865 = vmax.xlane.f32.xlu0 %v4839
        %v4866 = vpop.xlane.xlu0 %4865
        %4867 = vmax.xlane.f32.xlu0 %v4840
        %v4868 = vpop.xlane.xlu0 %4867
        %4869 = vmax.xlane.f32.xlu0 %v4841
        %v4870 = vpop.xlane.xlu0 %4869
        %4871 = vmax.xlane.f32.xlu0 %v4842
        %v4872 = vpop.xlane.xlu0 %4871
        %4873 = vmax.xlane.f32.xlu0 %v4843
        %v4874 = vpop.xlane.xlu0 %4873
        %4875 = vmax.xlane.f32.xlu0 %v4844
        %v4876 = vpop.xlane.xlu0 %4875
        %v4877 = vsub.f32 %v4829, %v4846
        %v4878 = vsub.f32 %v4830, %v4848
        %v4879 = vsub.f32 %v4831, %v4850
        %v4880 = vsub.f32 %v4832, %v4852
        %v4881 = vsub.f32 %v4833, %v4854
        %v4882 = vsub.f32 %v4834, %v4856
        %v4883 = vsub.f32 %v4835, %v4858
        %v4884 = vsub.f32 %v4836, %v4860
        %v4885 = vsub.f32 %v4837, %v4862
        %v4886 = vsub.f32 %v4838, %v4864
        %v4887 = vsub.f32 %v4839, %v4866
        %v4888 = vsub.f32 %v4840, %v4868
        %v4889 = vsub.f32 %v4841, %v4870
        %v4890 = vsub.f32 %v4842, %v4872
        %v4891 = vsub.f32 %v4843, %v4874
        %v4892 = vsub.f32 %v4844, %v4876
        %v4893 = vmul.f32 %v4877, 1.442695
        %v4894 = vpow.pop %v4893
        %v4895 = vmul.f32 %v4878, 1.442695
        %v4896 = vpow.pop %v4895
        %v4897 = vmul.f32 %v4879, 1.442695
        %v4898 = vpow.pop %v4897
        %v4899 = vmul.f32 %v4880, 1.442695
        %v4900 = vpow.pop %v4899
        %v4901 = vmul.f32 %v4881, 1.442695
        %v4902 = vpow.pop %v4901
        %v4903 = vmul.f32 %v4882, 1.442695
        %v4904 = vpow.pop %v4903
        %v4905 = vmul.f32 %v4883, 1.442695
        %v4906 = vpow.pop %v4905
        %v4907 = vmul.f32 %v4884, 1.442695
        %v4908 = vpow.pop %v4907
        %v4909 = vmul.f32 %v4885, 1.442695
        %v4910 = vpow.pop %v4909
        %v4911 = vmul.f32 %v4886, 1.442695
        %v4912 = vpow.pop %v4911
        %v4913 = vmul.f32 %v4887, 1.442695
        %v4914 = vpow.pop %v4913
        %v4915 = vmul.f32 %v4888, 1.442695
        %v4916 = vpow.pop %v4915
        %v4917 = vmul.f32 %v4889, 1.442695
        %v4918 = vpow.pop %v4917
        %v4919 = vmul.f32 %v4890, 1.442695
        %v4920 = vpow.pop %v4919
        %v4921 = vmul.f32 %v4891, 1.442695
        %v4922 = vpow.pop %v4921
        %v4923 = vmul.f32 %v4892, 1.442695
        %v4924 = vpow.pop %v4923
        %4925 = vadd.xlane.f32.xlu0 %v4894
        %v4926 = vpop.xlane.xlu0 %4925
        %4927 = vadd.xlane.f32.xlu0 %v4896
        %v4928 = vpop.xlane.xlu0 %4927
        %4929 = vadd.xlane.f32.xlu0 %v4898
        %v4930 = vpop.xlane.xlu0 %4929
        %4931 = vadd.xlane.f32.xlu0 %v4900
        %v4932 = vpop.xlane.xlu0 %4931
        %4933 = vadd.xlane.f32.xlu0 %v4902
        %v4934 = vpop.xlane.xlu0 %4933
        %4935 = vadd.xlane.f32.xlu0 %v4904
        %v4936 = vpop.xlane.xlu0 %4935
        %4937 = vadd.xlane.f32.xlu0 %v4906
        %v4938 = vpop.xlane.xlu0 %4937
        %4939 = vadd.xlane.f32.xlu0 %v4908
        %v4940 = vpop.xlane.xlu0 %4939
        %4941 = vadd.xlane.f32.xlu0 %v4910
        %v4942 = vpop.xlane.xlu0 %4941
        %4943 = vadd.xlane.f32.xlu0 %v4912
        %v4944 = vpop.xlane.xlu0 %4943
        %4945 = vadd.xlane.f32.xlu0 %v4914
        %v4946 = vpop.xlane.xlu0 %4945
        %4947 = vadd.xlane.f32.xlu0 %v4916
        %v4948 = vpop.xlane.xlu0 %4947
        %4949 = vadd.xlane.f32.xlu0 %v4918
        %v4950 = vpop.xlane.xlu0 %4949
        %4951 = vadd.xlane.f32.xlu0 %v4920
        %v4952 = vpop.xlane.xlu0 %4951
        %4953 = vadd.xlane.f32.xlu0 %v4922
        %v4954 = vpop.xlane.xlu0 %4953
        %4955 = vadd.xlane.f32.xlu0 %v4924
        %v4956 = vpop.xlane.xlu0 %4955
        %v4957 = vpack.c.bf16 %v4896, %v4894
        %v4958 = vpack.c.bf16 %v4900, %v4898
        %v4959 = vpack.c.bf16 %v4904, %v4902
        %v4960 = vpack.c.bf16 %v4908, %v4906
        %v4961 = vpack.c.bf16 %v4912, %v4910
        %v4962 = vpack.c.bf16 %v4916, %v4914
        %v4963 = vpack.c.bf16 %v4920, %v4918
        %v4964 = vpack.c.bf16 %v4924, %v4922
        %4973 = vrot.lane.b32.xlu0 %v4260, 112
        %v4974 = vpop.permute.xlu0 %4973
        %4975 = vrot.lane.b32.xlu0 %v4261, 112
        %v4976 = vpop.permute.xlu0 %4975
        %4977 = vrot.lane.b32.xlu0 %v4262, 112
        %v4978 = vpop.permute.xlu0 %4977
        %4979 = vrot.lane.b32.xlu0 %v4263, 112
        %v4980 = vpop.permute.xlu0 %4979
        %4981 = vrot.lane.b32.xlu0 %v4264, 112
        %v4982 = vpop.permute.xlu0 %4981
        %4983 = vrot.lane.b32.xlu0 %v4265, 112
        %v4984 = vpop.permute.xlu0 %4983
        %4985 = vrot.lane.b32.xlu0 %v4266, 112
        %v4986 = vpop.permute.xlu0 %4985
        %4987 = vrot.lane.b32.xlu0 %v4267, 112
        %v4988 = vpop.permute.xlu0 %4987
        %4997 = vmatprep.subr.bf16.mxu0 0
        %4998 = vmatpush1.bf16.msra.mxu0 %v4974
        %4999 = vmatprep.subr.bf16.mxu0 0
        %5000 = vmatpush1.bf16.msra.mxu0 %v4976
        %5001 = vmatprep.subr.bf16.mxu0 0
        %5002 = vmatpush1.bf16.msra.mxu0 %v4978
        %5003 = vmatprep.subr.bf16.mxu0 0
        %5004 = vmatpush1.bf16.msra.mxu0 %v4980
        %5005 = vmatprep.subr.bf16.mxu0 0
        %5006 = vmatpush1.bf16.msra.mxu0 %v4982
        %5007 = vmatprep.subr.bf16.mxu0 0
        %5008 = vmatpush1.bf16.msra.mxu0 %v4984
        %5009 = vmatprep.subr.bf16.mxu0 0
        %5010 = vmatpush1.bf16.msra.mxu0 %v4986
        %5011 = vmatprep.subr.bf16.mxu0 0
        %5012 = vmatpush1.bf16.msra.mxu0 %v4988
        %5013 = vmatprep.subr.bf16.mxu0 0
        %5014 = vmatpush1.bf16.msra.mxu0 0
        %5015 = vmatprep.subr.bf16.mxu0 0
        %5016 = vmatpush1.bf16.msra.mxu0 0
        %5017 = vmatprep.subr.bf16.mxu0 0
        %5018 = vmatpush1.bf16.msra.mxu0 0
        %5019 = vmatprep.subr.bf16.mxu0 0
        %5020 = vmatpush1.bf16.msra.mxu0 0
        %5021 = vmatprep.subr.bf16.mxu0 0
        %5022 = vmatpush1.bf16.msra.mxu0 0
        %5023 = vmatprep.subr.bf16.mxu0 0
        %5024 = vmatpush1.bf16.msra.mxu0 0
        %5025 = vmatprep.subr.bf16.mxu0 0
        %5026 = vmatpush1.bf16.msra.mxu0 0
        %5027 = vmatprep.subr.bf16.mxu0 0
        %5028 = vmatpush1.bf16.msra.mxu0 0
        %5029 = vmatprep.mubr.bf16.mxu0 0
        %5030 = vmatmul.mubr.bf16.gmra.mrb[0].mxu0 %v4957
        %v5031 = vpop.f32.mrb[0].mxu0
        %v5032 = vadd.f32 0.0, %v5031
        %v5033 = vpop.f32.mrb[0].mxu0
        %v5034 = vpop.f32.mrb[0].mxu0
        %v5035 = vadd.f32 0.0, %v5034
        %v5036 = vpop.f32.mrb[0].mxu0
        %5037 = vmatprep.mubr.bf16.mxu0 0
        %5038 = vmatmul.mubr.bf16.gmra.mrb[0].mxu0 %v4958
        %v5039 = vpop.f32.mrb[0].mxu0
        %v5040 = vadd.f32 0.0, %v5039
        %v5041 = vpop.f32.mrb[0].mxu0
        %v5042 = vpop.f32.mrb[0].mxu0
        %v5043 = vadd.f32 0.0, %v5042
        %v5044 = vpop.f32.mrb[0].mxu0
        %5045 = vmatprep.mubr.bf16.mxu0 0
        %5046 = vmatmul.mubr.bf16.gmra.mrb[0].mxu0 %v4959
        %v5047 = vpop.f32.mrb[0].mxu0
        %v5048 = vadd.f32 0.0, %v5047
        %v5049 = vpop.f32.mrb[0].mxu0
        %v5050 = vpop.f32.mrb[0].mxu0
        %v5051 = vadd.f32 0.0, %v5050
        %v5052 = vpop.f32.mrb[0].mxu0
        %5053 = vmatprep.mubr.bf16.mxu0 0
        %5054 = vmatmul.mubr.bf16.gmra.mrb[0].mxu0 %v4960
        %v5055 = vpop.f32.mrb[0].mxu0
        %v5056 = vadd.f32 0.0, %v5055
        %v5057 = vpop.f32.mrb[0].mxu0
        %v5058 = vpop.f32.mrb[0].mxu0
        %v5059 = vadd.f32 0.0, %v5058
        %v5060 = vpop.f32.mrb[0].mxu0
        %5061 = vmatprep.mubr.bf16.mxu0 0
        %5062 = vmatmul.mubr.bf16.gmra.mrb[0].mxu0 %v4961
        %v5063 = vpop.f32.mrb[0].mxu0
        %v5064 = vadd.f32 0.0, %v5063
        %v5065 = vpop.f32.mrb[0].mxu0
        %v5066 = vpop.f32.mrb[0].mxu0
        %v5067 = vadd.f32 0.0, %v5066
        %v5068 = vpop.f32.mrb[0].mxu0
        %5069 = vmatprep.mubr.bf16.mxu0 0
        %5070 = vmatmul.mubr.bf16.gmra.mrb[0].mxu0 %v4962
        %v5071 = vpop.f32.mrb[0].mxu0
        %v5072 = vadd.f32 0.0, %v5071
        %v5073 = vpop.f32.mrb[0].mxu0
        %v5074 = vpop.f32.mrb[0].mxu0
        %v5075 = vadd.f32 0.0, %v5074
        %v5076 = vpop.f32.mrb[0].mxu0
        %5077 = vmatprep.mubr.bf16.mxu0 0
        %5078 = vmatmul.mubr.bf16.gmra.mrb[0].mxu0 %v4963
        %v5079 = vpop.f32.mrb[0].mxu0
        %v5080 = vadd.f32 0.0, %v5079
        %v5081 = vpop.f32.mrb[0].mxu0
        %v5082 = vpop.f32.mrb[0].mxu0
        %v5083 = vadd.f32 0.0, %v5082
        %v5084 = vpop.f32.mrb[0].mxu0
        %5085 = vmatprep.mubr.bf16.mxu0 0
        %5086 = vmatmul.mubr.bf16.gmra.mrb[0].mxu0 %v4964
        %v5087 = vpop.f32.mrb[0].mxu0
        %v5088 = vadd.f32 0.0, %v5087
        %v5089 = vpop.f32.mrb[0].mxu0
        %v5090 = vpop.f32.mrb[0].mxu0
        %v5091 = vadd.f32 0.0, %v5090
        %v5092 = vpop.f32.mrb[0].mxu0
        %5093 = vdwg.mxu0
        %v5094 = vrcp.pop %v4926
        %v5095 = vrcp.pop %v4928
        %v5096 = vrcp.pop %v4930
        %v5097 = vrcp.pop %v4932
        %v5098 = vrcp.pop %v4934
        %v5099 = vrcp.pop %v4936
        %v5100 = vrcp.pop %v4938
        %v5101 = vrcp.pop %v4940
        %v5102 = vrcp.pop %v4942
        %v5103 = vrcp.pop %v4944
        %v5104 = vrcp.pop %v4946
        %v5105 = vrcp.pop %v4948
        %v5106 = vrcp.pop %v4950
        %v5107 = vrcp.pop %v4952
        %v5108 = vrcp.pop %v4954
        %v5109 = vrcp.pop %v4956
        %v5110 = vmul.f32 %v5032, %v5094
        %v5111 = vmul.f32 %v5035, %v5095
        %v5112 = vmul.f32 %v5040, %v5096
        %v5113 = vmul.f32 %v5043, %v5097
        %v5114 = vmul.f32 %v5048, %v5098
        %v5115 = vmul.f32 %v5051, %v5099
        %v5116 = vmul.f32 %v5056, %v5100
        %v5117 = vmul.f32 %v5059, %v5101
        %v5118 = vmul.f32 %v5064, %v5102
        %v5119 = vmul.f32 %v5067, %v5103
        %v5120 = vmul.f32 %v5072, %v5104
        %v5121 = vmul.f32 %v5075, %v5105
        %v5122 = vmul.f32 %v5080, %v5106
        %v5123 = vmul.f32 %v5083, %v5107
        %v5124 = vmul.f32 %v5088, %v5108
        %v5125 = vmul.f32 %v5091, %v5109
        %5142 = vrot.lane.b32.xlu0 %v4055, 112
        %v5143 = vpop.permute.xlu0 %5142
        %5144 = vrot.lane.b32.xlu0 %v4056, 112
        %v5145 = vpop.permute.xlu0 %5144
        %5146 = vrot.lane.b32.xlu0 %v4057, 112
        %v5147 = vpop.permute.xlu0 %5146
        %5148 = vrot.lane.b32.xlu0 %v4058, 112
        %v5149 = vpop.permute.xlu0 %5148
        %5150 = vrot.lane.b32.xlu0 %v4059, 112
        %v5151 = vpop.permute.xlu0 %5150
        %5152 = vrot.lane.b32.xlu0 %v4060, 112
        %v5153 = vpop.permute.xlu0 %5152
        %5154 = vrot.lane.b32.xlu0 %v4061, 112
        %v5155 = vpop.permute.xlu0 %5154
        %5156 = vrot.lane.b32.xlu0 %v4062, 112
        %v5157 = vpop.permute.xlu0 %5156
        %5158 = vrot.lane.b32.xlu0 %v4063, 112
        %v5159 = vpop.permute.xlu0 %5158
        %5160 = vrot.lane.b32.xlu0 %v4064, 112
        %v5161 = vpop.permute.xlu0 %5160
        %5162 = vrot.lane.b32.xlu0 %v4065, 112
        %v5163 = vpop.permute.xlu0 %5162
        %5164 = vrot.lane.b32.xlu0 %v4066, 112
        %v5165 = vpop.permute.xlu0 %5164
        %5166 = vrot.lane.b32.xlu0 %v4067, 112
        %v5167 = vpop.permute.xlu0 %5166
        %5168 = vrot.lane.b32.xlu0 %v4068, 112
        %v5169 = vpop.permute.xlu0 %5168
        %5170 = vrot.lane.b32.xlu0 %v4069, 112
        %v5171 = vpop.permute.xlu0 %5170
        %5172 = vrot.lane.b32.xlu0 %v4070, 112
        %v5173 = vpop.permute.xlu0 %5172
        %v5190 = vadd.f32 %v5110, %v5143
        %v5191 = vadd.f32 %v5111, %v5145
        %v5192 = vadd.f32 %v5112, %v5147
        %v5193 = vadd.f32 %v5113, %v5149
        %v5194 = vadd.f32 %v5114, %v5151
        %v5195 = vadd.f32 %v5115, %v5153
        %v5196 = vadd.f32 %v5116, %v5155
        %v5197 = vadd.f32 %v5117, %v5157
        %v5198 = vadd.f32 %v5118, %v5159
        %v5199 = vadd.f32 %v5119, %v5161
        %v5200 = vadd.f32 %v5120, %v5163
        %v5201 = vadd.f32 %v5121, %v5165
        %v5202 = vadd.f32 %v5122, %v5167
        %v5203 = vadd.f32 %v5123, %v5169
        %v5204 = vadd.f32 %v5124, %v5171
        %v5205 = vadd.f32 %v5125, %v5173
        %5222 = vrot.lane.b32.xlu0 %v5190, 16
        %v5223 = vpop.permute.xlu0 %5222
        %5224 = vrot.lane.b32.xlu0 %v5191, 16
        %v5225 = vpop.permute.xlu0 %5224
        %5226 = vrot.lane.b32.xlu0 %v5192, 16
        %v5227 = vpop.permute.xlu0 %5226
        %5228 = vrot.lane.b32.xlu0 %v5193, 16
        %v5229 = vpop.permute.xlu0 %5228
        %5230 = vrot.lane.b32.xlu0 %v5194, 16
        %v5231 = vpop.permute.xlu0 %5230
        %5232 = vrot.lane.b32.xlu0 %v5195, 16
        %v5233 = vpop.permute.xlu0 %5232
        %5234 = vrot.lane.b32.xlu0 %v5196, 16
        %v5235 = vpop.permute.xlu0 %5234
        %5236 = vrot.lane.b32.xlu0 %v5197, 16
        %v5237 = vpop.permute.xlu0 %5236
        %5238 = vrot.lane.b32.xlu0 %v5198, 16
        %v5239 = vpop.permute.xlu0 %5238
        %5240 = vrot.lane.b32.xlu0 %v5199, 16
        %v5241 = vpop.permute.xlu0 %5240
        %5242 = vrot.lane.b32.xlu0 %v5200, 16
        %v5243 = vpop.permute.xlu0 %5242
        %5244 = vrot.lane.b32.xlu0 %v5201, 16
        %v5245 = vpop.permute.xlu0 %5244
        %5246 = vrot.lane.b32.xlu0 %v5202, 16
        %v5247 = vpop.permute.xlu0 %5246
        %5248 = vrot.lane.b32.xlu0 %v5203, 16
        %v5249 = vpop.permute.xlu0 %5248
        %5250 = vrot.lane.b32.xlu0 %v5204, 16
        %v5251 = vpop.permute.xlu0 %5250
        %5252 = vrot.lane.b32.xlu0 %v5205, 16
        %v5253 = vpop.permute.xlu0 %5252
        %v5270 = vsel %vm550, %v4681, %v5223
        %v5271 = vsel %vm550, %v4682, %v5225
        %v5272 = vsel %vm550, %v4683, %v5227
        %v5273 = vsel %vm550, %v4684, %v5229
        %v5274 = vsel %vm550, %v4685, %v5231
        %v5275 = vsel %vm550, %v4686, %v5233
        %v5276 = vsel %vm550, %v4687, %v5235
        %v5277 = vsel %vm550, %v4688, %v5237
        %v5278 = vsel %vm550, %v4689, %v5239
        %v5279 = vsel %vm550, %v4690, %v5241
        %v5280 = vsel %vm550, %v4691, %v5243
        %v5281 = vsel %vm550, %v4692, %v5245
        %v5282 = vsel %vm550, %v4693, %v5247
        %v5283 = vsel %vm550, %v4694, %v5249
        %v5284 = vsel %vm550, %v4695, %v5251
        %v5285 = vsel %vm550, %v4696, %v5253
        %v5286 = vsel %vm1774, %v5270, 0.0
        %5287 = vadd.xlane.f32.xlu0 %v5286
        %v5288 = vpop.xlane.xlu0 %5287
        %v5289 = vsel %vm1774, %v5271, 0.0
        %5290 = vadd.xlane.f32.xlu0 %v5289
        %v5291 = vpop.xlane.xlu0 %5290
        %v5292 = vsel %vm1774, %v5272, 0.0
        %5293 = vadd.xlane.f32.xlu0 %v5292
        %v5294 = vpop.xlane.xlu0 %5293
        %v5295 = vsel %vm1774, %v5273, 0.0
        %5296 = vadd.xlane.f32.xlu0 %v5295
        %v5297 = vpop.xlane.xlu0 %5296
        %v5298 = vsel %vm1774, %v5274, 0.0
        %5299 = vadd.xlane.f32.xlu0 %v5298
        %v5300 = vpop.xlane.xlu0 %5299
        %v5301 = vsel %vm1774, %v5275, 0.0
        %5302 = vadd.xlane.f32.xlu0 %v5301
        %v5303 = vpop.xlane.xlu0 %5302
        %v5304 = vsel %vm1774, %v5276, 0.0
        %5305 = vadd.xlane.f32.xlu0 %v5304
        %v5306 = vpop.xlane.xlu0 %5305
        %v5307 = vsel %vm1774, %v5277, 0.0
        %5308 = vadd.xlane.f32.xlu0 %v5307
        %v5309 = vpop.xlane.xlu0 %5308
        %v5310 = vsel %vm1774, %v5278, 0.0
        %5311 = vadd.xlane.f32.xlu0 %v5310
        %v5312 = vpop.xlane.xlu0 %5311
        %v5313 = vsel %vm1774, %v5279, 0.0
        %5314 = vadd.xlane.f32.xlu0 %v5313
        %v5315 = vpop.xlane.xlu0 %5314
        %v5316 = vsel %vm1774, %v5280, 0.0
        %5317 = vadd.xlane.f32.xlu0 %v5316
        %v5318 = vpop.xlane.xlu0 %5317
        %v5319 = vsel %vm1774, %v5281, 0.0
        %5320 = vadd.xlane.f32.xlu0 %v5319
        %v5321 = vpop.xlane.xlu0 %5320
        %v5322 = vsel %vm1774, %v5282, 0.0
        %5323 = vadd.xlane.f32.xlu0 %v5322
        %v5324 = vpop.xlane.xlu0 %5323
        %v5325 = vsel %vm1774, %v5283, 0.0
        %5326 = vadd.xlane.f32.xlu0 %v5325
        %v5327 = vpop.xlane.xlu0 %5326
        %v5328 = vsel %vm1774, %v5284, 0.0
        %5329 = vadd.xlane.f32.xlu0 %v5328
        %v5330 = vpop.xlane.xlu0 %5329
        %v5331 = vsel %vm1774, %v5285, 0.0
        %5332 = vadd.xlane.f32.xlu0 %v5331
        %v5333 = vpop.xlane.xlu0 %5332
        %v5334 = vmul.f32 %v5288, %v1823
        %v5335 = vmul.f32 %v5291, %v1823
        %v5336 = vmul.f32 %v5294, %v1823
        %v5337 = vmul.f32 %v5297, %v1823
        %v5338 = vmul.f32 %v5300, %v1823
        %v5339 = vmul.f32 %v5303, %v1823
        %v5340 = vmul.f32 %v5306, %v1823
        %v5341 = vmul.f32 %v5309, %v1823
        %v5342 = vmul.f32 %v5312, %v1823
        %v5343 = vmul.f32 %v5315, %v1823
        %v5344 = vmul.f32 %v5318, %v1823
        %v5345 = vmul.f32 %v5321, %v1823
        %v5346 = vmul.f32 %v5324, %v1823
        %v5347 = vmul.f32 %v5327, %v1823
        %v5348 = vmul.f32 %v5330, %v1823
        %v5349 = vmul.f32 %v5333, %v1823
        %v5350 = vsub.f32 %v5270, %v5334
        %v5351 = vsub.f32 %v5271, %v5335
        %v5352 = vsub.f32 %v5272, %v5336
        %v5353 = vsub.f32 %v5273, %v5337
        %v5354 = vsub.f32 %v5274, %v5338
        %v5355 = vsub.f32 %v5275, %v5339
        %v5356 = vsub.f32 %v5276, %v5340
        %v5357 = vsub.f32 %v5277, %v5341
        %v5358 = vsub.f32 %v5278, %v5342
        %v5359 = vsub.f32 %v5279, %v5343
        %v5360 = vsub.f32 %v5280, %v5344
        %v5361 = vsub.f32 %v5281, %v5345
        %v5362 = vsub.f32 %v5282, %v5346
        %v5363 = vsub.f32 %v5283, %v5347
        %v5364 = vsub.f32 %v5284, %v5348
        %v5365 = vsub.f32 %v5285, %v5349
        %v5366 = vmul.f32 %v5350, %v5350
        %v5367 = vmul.f32 %v5351, %v5351
        %v5368 = vmul.f32 %v5352, %v5352
        %v5369 = vmul.f32 %v5353, %v5353
        %v5370 = vmul.f32 %v5354, %v5354
        %v5371 = vmul.f32 %v5355, %v5355
        %v5372 = vmul.f32 %v5356, %v5356
        %v5373 = vmul.f32 %v5357, %v5357
        %v5374 = vmul.f32 %v5358, %v5358
        %v5375 = vmul.f32 %v5359, %v5359
        %v5376 = vmul.f32 %v5360, %v5360
        %v5377 = vmul.f32 %v5361, %v5361
        %v5378 = vmul.f32 %v5362, %v5362
        %v5379 = vmul.f32 %v5363, %v5363
        %v5380 = vmul.f32 %v5364, %v5364
        %v5381 = vmul.f32 %v5365, %v5365
        %v5382 = vsel %vm1774, %v5366, 0.0
        %5383 = vadd.xlane.f32.xlu0 %v5382
        %v5384 = vpop.xlane.xlu0 %5383
        %v5385 = vsel %vm1774, %v5367, 0.0
        %5386 = vadd.xlane.f32.xlu0 %v5385
        %v5387 = vpop.xlane.xlu0 %5386
        %v5388 = vsel %vm1774, %v5368, 0.0
        %5389 = vadd.xlane.f32.xlu0 %v5388
        %v5390 = vpop.xlane.xlu0 %5389
        %v5391 = vsel %vm1774, %v5369, 0.0
        %5392 = vadd.xlane.f32.xlu0 %v5391
        %v5393 = vpop.xlane.xlu0 %5392
        %v5394 = vsel %vm1774, %v5370, 0.0
        %5395 = vadd.xlane.f32.xlu0 %v5394
        %v5396 = vpop.xlane.xlu0 %5395
        %v5397 = vsel %vm1774, %v5371, 0.0
        %5398 = vadd.xlane.f32.xlu0 %v5397
        %v5399 = vpop.xlane.xlu0 %5398
        %v5400 = vsel %vm1774, %v5372, 0.0
        %5401 = vadd.xlane.f32.xlu0 %v5400
        %v5402 = vpop.xlane.xlu0 %5401
        %v5403 = vsel %vm1774, %v5373, 0.0
        %5404 = vadd.xlane.f32.xlu0 %v5403
        %v5405 = vpop.xlane.xlu0 %5404
        %v5406 = vsel %vm1774, %v5374, 0.0
        %5407 = vadd.xlane.f32.xlu0 %v5406
        %v5408 = vpop.xlane.xlu0 %5407
        %v5409 = vsel %vm1774, %v5375, 0.0
        %5410 = vadd.xlane.f32.xlu0 %v5409
        %v5411 = vpop.xlane.xlu0 %5410
        %v5412 = vsel %vm1774, %v5376, 0.0
        %5413 = vadd.xlane.f32.xlu0 %v5412
        %v5414 = vpop.xlane.xlu0 %5413
        %v5415 = vsel %vm1774, %v5377, 0.0
        %5416 = vadd.xlane.f32.xlu0 %v5415
        %v5417 = vpop.xlane.xlu0 %5416
        %v5418 = vsel %vm1774, %v5378, 0.0
        %5419 = vadd.xlane.f32.xlu0 %v5418
        %v5420 = vpop.xlane.xlu0 %5419
        %v5421 = vsel %vm1774, %v5379, 0.0
        %5422 = vadd.xlane.f32.xlu0 %v5421
        %v5423 = vpop.xlane.xlu0 %5422
        %v5424 = vsel %vm1774, %v5380, 0.0
        %5425 = vadd.xlane.f32.xlu0 %v5424
        %v5426 = vpop.xlane.xlu0 %5425
        %v5427 = vsel %vm1774, %v5381, 0.0
        %5428 = vadd.xlane.f32.xlu0 %v5427
        %v5429 = vpop.xlane.xlu0 %5428
        %v5430 = vmul.f32 %v5384, %v1823
        %v5431 = vmul.f32 %v5387, %v1823
        %v5432 = vmul.f32 %v5390, %v1823
        %v5433 = vmul.f32 %v5393, %v1823
        %v5434 = vmul.f32 %v5396, %v1823
        %v5435 = vmul.f32 %v5399, %v1823
        %v5436 = vmul.f32 %v5402, %v1823
        %v5437 = vmul.f32 %v5405, %v1823
        %v5438 = vmul.f32 %v5408, %v1823
        %v5439 = vmul.f32 %v5411, %v1823
        %v5440 = vmul.f32 %v5414, %v1823
        %v5441 = vmul.f32 %v5417, %v1823
        %v5442 = vmul.f32 %v5420, %v1823
        %v5443 = vmul.f32 %v5423, %v1823
        %v5444 = vmul.f32 %v5426, %v1823
        %v5445 = vmul.f32 %v5429, %v1823
        %v5446 = vadd.f32 %v5430, 1e-05
        %v5447 = vadd.f32 %v5431, 1e-05
        %v5448 = vadd.f32 %v5432, 1e-05
        %v5449 = vadd.f32 %v5433, 1e-05
        %v5450 = vadd.f32 %v5434, 1e-05
        %v5451 = vadd.f32 %v5435, 1e-05
        %v5452 = vadd.f32 %v5436, 1e-05
        %v5453 = vadd.f32 %v5437, 1e-05
        %v5454 = vadd.f32 %v5438, 1e-05
        %v5455 = vadd.f32 %v5439, 1e-05
        %v5456 = vadd.f32 %v5440, 1e-05
        %v5457 = vadd.f32 %v5441, 1e-05
        %v5458 = vadd.f32 %v5442, 1e-05
        %v5459 = vadd.f32 %v5443, 1e-05
        %v5460 = vadd.f32 %v5444, 1e-05
        %v5461 = vadd.f32 %v5445, 1e-05
        %v5462 = vrsqrt.pop %v5446
        %v5463 = vrsqrt.pop %v5447
        %v5464 = vrsqrt.pop %v5448
        %v5465 = vrsqrt.pop %v5449
        %v5466 = vrsqrt.pop %v5450
        %v5467 = vrsqrt.pop %v5451
        %v5468 = vrsqrt.pop %v5452
        %v5469 = vrsqrt.pop %v5453
        %v5470 = vrsqrt.pop %v5454
        %v5471 = vrsqrt.pop %v5455
        %v5472 = vrsqrt.pop %v5456
        %v5473 = vrsqrt.pop %v5457
        %v5474 = vrsqrt.pop %v5458
        %v5475 = vrsqrt.pop %v5459
        %v5476 = vrsqrt.pop %v5460
        %v5477 = vrsqrt.pop %v5461
        %v5478 = vmul.f32 %v5350, %v5462
        %v5479 = vmul.f32 %v5351, %v5463
        %v5480 = vmul.f32 %v5352, %v5464
        %v5481 = vmul.f32 %v5353, %v5465
        %v5482 = vmul.f32 %v5354, %v5466
        %v5483 = vmul.f32 %v5355, %v5467
        %v5484 = vmul.f32 %v5356, %v5468
        %v5485 = vmul.f32 %v5357, %v5469
        %v5486 = vmul.f32 %v5358, %v5470
        %v5487 = vmul.f32 %v5359, %v5471
        %v5488 = vmul.f32 %v5360, %v5472
        %v5489 = vmul.f32 %v5361, %v5473
        %v5490 = vmul.f32 %v5362, %v5474
        %v5491 = vmul.f32 %v5363, %v5475
        %v5492 = vmul.f32 %v5364, %v5476
        %v5493 = vmul.f32 %v5365, %v5477
        %v5494 = vmul.f32 %v5270, %v502
        %v5495 = vmul.f32 %v5271, %v503
        %v5496 = vmul.f32 %v5272, %v504
        %v5497 = vmul.f32 %v5273, %v505
        %v5498 = vmul.f32 %v5274, %v506
        %v5499 = vmul.f32 %v5275, %v507
        %v5500 = vmul.f32 %v5276, %v508
        %v5501 = vmul.f32 %v5277, %v509
        %v5502 = vmul.f32 %v5278, %v510
        %v5503 = vmul.f32 %v5279, %v511
        %v5504 = vmul.f32 %v5280, %v512
        %v5505 = vmul.f32 %v5281, %v513
        %v5506 = vmul.f32 %v5282, %v514
        %v5507 = vmul.f32 %v5283, %v515
        %v5508 = vmul.f32 %v5284, %v516
        %v5509 = vmul.f32 %v5285, %v517
        %v5510 = vsel %vm1774, %v5494, 0.0
        %v5511 = vsel %vm1774, %v5495, 0.0
        %v5512 = vadd.f32 %v5510, %v5511
        %v5513 = vsel %vm1774, %v5496, 0.0
        %v5514 = vadd.f32 %v5512, %v5513
        %v5515 = vsel %vm1774, %v5497, 0.0
        %v5516 = vadd.f32 %v5514, %v5515
        %v5517 = vsel %vm1774, %v5498, 0.0
        %v5518 = vadd.f32 %v5516, %v5517
        %v5519 = vsel %vm1774, %v5499, 0.0
        %v5520 = vadd.f32 %v5518, %v5519
        %v5521 = vsel %vm1774, %v5500, 0.0
        %v5522 = vadd.f32 %v5520, %v5521
        %v5523 = vsel %vm1774, %v5501, 0.0
        %v5524 = vadd.f32 %v5522, %v5523
        %v5525 = vsel %vm1774, %v5502, 0.0
        %v5526 = vadd.f32 %v5524, %v5525
        %v5527 = vsel %vm1774, %v5503, 0.0
        %v5528 = vadd.f32 %v5526, %v5527
        %v5529 = vsel %vm1774, %v5504, 0.0
        %v5530 = vadd.f32 %v5528, %v5529
        %v5531 = vsel %vm1774, %v5505, 0.0
        %v5532 = vadd.f32 %v5530, %v5531
        %v5533 = vsel %vm1774, %v5506, 0.0
        %v5534 = vadd.f32 %v5532, %v5533
        %v5535 = vsel %vm1774, %v5507, 0.0
        %v5536 = vadd.f32 %v5534, %v5535
        %v5537 = vsel %vm1774, %v5508, 0.0
        %v5538 = vadd.f32 %v5536, %v5537
        %v5539 = vsel %vm1774, %v5509, 0.0
        %v5540 = vadd.f32 %v5538, %v5539
        %v5541 = vrot.slane %v5540, 4
        %v5542 = vadd.f32 %v5540, %v5541
        %v5543 = vrot.slane %v5542, 2
        %v5544 = vadd.f32 %v5542, %v5543
        %v5545 = vrot.slane %v5544, 1
        %v5546 = vadd.f32 %v5544, %v5545
        %v5547 = vmul.f32 %v5546, 0.015625
        %v5548 = vsub.f32 %v5270, %v5547
        %v5549 = vsub.f32 %v5271, %v5547
        %v5550 = vsub.f32 %v5272, %v5547
        %v5551 = vsub.f32 %v5273, %v5547
        %v5552 = vsub.f32 %v5274, %v5547
        %v5553 = vsub.f32 %v5275, %v5547
        %v5554 = vsub.f32 %v5276, %v5547
        %v5555 = vsub.f32 %v5277, %v5547
        %v5556 = vsub.f32 %v5278, %v5547
        %v5557 = vsub.f32 %v5279, %v5547
        %v5558 = vsub.f32 %v5280, %v5547
        %v5559 = vsub.f32 %v5281, %v5547
        %v5560 = vsub.f32 %v5282, %v5547
        %v5561 = vsub.f32 %v5283, %v5547
        %v5562 = vsub.f32 %v5284, %v5547
        %v5563 = vsub.f32 %v5285, %v5547
        %v5564 = vmul.f32 %v5548, %v5548
        %v5565 = vmul.f32 %v5549, %v5549
        %v5566 = vmul.f32 %v5550, %v5550
        %v5567 = vmul.f32 %v5551, %v5551
        %v5568 = vmul.f32 %v5552, %v5552
        %v5569 = vmul.f32 %v5553, %v5553
        %v5570 = vmul.f32 %v5554, %v5554
        %v5571 = vmul.f32 %v5555, %v5555
        %v5572 = vmul.f32 %v5556, %v5556
        %v5573 = vmul.f32 %v5557, %v5557
        %v5574 = vmul.f32 %v5558, %v5558
        %v5575 = vmul.f32 %v5559, %v5559
        %v5576 = vmul.f32 %v5560, %v5560
        %v5577 = vmul.f32 %v5561, %v5561
        %v5578 = vmul.f32 %v5562, %v5562
        %v5579 = vmul.f32 %v5563, %v5563
        %v5580 = vmul.f32 %v5564, %v502
        %v5581 = vmul.f32 %v5565, %v503
        %v5582 = vmul.f32 %v5566, %v504
        %v5583 = vmul.f32 %v5567, %v505
        %v5584 = vmul.f32 %v5568, %v506
        %v5585 = vmul.f32 %v5569, %v507
        %v5586 = vmul.f32 %v5570, %v508
        %v5587 = vmul.f32 %v5571, %v509
        %v5588 = vmul.f32 %v5572, %v510
        %v5589 = vmul.f32 %v5573, %v511
        %v5590 = vmul.f32 %v5574, %v512
        %v5591 = vmul.f32 %v5575, %v513
        %v5592 = vmul.f32 %v5576, %v514
        %v5593 = vmul.f32 %v5577, %v515
        %v5594 = vmul.f32 %v5578, %v516
        %v5595 = vmul.f32 %v5579, %v517
        %v5596 = vsel %vm1774, %v5580, 0.0
        %v5597 = vsel %vm1774, %v5581, 0.0
        %v5598 = vadd.f32 %v5596, %v5597
        %v5599 = vsel %vm1774, %v5582, 0.0
        %v5600 = vadd.f32 %v5598, %v5599
        %v5601 = vsel %vm1774, %v5583, 0.0
        %v5602 = vadd.f32 %v5600, %v5601
        %v5603 = vsel %vm1774, %v5584, 0.0
        %v5604 = vadd.f32 %v5602, %v5603
        %v5605 = vsel %vm1774, %v5585, 0.0
        %v5606 = vadd.f32 %v5604, %v5605
        %v5607 = vsel %vm1774, %v5586, 0.0
        %v5608 = vadd.f32 %v5606, %v5607
        %v5609 = vsel %vm1774, %v5587, 0.0
        %v5610 = vadd.f32 %v5608, %v5609
        %v5611 = vsel %vm1774, %v5588, 0.0
        %v5612 = vadd.f32 %v5610, %v5611
        %v5613 = vsel %vm1774, %v5589, 0.0
        %v5614 = vadd.f32 %v5612, %v5613
        %v5615 = vsel %vm1774, %v5590, 0.0
        %v5616 = vadd.f32 %v5614, %v5615
        %v5617 = vsel %vm1774, %v5591, 0.0
        %v5618 = vadd.f32 %v5616, %v5617
        %v5619 = vsel %vm1774, %v5592, 0.0
        %v5620 = vadd.f32 %v5618, %v5619
        %v5621 = vsel %vm1774, %v5593, 0.0
        %v5622 = vadd.f32 %v5620, %v5621
        %v5623 = vsel %vm1774, %v5594, 0.0
        %v5624 = vadd.f32 %v5622, %v5623
        %v5625 = vsel %vm1774, %v5595, 0.0
        %v5626 = vadd.f32 %v5624, %v5625
        %v5627 = vrot.slane %v5626, 4
        %v5628 = vadd.f32 %v5626, %v5627
        %v5629 = vrot.slane %v5628, 2
        %v5630 = vadd.f32 %v5628, %v5629
        %v5631 = vrot.slane %v5630, 1
        %v5632 = vadd.f32 %v5630, %v5631
        %v5633 = vmul.f32 %v5632, 0.015625
        %v5634 = vadd.f32 %v5633, 1e-05
        %v5635 = vrsqrt.pop %v5634
        %v5636 = vmul.f32 %v5548, %v5635
        %v5637 = vmul.f32 %v5549, %v5635
        %v5638 = vmul.f32 %v5550, %v5635
        %v5639 = vmul.f32 %v5551, %v5635
        %v5640 = vmul.f32 %v5552, %v5635
        %v5641 = vmul.f32 %v5553, %v5635
        %v5642 = vmul.f32 %v5554, %v5635
        %v5643 = vmul.f32 %v5555, %v5635
        %v5644 = vmul.f32 %v5556, %v5635
        %v5645 = vmul.f32 %v5557, %v5635
        %v5646 = vmul.f32 %v5558, %v5635
        %v5647 = vmul.f32 %v5559, %v5635
        %v5648 = vmul.f32 %v5560, %v5635
        %v5649 = vmul.f32 %v5561, %v5635
        %v5650 = vmul.f32 %v5562, %v5635
        %v5651 = vmul.f32 %v5563, %v5635
        %s5652 = sld [smem:[#allocation2 + $0x6]]
        %v5653 = vstv %s5652
        %v5654 = vmul.f32 %v5653, %v5270
        %v5655 = vmul.f32 %v5653, %v5271
        %v5656 = vmul.f32 %v5653, %v5272
        %v5657 = vmul.f32 %v5653, %v5273
        %v5658 = vmul.f32 %v5653, %v5274
        %v5659 = vmul.f32 %v5653, %v5275
        %v5660 = vmul.f32 %v5653, %v5276
        %v5661 = vmul.f32 %v5653, %v5277
        %v5662 = vmul.f32 %v5653, %v5278
        %v5663 = vmul.f32 %v5653, %v5279
        %v5664 = vmul.f32 %v5653, %v5280
        %v5665 = vmul.f32 %v5653, %v5281
        %v5666 = vmul.f32 %v5653, %v5282
        %v5667 = vmul.f32 %v5653, %v5283
        %v5668 = vmul.f32 %v5653, %v5284
        %v5669 = vmul.f32 %v5653, %v5285
        %s5670 = sld [smem:[#allocation2 + $0x7]]
        %v5671 = vstv %s5670
        %v5672 = vmul.f32 %v5671, %v5478
        %v5673 = vmul.f32 %v5671, %v5479
        %v5674 = vmul.f32 %v5671, %v5480
        %v5675 = vmul.f32 %v5671, %v5481
        %v5676 = vmul.f32 %v5671, %v5482
        %v5677 = vmul.f32 %v5671, %v5483
        %v5678 = vmul.f32 %v5671, %v5484
        %v5679 = vmul.f32 %v5671, %v5485
        %v5680 = vmul.f32 %v5671, %v5486
        %v5681 = vmul.f32 %v5671, %v5487
        %v5682 = vmul.f32 %v5671, %v5488
        %v5683 = vmul.f32 %v5671, %v5489
        %v5684 = vmul.f32 %v5671, %v5490
        %v5685 = vmul.f32 %v5671, %v5491
        %v5686 = vmul.f32 %v5671, %v5492
        %v5687 = vmul.f32 %v5671, %v5493
        %v5688 = vadd.f32 %v5654, %v5672
        %v5689 = vadd.f32 %v5655, %v5673
        %v5690 = vadd.f32 %v5656, %v5674
        %v5691 = vadd.f32 %v5657, %v5675
        %v5692 = vadd.f32 %v5658, %v5676
        %v5693 = vadd.f32 %v5659, %v5677
        %v5694 = vadd.f32 %v5660, %v5678
        %v5695 = vadd.f32 %v5661, %v5679
        %v5696 = vadd.f32 %v5662, %v5680
        %v5697 = vadd.f32 %v5663, %v5681
        %v5698 = vadd.f32 %v5664, %v5682
        %v5699 = vadd.f32 %v5665, %v5683
        %v5700 = vadd.f32 %v5666, %v5684
        %v5701 = vadd.f32 %v5667, %v5685
        %v5702 = vadd.f32 %v5668, %v5686
        %v5703 = vadd.f32 %v5669, %v5687
        %s5704 = sld [smem:[#allocation2 + $0x8]]
        %v5705 = vstv %s5704
        %v5706 = vmul.f32 %v5705, %v5636
        %v5707 = vmul.f32 %v5705, %v5637
        %v5708 = vmul.f32 %v5705, %v5638
        %v5709 = vmul.f32 %v5705, %v5639
        %v5710 = vmul.f32 %v5705, %v5640
        %v5711 = vmul.f32 %v5705, %v5641
        %v5712 = vmul.f32 %v5705, %v5642
        %v5713 = vmul.f32 %v5705, %v5643
        %v5714 = vmul.f32 %v5705, %v5644
        %v5715 = vmul.f32 %v5705, %v5645
        %v5716 = vmul.f32 %v5705, %v5646
        %v5717 = vmul.f32 %v5705, %v5647
        %v5718 = vmul.f32 %v5705, %v5648
        %v5719 = vmul.f32 %v5705, %v5649
        %v5720 = vmul.f32 %v5705, %v5650
        %v5721 = vmul.f32 %v5705, %v5651
        %v5722 = vadd.f32 %v5688, %v5706
        %v5723 = vadd.f32 %v5689, %v5707
        %v5724 = vadd.f32 %v5690, %v5708
        %v5725 = vadd.f32 %v5691, %v5709
        %v5726 = vadd.f32 %v5692, %v5710
        %v5727 = vadd.f32 %v5693, %v5711
        %v5728 = vadd.f32 %v5694, %v5712
        %v5729 = vadd.f32 %v5695, %v5713
        %v5730 = vadd.f32 %v5696, %v5714
        %v5731 = vadd.f32 %v5697, %v5715
        %v5732 = vadd.f32 %v5698, %v5716
        %v5733 = vadd.f32 %v5699, %v5717
        %v5734 = vadd.f32 %v5700, %v5718
        %v5735 = vadd.f32 %v5701, %v5719
        %v5736 = vadd.f32 %v5702, %v5720
        %v5737 = vadd.f32 %v5703, %v5721
        %v5738 = vlaneseq
        %v5739 = vshrl.u32 %v5738, 7
        %v5740 = vsub.s32 2, %v5739
        %v5741 = vrot.slane %v451, %v5740
        %v5742 = vmul.f32 %v5722, %v5741
        %v5743 = vmul.f32 %v5723, %v5741
        %v5744 = vmul.f32 %v5724, %v5741
        %v5745 = vmul.f32 %v5725, %v5741
        %v5746 = vmul.f32 %v5726, %v5741
        %v5747 = vmul.f32 %v5727, %v5741
        %v5748 = vmul.f32 %v5728, %v5741
        %v5749 = vmul.f32 %v5729, %v5741
        %v5750 = vmul.f32 %v5730, %v5741
        %v5751 = vmul.f32 %v5731, %v5741
        %v5752 = vmul.f32 %v5732, %v5741
        %v5753 = vmul.f32 %v5733, %v5741
        %v5754 = vmul.f32 %v5734, %v5741
        %v5755 = vmul.f32 %v5735, %v5741
        %v5756 = vmul.f32 %v5736, %v5741
        %v5757 = vmul.f32 %v5737, %v5741
        %v5758 = vlaneseq
        %v5759 = vshrl.u32 %v5758, 7
        %v5760 = vsub.s32 2, %v5759
        %v5761 = vrot.slane %v452, %v5760
        %v5762 = vadd.f32 %v5742, %v5761
        %v5763 = vadd.f32 %v5743, %v5761
        %v5764 = vadd.f32 %v5744, %v5761
        %v5765 = vadd.f32 %v5745, %v5761
        %v5766 = vadd.f32 %v5746, %v5761
        %v5767 = vadd.f32 %v5747, %v5761
        %v5768 = vadd.f32 %v5748, %v5761
        %v5769 = vadd.f32 %v5749, %v5761
        %v5770 = vadd.f32 %v5750, %v5761
        %v5771 = vadd.f32 %v5751, %v5761
        %v5772 = vadd.f32 %v5752, %v5761
        %v5773 = vadd.f32 %v5753, %v5761
        %v5774 = vadd.f32 %v5754, %v5761
        %v5775 = vadd.f32 %v5755, %v5761
        %v5776 = vadd.f32 %v5756, %v5761
        %v5777 = vadd.f32 %v5757, %v5761
        %vm5778 = vcmp.gt.f32.partialorder %v5762, 0.0
        %vm5779 = vcmp.gt.f32.partialorder %v5763, 0.0
        %vm5780 = vcmp.gt.f32.partialorder %v5764, 0.0
        %vm5781 = vcmp.gt.f32.partialorder %v5765, 0.0
        %vm5782 = vcmp.gt.f32.partialorder %v5766, 0.0
        %vm5783 = vcmp.gt.f32.partialorder %v5767, 0.0
        %vm5784 = vcmp.gt.f32.partialorder %v5768, 0.0
        %vm5785 = vcmp.gt.f32.partialorder %v5769, 0.0
        %vm5786 = vcmp.gt.f32.partialorder %v5770, 0.0
        %vm5787 = vcmp.gt.f32.partialorder %v5771, 0.0
        %vm5788 = vcmp.gt.f32.partialorder %v5772, 0.0
        %vm5789 = vcmp.gt.f32.partialorder %v5773, 0.0
        %vm5790 = vcmp.gt.f32.partialorder %v5774, 0.0
        %vm5791 = vcmp.gt.f32.partialorder %v5775, 0.0
        %vm5792 = vcmp.gt.f32.partialorder %v5776, 0.0
        %vm5793 = vcmp.gt.f32.partialorder %v5777, 0.0
        %v5794 = vmul.f32 %v5762, 0.2
        %v5795 = vmul.f32 %v5763, 0.2
        %v5796 = vmul.f32 %v5764, 0.2
        %v5797 = vmul.f32 %v5765, 0.2
        %v5798 = vmul.f32 %v5766, 0.2
        %v5799 = vmul.f32 %v5767, 0.2
        %v5800 = vmul.f32 %v5768, 0.2
        %v5801 = vmul.f32 %v5769, 0.2
        %v5802 = vmul.f32 %v5770, 0.2
        %v5803 = vmul.f32 %v5771, 0.2
        %v5804 = vmul.f32 %v5772, 0.2
        %v5805 = vmul.f32 %v5773, 0.2
        %v5806 = vmul.f32 %v5774, 0.2
        %v5807 = vmul.f32 %v5775, 0.2
        %v5808 = vmul.f32 %v5776, 0.2
        %v5809 = vmul.f32 %v5777, 0.2
        %v5810 = vsel %vm5778, %v5762, %v5794
        %v5811 = vsel %vm5779, %v5763, %v5795
        %v5812 = vsel %vm5780, %v5764, %v5796
        %v5813 = vsel %vm5781, %v5765, %v5797
        %v5814 = vsel %vm5782, %v5766, %v5798
        %v5815 = vsel %vm5783, %v5767, %v5799
        %v5816 = vsel %vm5784, %v5768, %v5800
        %v5817 = vsel %vm5785, %v5769, %v5801
        %v5818 = vsel %vm5786, %v5770, %v5802
        %v5819 = vsel %vm5787, %v5771, %v5803
        %v5820 = vsel %vm5788, %v5772, %v5804
        %v5821 = vsel %vm5789, %v5773, %v5805
        %v5822 = vsel %vm5790, %v5774, %v5806
        %v5823 = vsel %vm5791, %v5775, %v5807
        %v5824 = vsel %vm5792, %v5776, %v5808
        %v5825 = vsel %vm5793, %v5777, %v5809
        %5842 = vrot.lane.b32.xlu0 %v5810, 112
        %v5843 = vpop.permute.xlu0 %5842
        %5844 = vrot.lane.b32.xlu0 %v5811, 112
        %v5845 = vpop.permute.xlu0 %5844
        %5846 = vrot.lane.b32.xlu0 %v5812, 112
        %v5847 = vpop.permute.xlu0 %5846
        %5848 = vrot.lane.b32.xlu0 %v5813, 112
        %v5849 = vpop.permute.xlu0 %5848
        %5850 = vrot.lane.b32.xlu0 %v5814, 112
        %v5851 = vpop.permute.xlu0 %5850
        %5852 = vrot.lane.b32.xlu0 %v5815, 112
        %v5853 = vpop.permute.xlu0 %5852
        %5854 = vrot.lane.b32.xlu0 %v5816, 112
        %v5855 = vpop.permute.xlu0 %5854
        %5856 = vrot.lane.b32.xlu0 %v5817, 112
        %v5857 = vpop.permute.xlu0 %5856
        %5858 = vrot.lane.b32.xlu0 %v5818, 112
        %v5859 = vpop.permute.xlu0 %5858
        %5860 = vrot.lane.b32.xlu0 %v5819, 112
        %v5861 = vpop.permute.xlu0 %5860
        %5862 = vrot.lane.b32.xlu0 %v5820, 112
        %v5863 = vpop.permute.xlu0 %5862
        %5864 = vrot.lane.b32.xlu0 %v5821, 112
        %v5865 = vpop.permute.xlu0 %5864
        %5866 = vrot.lane.b32.xlu0 %v5822, 112
        %v5867 = vpop.permute.xlu0 %5866
        %5868 = vrot.lane.b32.xlu0 %v5823, 112
        %v5869 = vpop.permute.xlu0 %5868
        %5870 = vrot.lane.b32.xlu0 %v5824, 112
        %v5871 = vpop.permute.xlu0 %5870
        %5872 = vrot.lane.b32.xlu0 %v5825, 112
        %v5873 = vpop.permute.xlu0 %5872
        %v5890 = vadd.f32 %v5810, %v5843
        %v5891 = vadd.f32 %v5811, %v5845
        %v5892 = vadd.f32 %v5812, %v5847
        %v5893 = vadd.f32 %v5813, %v5849
        %v5894 = vadd.f32 %v5814, %v5851
        %v5895 = vadd.f32 %v5815, %v5853
        %v5896 = vadd.f32 %v5816, %v5855
        %v5897 = vadd.f32 %v5817, %v5857
        %v5898 = vadd.f32 %v5818, %v5859
        %v5899 = vadd.f32 %v5819, %v5861
        %v5900 = vadd.f32 %v5820, %v5863
        %v5901 = vadd.f32 %v5821, %v5865
        %v5902 = vadd.f32 %v5822, %v5867
        %v5903 = vadd.f32 %v5823, %v5869
        %v5904 = vadd.f32 %v5824, %v5871
        %v5905 = vadd.f32 %v5825, %v5873
        %v5906 = vmul.f32 %v5890, 0.5
        %v5907 = vmul.f32 %v5891, 0.5
        %v5908 = vmul.f32 %v5892, 0.5
        %v5909 = vmul.f32 %v5893, 0.5
        %v5910 = vmul.f32 %v5894, 0.5
        %v5911 = vmul.f32 %v5895, 0.5
        %v5912 = vmul.f32 %v5896, 0.5
        %v5913 = vmul.f32 %v5897, 0.5
        %v5914 = vmul.f32 %v5898, 0.5
        %v5915 = vmul.f32 %v5899, 0.5
        %v5916 = vmul.f32 %v5900, 0.5
        %v5917 = vmul.f32 %v5901, 0.5
        %v5918 = vmul.f32 %v5902, 0.5
        %v5919 = vmul.f32 %v5903, 0.5
        %v5920 = vmul.f32 %v5904, 0.5
        %v5921 = vmul.f32 %v5905, 0.5
        %v5922 = vmul.f32 %v5906, %v502
        %v5923 = vmul.f32 %v5907, %v503
        %v5924 = vmul.f32 %v5908, %v504
        %v5925 = vmul.f32 %v5909, %v505
        %v5926 = vmul.f32 %v5910, %v506
        %v5927 = vmul.f32 %v5911, %v507
        %v5928 = vmul.f32 %v5912, %v508
        %v5929 = vmul.f32 %v5913, %v509
        %v5930 = vmul.f32 %v5914, %v510
        %v5931 = vmul.f32 %v5915, %v511
        %v5932 = vmul.f32 %v5916, %v512
        %v5933 = vmul.f32 %v5917, %v513
        %v5934 = vmul.f32 %v5918, %v514
        %v5935 = vmul.f32 %v5919, %v515
        %v5936 = vmul.f32 %v5920, %v516
        %v5937 = vmul.f32 %v5921, %v517
        %v5938 = vsel %vm550, %v5922, 0.0
        %v5939 = vsel %vm550, %v5923, 0.0
        %v5940 = vadd.f32 %v5938, %v5939
        %v5941 = vsel %vm550, %v5924, 0.0
        %v5942 = vadd.f32 %v5940, %v5941
        %v5943 = vsel %vm550, %v5925, 0.0
        %v5944 = vadd.f32 %v5942, %v5943
        %v5945 = vsel %vm550, %v5926, 0.0
        %v5946 = vadd.f32 %v5944, %v5945
        %v5947 = vsel %vm550, %v5927, 0.0
        %v5948 = vadd.f32 %v5946, %v5947
        %v5949 = vsel %vm550, %v5928, 0.0
        %v5950 = vadd.f32 %v5948, %v5949
        %v5951 = vsel %vm550, %v5929, 0.0
        %v5952 = vadd.f32 %v5950, %v5951
        %v5953 = vsel %vm550, %v5930, 0.0
        %v5954 = vadd.f32 %v5952, %v5953
        %v5955 = vsel %vm550, %v5931, 0.0
        %v5956 = vadd.f32 %v5954, %v5955
        %v5957 = vsel %vm550, %v5932, 0.0
        %v5958 = vadd.f32 %v5956, %v5957
        %v5959 = vsel %vm550, %v5933, 0.0
        %v5960 = vadd.f32 %v5958, %v5959
        %v5961 = vsel %vm550, %v5934, 0.0
        %v5962 = vadd.f32 %v5960, %v5961
        %v5963 = vsel %vm550, %v5935, 0.0
        %v5964 = vadd.f32 %v5962, %v5963
        %v5965 = vsel %vm550, %v5936, 0.0
        %v5966 = vadd.f32 %v5964, %v5965
        %v5967 = vsel %vm550, %v5937, 0.0
        %v5968 = vadd.f32 %v5966, %v5967
        %v5969 = vrot.slane %v5968, 4
        %v5970 = vadd.f32 %v5968, %v5969
        %v5971 = vrot.slane %v5970, 2
        %v5972 = vadd.f32 %v5970, %v5971
        %v5973 = vrot.slane %v5972, 1
        %v5974 = vadd.f32 %v5972, %v5973
        %v5975 = vmul.f32 %v5974, 0.015625
        %vm5976 = vcmp.gt.f32.partialorder %v5975, 0.0
        %v5977 = vmul.f32 %v5975, 0.2
        %v5978 = vsel %vm5976, %v5975, %v5977
        %vm5979 = vcmask 122880
        %5980 = vst.msk [vmem:[%s407] sm:$0x1] %vm5979, %v5978
        %s5981 = sand.u32 %s275, 1
        %s5982 = scalar_lea.sflag [#allocation3], %s5981
        %s5983 = sand.u32 %s275, 1
        %s5984 = scalar_lea.vmem [#allocation5], %s5983
        // Predicated region
        $region69: #{tpu_custom_call.1} parent=63 // pred_check
          %p5985 = pneg %p285
        $region70: #{tpu_custom_call.1} parent=63 // pred_check_branch
          %5987 = sbr.rel (%p5985) target = $region72
        $region71: #{tpu_custom_call.1} parent=63 // pred_region
          %s5989 = ssub.s32 16, 16
          %5990 = vsyncadd %s5982, %s5989
          %s5991 = smul.addr %s26, 16
          %s5992 = scalar_lea.hbm %s11, %s5991
          %s5994 = sshll.u32 %s5984, 4
          %s5995 = int_to_ptr.vmem [resolvable:$true] %s5994
          %5997 = dma.vmem_to_hbm [thread:$0]  %s5995, 16, %s5992, %s5982
        $region72: #{tpu_custom_call.1} parent=63 // pred_fallthru
          _
      $region64: #{tpu_custom_call.1} parent=5 // pred_fallthru
        _
      %p5998 = scmp.le.s32.totalorder 2, %s21
      // Predicated region
      $region73: #{tpu_custom_call.1} parent=5 // pred_check
        %p5999 = pneg %p5998
      $region74: #{tpu_custom_call.1} parent=5 // pred_check_branch
        %6001 = sbr.rel (%p5999) target = $region76
      $region75: #{tpu_custom_call.1} parent=5 // pred_region
        %s6002 = ssub.s32 %s21, 2
        // Predicated region
        $region77: #{tpu_custom_call.1} parent=75 // pred_check
          %p6003 = pneg %p291
        $region78: #{tpu_custom_call.1} parent=75 // pred_check_branch
          %6005 = sbr.rel (%p6003) target = $region80
        $region79: #{tpu_custom_call.1} parent=75 // pred_region
          %s6006 = sand.u32 %s276, 1
          %s6007 = scalar_lea.sflag [#allocation3], %s6006
          %s6008 = sand.u32 %s276, 1
          %s6009 = scalar_lea.vmem [#allocation5], %s6008
          %6010 = dma.done %s6007, 16
        $region80: #{tpu_custom_call.1} parent=75 // pred_fallthru
          _
      $region76: #{tpu_custom_call.1} parent=5 // pred_fallthru
        _
    $region6: #{tpu_custom_call.1} parent=1 // loop_footer
      %s25 = sadd.s32 1, %s21
    $region7: #{tpu_custom_call.1} parent=1 // loop_footer_branch
      %20 = sbr.rel target = $region3
    $region8: #{tpu_custom_call.1} parent=1 // loop_exit
      _
    %6011 = vsyncpa [#allocation3], 1
    %s6012 = scalar_lea.sflag [#allocation3], 1
    %6013 = vsyncpa %s6012, 1
    %6014 = vsyncpa [#allocation4], 1
    %s6015 = scalar_lea.sflag [#allocation4], 1
    %6016 = vsyncpa %s6015, 1

</llo_original>
